<compile_context>
chip_gen: v6e
topology: v6e:2x2x1
jax: 0.10.0
libtpu: 0.0.40
codegen_flags: <defaults>
</compile_context>

<pallas_src>
import functools

import jax
import jax.numpy as jnp
from jax.experimental import pallas as pl
from jax.experimental.pallas import tpu as pltpu

NEG_SLOPE = 0.01          # PyTorch F.leaky_relu default
LANE = 128
_VMEM_LIMIT = 48 * 1024 * 1024


def _leaky_relu(x):
    return jnp.where(x > 0, x, NEG_SLOPE * x)


def _round_up(n, m):
    return ((n + m - 1) // m) * m


def _choose_tg(num_genes):
    # Gene-dimension chunk: lane-dense (multiple of 128), capped at 512 so the
    # streamed W1/Wg chunks and the (TB, TG) gene-output tile stay a few
    # hundred KB each, independent of num_genes.
    return min(512, _round_up(num_genes, LANE))


# Single-buffering for grid-invariant blocks: probe once so the script still
# runs on jax versions without BlockSpec.pipeline_mode support.
try:
    _SINGLE_BUFFER = dict(pipeline_mode=pl.Buffered(1))
    pl.BlockSpec((8, 128), lambda *_: (0, 0), **_SINGLE_BUFFER)
except Exception:  # pragma: no cover - older jax
    _SINGLE_BUFFER = {}


def _const_spec(shape):
    nd = len(shape)
    return pl.BlockSpec(shape, lambda *_: (0,) * nd, **_SINGLE_BUFFER)


# ---------------------------------------------------------------------------
# Kernel A: encoder + gated skip + classifier head.
# Grid = (batch tiles, input-G chunks).  The G axis is a reduction over W1
# chunks into an f32 accumulator; everything downstream runs at the last chunk.
# ---------------------------------------------------------------------------
def encoder_kernel(
    x_ref,                      # (TB, TG)  f32  — chunk g of the input genes
    w1_ref, b1_ref,             # (TG, h1) bf16 / (1, h1) f32
    w2_ref, b2_ref,             # (h1, h2) / (1, h2)
    w3_ref, b3_ref,             # (h2, h1) / (1, h1)
    wa_ref, ba_ref,             # (2*h1, h1) stacked [Wa1; Wa2] / (1, h1)
    wc_ref, bc_ref,             # (h2, Cpad) / (1, Cpad)
    logits_ref, att_ref, dec1_ref,
    acc_ref,                    # (TB, h1) f32 scratch accumulator
):
    g = pl.program_id(1)

    @pl.when(g == 0)
    def _():
        acc_ref[...] = jnp.zeros_like(acc_ref)

    # In-register f32 -> bf16 cast of the streamed x chunk (no wrapper cast).
    x_b = x_ref[...].astype(jnp.bfloat16)
    acc_ref[...] += jnp.dot(x_b, w1_ref[...], preferred_element_type=jnp.float32)

    @pl.when(g == pl.num_programs(1) - 1)
    def _():
        h1 = acc_ref.shape[1]
        enc1 = _leaky_relu(acc_ref[...] + b1_ref[...])                 # (TB, h1)
        enc1_b = enc1.astype(jnp.bfloat16)
        enc2 = _leaky_relu(
            jnp.dot(enc1_b, w2_ref[...], preferred_element_type=jnp.float32)
            + b2_ref[...]
        )                                                              # (TB, h2)
        enc2_b = enc2.astype(jnp.bfloat16)
        dec1_pre = _leaky_relu(
            jnp.dot(enc2_b, w3_ref[...], preferred_element_type=jnp.float32)
            + b3_ref[...]
        )                                                              # (TB, h1)
        dec1_pre_b = dec1_pre.astype(jnp.bfloat16)

        # Gated-attention skip: two MXU dots, shared f32 accumulation; the
        # static slices of the stacked Wa ref are free views (no concat copy).
        att = jax.nn.sigmoid(
            jnp.dot(enc1_b, wa_ref[:h1, :], preferred_element_type=jnp.float32)
            + jnp.dot(dec1_pre_b, wa_ref[h1:, :], preferred_element_type=jnp.float32)
            + ba_ref[...]
        )
        dec1 = att * enc1 + dec1_pre

        logits_ref[...] = (
            jnp.dot(enc2_b, wc_ref[...], preferred_element_type=jnp.float32)
            + bc_ref[...]
        ).astype(logits_ref.dtype)
        att_ref[...] = att.astype(att_ref.dtype)
        dec1_ref[...] = dec1.astype(dec1_ref.dtype)                    # bf16


# ---------------------------------------------------------------------------
# Kernel B: gene head, tiled over output-G chunks of Wg.
# ---------------------------------------------------------------------------
def gene_head_kernel(dec1_ref, wg_ref, bg_ref, genes_ref):
    genes_ref[...] = (
        jnp.dot(dec1_ref[...], wg_ref[...], preferred_element_type=jnp.float32)
        + bg_ref[...]
    ).astype(genes_ref.dtype)


# ---------------------------------------------------------------------------
# Parameters
# ---------------------------------------------------------------------------
def init_params(key, num_genes, num_cell_types, hidden_dims=(512, 256)):
    h1, h2 = hidden_dims
    ks = jax.random.split(key, 7)
    scale = 0.02

    def dense(k, d_in, d_out):
        return (scale * jax.random.normal(k, (d_in, d_out), jnp.float32),
                jnp.zeros((1, d_out), jnp.float32))

    w1, b1 = dense(ks[0], num_genes, h1)
    w2, b2 = dense(ks[1], h1, h2)
    w3, b3 = dense(ks[2], h2, h1)
    wa1, _ = dense(ks[3], h1, h1)
    wa2, ba = dense(ks[4], h1, h1)
    wg, bg = dense(ks[5], h1, num_genes)
    wc, bc = dense(ks[6], h2, num_cell_types)
    return dict(w1=w1, b1=b1, w2=w2, b2=b2, w3=w3, b3=b3,
                wa1=wa1, wa2=wa2, ba=ba, wg=wg, bg=bg, wc=wc, bc=bc)


def pack_params(params, num_genes, weight_dtype=jnp.bfloat16):
    """Host-side packing (done once): stack Wa1/Wa2, lane-pad the classifier
    head, pad the G dimension of W1 / Wg / bg to a multiple of the G chunk,
    cast weights to bf16 (biases stay f32)."""
    p = params
    tg = _choose_tg(num_genes)
    g_pad = _round_up(num_genes, tg)
    c = p["wc"].shape[1]
    c_pad = _round_up(c, LANE)
    wd = weight_dtype
    return dict(
        w1=jnp.pad(p["w1"], ((0, g_pad - num_genes), (0, 0))).astype(wd),
        b1=p["b1"],
        w2=p["w2"].astype(wd), b2=p["b2"],
        w3=p["w3"].astype(wd), b3=p["b3"],
        wa=jnp.concatenate([p["wa1"], p["wa2"]], axis=0).astype(wd),
        ba=p["ba"],
        wg=jnp.pad(p["wg"], ((0, 0), (0, g_pad - num_genes))).astype(wd),
        bg=jnp.pad(p["bg"], ((0, 0), (0, g_pad - num_genes))),
        wc=jnp.pad(p["wc"], ((0, 0), (0, c_pad - c))).astype(wd),
        bc=jnp.pad(p["bc"], ((0, 0), (0, c_pad - c))),
    )


# ---------------------------------------------------------------------------
# Forward
# ---------------------------------------------------------------------------
@functools.partial(jax.jit, static_argnames=("num_cell_types",))
def model_forward(x, packed, *, num_cell_types):
    w1, b1 = packed["w1"], packed["b1"]
    w2, b2 = packed["w2"], packed["b2"]
    w3, b3 = packed["w3"], packed["b3"]
    wa, ba = packed["wa"], packed["ba"]
    wg, bg = packed["wg"], packed["bg"]
    wc, bc = packed["wc"], packed["bc"]

    B, G = x.shape
    g_pad, h1 = w1.shape
    h2 = w2.shape[1]
    c_pad = wc.shape[1]
    tg = _choose_tg(G)
    n_g = g_pad // tg

    # Batch tile: multiple of 16 (bf16 sublane packing), capped at 128, split
    # so the "parallel" batch axis has >= 2 grid steps once B >= 32.
    TB = min(128, _round_up(B, 16))
    if B >= 32 and _round_up(B, TB) // TB < 2:
        TB = min(128, _round_up((B + 1) // 2, 16))
    B_pad = _round_up(B, TB)
    n_b = B_pad // TB

    x_in = x.astype(jnp.float32)             # stays f32; cast to bf16 in-kernel
    if B_pad != B or g_pad != G:
        x_in = jnp.pad(x_in, ((0, B_pad - B), (0, g_pad - G)))

    # ---------------- kernel A: encoder / gate / classifier ----------------
    in_specs_a = [
        pl.BlockSpec((TB, tg), lambda b, g: (b, g)),      # x chunk (streamed)
        pl.BlockSpec((tg, h1), lambda b, g: (g, 0)),      # W1 chunk (streamed)
        _const_spec((1, h1)),                             # b1
        _const_spec((h1, h2)), _const_spec((1, h2)),      # W2, b2
        _const_spec((h2, h1)), _const_spec((1, h1)),      # W3, b3
        _const_spec((2 * h1, h1)), _const_spec((1, h1)),  # Wa (stacked), ba
        _const_spec((h2, c_pad)), _const_spec((1, c_pad)),  # Wc, bc (lane-padded)
    ]
    out_specs_a = [
        pl.BlockSpec((TB, c_pad), lambda b, g: (b, 0)),   # logits
        pl.BlockSpec((TB, h1), lambda b, g: (b, 0)),      # attentions
        pl.BlockSpec((TB, h1), lambda b, g: (b, 0)),      # dec1 (bf16 hand-off)
    ]
    out_shape_a = (
        jax.ShapeDtypeStruct((B_pad, c_pad), jnp.float32),
        jax.ShapeDtypeStruct((B_pad, h1), jnp.float32),
        jax.ShapeDtypeStruct((B_pad, h1), jnp.bfloat16),
    )
    flops_a = 2 * B_pad * (g_pad * h1 + h1 * h2 + h2 * h1 + 2 * h1 * h1
                           + h2 * c_pad)
    bytes_a = (4 * B_pad * g_pad
               + 2 * (g_pad * h1 + h1 * h2 + h2 * h1 + 2 * h1 * h1 + h2 * c_pad)
               + 4 * B_pad * (c_pad + h1) + 2 * B_pad * h1)
    cost_a = pl.CostEstimate(flops=flops_a, transcendentals=B_pad * h1,
                             bytes_accessed=bytes_a)

    logits_p, att_p, dec1_b = pl.pallas_call(
        encoder_kernel,
        out_shape=out_shape_a,
        grid_spec=pltpu.PrefetchScalarGridSpec(
            num_scalar_prefetch=0,
            grid=(n_b, n_g),
            in_specs=in_specs_a,
            out_specs=out_specs_a,
            scratch_shapes=[pltpu.VMEM((TB, h1), jnp.float32)],
        ),
        compiler_params=pltpu.CompilerParams(
            dimension_semantics=("parallel", "arbitrary"),
            vmem_limit_bytes=_VMEM_LIMIT,
        ),
        cost_estimate=cost_a,
    )(x_in, w1, b1, w2, b2, w3, b3, wa, ba, wc, bc)

    # ---------------- kernel B: gene head (output-G tiled) -----------------
    flops_b = 2 * B_pad * h1 * g_pad
    bytes_b = 2 * B_pad * h1 + 2 * h1 * g_pad + 4 * g_pad + 2 * B_pad * g_pad
    cost_b = pl.CostEstimate(flops=flops_b, transcendentals=0,
                             bytes_accessed=bytes_b)

    genes_p = pl.pallas_call(
        gene_head_kernel,
        out_shape=jax.ShapeDtypeStruct((B_pad, g_pad), jnp.bfloat16),
        grid_spec=pltpu.PrefetchScalarGridSpec(
            num_scalar_prefetch=0,
            grid=(n_b, n_g),
            in_specs=[
                pl.BlockSpec((TB, h1), lambda b, j: (b, 0)),   # dec1 (once per b)
                pl.BlockSpec((h1, tg), lambda b, j: (0, j)),   # Wg chunk
                pl.BlockSpec((1, tg), lambda b, j: (0, j)),    # bg chunk
            ],
            out_specs=pl.BlockSpec((TB, tg), lambda b, j: (b, j)),
        ),
        compiler_params=pltpu.CompilerParams(
            dimension_semantics=("parallel", "arbitrary"),
            vmem_limit_bytes=_VMEM_LIMIT,
        ),
        cost_estimate=cost_b,
    )(dec1_b, wg, bg)

    # Strip batch / lane / gene padding.  gene_features is returned in bf16
    # (kernel stores bf16 to halve HBM writeback; accept bf16 downstream).
    logits = logits_p[:B, :num_cell_types]
    gene_features = genes_p[:B, :G]
    attentions = att_p[:B]
    return logits, gene_features, attentions


if __name__ == "__main__":
    batch = 8
    num_genes = 128
    num_cell_types = 8
    hidden_dims = (512, 256)

    key = jax.random.PRNGKey(0)
    k_x, k_p = jax.random.split(key)
    x = jax.random.normal(k_x, (batch, num_genes), jnp.float32)
    params = init_params(k_p, num_genes, num_cell_types, hidden_dims)
    packed = pack_params(params, num_genes)

    logits, gene_features, attentions = jax.block_until_ready(
        model_forward(x, packed, num_cell_types=num_cell_types)
    )

    assert logits.shape == (batch, num_cell_types)
    assert gene_features.shape == (batch, num_genes)
    assert attentions.shape == (batch, hidden_dims[0])
    assert jnp.all(jnp.isfinite(logits))
    assert jnp.all(jnp.isfinite(gene_features.astype(jnp.float32)))
    assert jnp.all(jnp.isfinite(attentions))
    print("KERNEL_OK")
</pallas_src>

<mosaic_0001>
module attributes {stable_mosaic.version = 11 : i64} {
  func.func @gene_head_kernel(%arg0: i32, %arg1: i32, %arg2: memref<16x512xbf16, #tpu.memory_space<vmem>>, %arg3: memref<512x128xbf16, #tpu.memory_space<vmem>>, %arg4: memref<1x128xf32, #tpu.memory_space<vmem>>, %arg5: memref<16x128xbf16, #tpu.memory_space<vmem>>) attributes {dimension_semantics = [#tpu.dimension_semantics<parallel>, #tpu.dimension_semantics<arbitrary>], iteration_bounds = array<i64: 1, 1>, scalar_prefetch = 0 : i64, scratch_operands = 0 : i64, tpu.core_type = #tpu.core_type<tc>, window_params = [{transform_indices = @transform_0, window_bounds = array<i64: 16, 512>}, {transform_indices = @transform_1, window_bounds = array<i64: 512, 128>}, {transform_indices = @transform_2, window_bounds = array<i64: 1, 128>}, {transform_indices = @transform_3, window_bounds = array<i64: 16, 128>}]} {
    %c0 = arith.constant 0 : index
    %c0_0 = arith.constant 0 : index
    %0 = vector.load %arg2[%c0, %c0_0] : memref<16x512xbf16, #tpu.memory_space<vmem>>, vector<16x512xbf16>
    %c0_1 = arith.constant 0 : index
    %c0_2 = arith.constant 0 : index
    %1 = vector.load %arg3[%c0_1, %c0_2] : memref<512x128xbf16, #tpu.memory_space<vmem>>, vector<512x128xbf16>
    %cst = arith.constant dense<0.000000e+00> : vector<16x128xf32>
    %2 = tpu.matmul %0, %1, %cst {dimension_numbers = #tpu.dot_dimension_numbers<[1], [0], [0], [1], [0, 0, 1, 1], [], []>} : vector<16x512xbf16>, vector<512x128xbf16>, vector<16x128xf32> -> vector<16x128xf32>
    %c0_3 = arith.constant 0 : index
    %c0_4 = arith.constant 0 : index
    %3 = vector.load %arg4[%c0_3, %c0_4] : memref<1x128xf32, #tpu.memory_space<vmem>>, vector<1x128xf32>
    %4 = vector.broadcast %3 : vector<1x128xf32> to vector<16x128xf32>
    %5 = arith.addf %2, %4 : vector<16x128xf32>
    %6 = arith.truncf %5 : vector<16x128xf32> to vector<16x128xbf16>
    %c0_5 = arith.constant 0 : index
    %c0_6 = arith.constant 0 : index
    %7 = vector.load %arg5[%c0_5, %c0_6] : memref<16x128xbf16, #tpu.memory_space<vmem>>, vector<16x128xbf16>
    tpu.vector_store %arg5[%c0_5, %c0_6], %6 {strides = array<i32>} : memref<16x128xbf16, #tpu.memory_space<vmem>>, vector<16x128xbf16>,
    return
  }
  func.func @transform_0(%arg0: i32, %arg1: i32) -> (i32, i32) {
    %c0_i32 = arith.constant 0 : i32
    %c0_i32_0 = arith.constant 0 : i32
    return %arg0, %c0_i32 : i32, i32
  }
  func.func @transform_1(%arg0: i32, %arg1: i32) -> (i32, i32) {
    %c0_i32 = arith.constant 0 : i32
    %c0_i32_0 = arith.constant 0 : i32
    return %c0_i32, %arg1 : i32, i32
  }
  func.func @transform_2(%arg0: i32, %arg1: i32) -> (i32, i32) {
    %c0_i32 = arith.constant 0 : i32
    %c0_i32_0 = arith.constant 0 : i32
    return %c0_i32, %arg1 : i32, i32
  }
  func.func @transform_3(%arg0: i32, %arg1: i32) -> (i32, i32) {
    %c0_i32 = arith.constant 0 : i32
    return %arg0, %arg1 : i32, i32
  }
}

module attributes {stable_mosaic.version = 11 : i64} {
  func.func @encoder_kernel(%arg0: i32, %arg1: i32, %arg2: memref<16x128xf32, #tpu.memory_space<vmem>>, %arg3: memref<128x512xbf16, #tpu.memory_space<vmem>>, %arg4: memref<1x512xf32, #tpu.memory_space<vmem>>, %arg5: memref<512x256xbf16, #tpu.memory_space<vmem>>, %arg6: memref<1x256xf32, #tpu.memory_space<vmem>>, %arg7: memref<256x512xbf16, #tpu.memory_space<vmem>>, %arg8: memref<1x512xf32, #tpu.memory_space<vmem>>, %arg9: memref<1024x512xbf16, #tpu.memory_space<vmem>>, %arg10: memref<1x512xf32, #tpu.memory_space<vmem>>, %arg11: memref<256x128xbf16, #tpu.memory_space<vmem>>, %arg12: memref<1x128xf32, #tpu.memory_space<vmem>>, %arg13: memref<16x128xf32, #tpu.memory_space<vmem>>, %arg14: memref<16x512xf32, #tpu.memory_space<vmem>>, %arg15: memref<16x512xbf16, #tpu.memory_space<vmem>>, %arg16: memref<16x512xf32, #tpu.memory_space<vmem>>) attributes {dimension_semantics = [#tpu.dimension_semantics<parallel>, #tpu.dimension_semantics<arbitrary>], iteration_bounds = array<i64: 1, 1>, scalar_prefetch = 0 : i64, scratch_operands = 1 : i64, tpu.core_type = #tpu.core_type<tc>, window_params = [{transform_indices = @transform_0, window_bounds = array<i64: 16, 128>}, {transform_indices = @transform_1, window_bounds = array<i64: 128, 512>}, {pipeline_mode = #tpu.pipeline_mode<synchronous>, transform_indices = @transform_2, window_bounds = array<i64: 1, 512>}, {pipeline_mode = #tpu.pipeline_mode<synchronous>, transform_indices = @transform_3, window_bounds = array<i64: 512, 256>}, {pipeline_mode = #tpu.pipeline_mode<synchronous>, transform_indices = @transform_4, window_bounds = array<i64: 1, 256>}, {pipeline_mode = #tpu.pipeline_mode<synchronous>, transform_indices = @transform_5, window_bounds = array<i64: 256, 512>}, {pipeline_mode = #tpu.pipeline_mode<synchronous>, transform_indices = @transform_6, window_bounds = array<i64: 1, 512>}, {pipeline_mode = #tpu.pipeline_mode<synchronous>, transform_indices = @transform_7, window_bounds = array<i64: 1024, 512>}, {pipeline_mode = #tpu.pipeline_mode<synchronous>, transform_indices = @transform_8, window_bounds = array<i64: 1, 512>}, {pipeline_mode = #tpu.pipeline_mode<synchronous>, transform_indices = @transform_9, window_bounds = array<i64: 256, 128>}, {pipeline_mode = #tpu.pipeline_mode<synchronous>, transform_indices = @transform_10, window_bounds = array<i64: 1, 128>}, {transform_indices = @transform_11, window_bounds = array<i64: 16, 128>}, {transform_indices = @transform_12, window_bounds = array<i64: 16, 512>}, {transform_indices = @transform_13, window_bounds = array<i64: 16, 512>}]} {
    %c0_i32 = arith.constant 0 : i32
    %0 = arith.cmpi eq, %arg1, %c0_i32 : i32
    %1 = arith.extui %0 : i1 to i32
    %c0_i32_0 = arith.constant 0 : i32
    %2 = arith.cmpi ne, %1, %c0_i32_0 : i32
    scf.if %2 {
      %cst_10 = arith.constant 0.000000e+00 : f32
      %13 = vector.broadcast %cst_10 : f32 to vector<16x512xf32>
      %c0_11 = arith.constant 0 : index
      %c0_12 = arith.constant 0 : index
      %14 = vector.load %arg16[%c0_11, %c0_12] : memref<16x512xf32, #tpu.memory_space<vmem>>, vector<16x512xf32>
      tpu.vector_store %arg16[%c0_11, %c0_12], %13 {strides = array<i32>} : memref<16x512xf32, #tpu.memory_space<vmem>>, vector<16x512xf32>,
    } else {
    }
    %c0 = arith.constant 0 : index
    %c0_1 = arith.constant 0 : index
    %3 = vector.load %arg2[%c0, %c0_1] : memref<16x128xf32, #tpu.memory_space<vmem>>, vector<16x128xf32>
    %4 = arith.truncf %3 : vector<16x128xf32> to vector<16x128xbf16>
    %c0_2 = arith.constant 0 : index
    %c0_3 = arith.constant 0 : index
    %5 = vector.load %arg16[%c0_2, %c0_3] : memref<16x512xf32, #tpu.memory_space<vmem>>, vector<16x512xf32>
    %c0_4 = arith.constant 0 : index
    %c0_5 = arith.constant 0 : index
    %6 = vector.load %arg3[%c0_4, %c0_5] : memref<128x512xbf16, #tpu.memory_space<vmem>>, vector<128x512xbf16>
    %cst = arith.constant dense<0.000000e+00> : vector<16x512xf32>
    %7 = tpu.matmul %4, %6, %cst {dimension_numbers = #tpu.dot_dimension_numbers<[1], [0], [0], [1], [0, 0, 1, 1], [], []>} : vector<16x128xbf16>, vector<128x512xbf16>, vector<16x512xf32> -> vector<16x512xf32>
    %8 = arith.addf %5, %7 : vector<16x512xf32>
    %c0_6 = arith.constant 0 : index
    %c0_7 = arith.constant 0 : index
    %9 = vector.load %arg16[%c0_6, %c0_7] : memref<16x512xf32, #tpu.memory_space<vmem>>, vector<16x512xf32>
    tpu.vector_store %arg16[%c0_6, %c0_7], %8 {strides = array<i32>} : memref<16x512xf32, #tpu.memory_space<vmem>>, vector<16x512xf32>,
    %c0_i32_8 = arith.constant 0 : i32
    %10 = arith.cmpi eq, %arg1, %c0_i32_8 : i32
    %11 = arith.extui %10 : i1 to i32
    %c0_i32_9 = arith.constant 0 : i32
    %12 = arith.cmpi ne, %11, %c0_i32_9 : i32
    scf.if %12 {
      %c0_10 = arith.constant 0 : index
      %c0_11 = arith.constant 0 : index
      %13 = vector.load %arg16[%c0_10, %c0_11] : memref<16x512xf32, #tpu.memory_space<vmem>>, vector<16x512xf32>
      %c0_12 = arith.constant 0 : index
      %c0_13 = arith.constant 0 : index
      %14 = vector.load %arg4[%c0_12, %c0_13] : memref<1x512xf32, #tpu.memory_space<vmem>>, vector<1x512xf32>
      %15 = vector.broadcast %14 : vector<1x512xf32> to vector<16x512xf32>
      %16 = arith.addf %13, %15 : vector<16x512xf32>
      %cst_14 = arith.constant 0.000000e+00 : f32
      %17 = vector.broadcast %cst_14 : f32 to vector<16x512xf32>
      %18 = arith.cmpf ogt, %16, %17 : vector<16x512xf32>
      %cst_15 = arith.constant 0.00999999977 : f32
      %19 = vector.broadcast %cst_15 : f32 to vector<16x512xf32>
      %20 = arith.mulf %19, %16 : vector<16x512xf32>
      %21 = arith.select %18, %16, %20 : vector<16x512xi1>, vector<16x512xf32>
      %22 = arith.truncf %21 : vector<16x512xf32> to vector<16x512xbf16>
      %c0_16 = arith.constant 0 : index
      %c0_17 = arith.constant 0 : index
      %23 = vector.load %arg5[%c0_16, %c0_17] : memref<512x256xbf16, #tpu.memory_space<vmem>>, vector<512x256xbf16>
      %cst_18 = arith.constant dense<0.000000e+00> : vector<16x256xf32>
      %24 = tpu.matmul %22, %23, %cst_18 {dimension_numbers = #tpu.dot_dimension_numbers<[1], [0], [0], [1], [0, 0, 1, 1], [], []>} : vector<16x512xbf16>, vector<512x256xbf16>, vector<16x256xf32> -> vector<16x256xf32>
      %c0_19 = arith.constant 0 : index
      %c0_20 = arith.constant 0 : index
      %25 = vector.load %arg6[%c0_19, %c0_20] : memref<1x256xf32, #tpu.memory_space<vmem>>, vector<1x256xf32>
      %26 = vector.broadcast %25 : vector<1x256xf32> to vector<16x256xf32>
      %27 = arith.addf %24, %26 : vector<16x256xf32>
      %cst_21 = arith.constant 0.000000e+00 : f32
      %28 = vector.broadcast %cst_21 : f32 to vector<16x256xf32>
      %29 = arith.cmpf ogt, %27, %28 : vector<16x256xf32>
      %cst_22 = arith.constant 0.00999999977 : f32
      %30 = vector.broadcast %cst_22 : f32 to vector<16x256xf32>
      %31 = arith.mulf %30, %27 : vector<16x256xf32>
      %32 = arith.select %29, %27, %31 : vector<16x256xi1>, vector<16x256xf32>
      %33 = arith.truncf %32 : vector<16x256xf32> to vector<16x256xbf16>
      %c0_23 = arith.constant 0 : index
      %c0_24 = arith.constant 0 : index
      %34 = vector.load %arg7[%c0_23, %c0_24] : memref<256x512xbf16, #tpu.memory_space<vmem>>, vector<256x512xbf16>
      %cst_25 = arith.constant dense<0.000000e+00> : vector<16x512xf32>
      %35 = tpu.matmul %33, %34, %cst_25 {dimension_numbers = #tpu.dot_dimension_numbers<[1], [0], [0], [1], [0, 0, 1, 1], [], []>} : vector<16x256xbf16>, vector<256x512xbf16>, vector<16x512xf32> -> vector<16x512xf32>
      %c0_26 = arith.constant 0 : index
      %c0_27 = arith.constant 0 : index
      %36 = vector.load %arg8[%c0_26, %c0_27] : memref<1x512xf32, #tpu.memory_space<vmem>>, vector<1x512xf32>
      %37 = vector.broadcast %36 : vector<1x512xf32> to vector<16x512xf32>
      %38 = arith.addf %35, %37 : vector<16x512xf32>
      %cst_28 = arith.constant 0.000000e+00 : f32
      %39 = vector.broadcast %cst_28 : f32 to vector<16x512xf32>
      %40 = arith.cmpf ogt, %38, %39 : vector<16x512xf32>
      %cst_29 = arith.constant 0.00999999977 : f32
      %41 = vector.broadcast %cst_29 : f32 to vector<16x512xf32>
      %42 = arith.mulf %41, %38 : vector<16x512xf32>
      %43 = arith.select %40, %38, %42 : vector<16x512xi1>, vector<16x512xf32>
      %44 = arith.truncf %43 : vector<16x512xf32> to vector<16x512xbf16>
      %c0_30 = arith.constant 0 : index
      %c0_31 = arith.constant 0 : index
      %45 = vector.load %arg9[%c0_30, %c0_31] : memref<1024x512xbf16, #tpu.memory_space<vmem>>, vector<512x512xbf16>
      %cst_32 = arith.constant dense<0.000000e+00> : vector<16x512xf32>
      %46 = tpu.matmul %22, %45, %cst_32 {dimension_numbers = #tpu.dot_dimension_numbers<[1], [0], [0], [1], [0, 0, 1, 1], [], []>} : vector<16x512xbf16>, vector<512x512xbf16>, vector<16x512xf32> -> vector<16x512xf32>
      %c512 = arith.constant 512 : index
      %c0_33 = arith.constant 0 : index
      %47 = vector.load %arg9[%c512, %c0_33] : memref<1024x512xbf16, #tpu.memory_space<vmem>>, vector<512x512xbf16>
      %cst_34 = arith.constant dense<0.000000e+00> : vector<16x512xf32>
      %48 = tpu.matmul %44, %47, %cst_34 {dimension_numbers = #tpu.dot_dimension_numbers<[1], [0], [0], [1], [0, 0, 1, 1], [], []>} : vector<16x512xbf16>, vector<512x512xbf16>, vector<16x512xf32> -> vector<16x512xf32>
      %49 = arith.addf %46, %48 : vector<16x512xf32>
      %c0_35 = arith.constant 0 : index
      %c0_36 = arith.constant 0 : index
      %50 = vector.load %arg10[%c0_35, %c0_36] : memref<1x512xf32, #tpu.memory_space<vmem>>, vector<1x512xf32>
      %51 = vector.broadcast %50 : vector<1x512xf32> to vector<16x512xf32>
      %52 = arith.addf %49, %51 : vector<16x512xf32>
      %53 = arith.negf %52 : vector<16x512xf32>
      %54 = math.exp %53 : vector<16x512xf32>
      %cst_37 = arith.constant 1.000000e+00 : f32
      %55 = vector.broadcast %cst_37 : f32 to vector<16x512xf32>
      %56 = arith.addf %55, %54 : vector<16x512xf32>
      %57 = arith.divf %55, %56 : vector<16x512xf32>
      %58 = arith.mulf %57, %21 : vector<16x512xf32>
      %59 = arith.addf %58, %43 : vector<16x512xf32>
      %c0_38 = arith.constant 0 : index
      %c0_39 = arith.constant 0 : index
      %60 = vector.load %arg11[%c0_38, %c0_39] : memref<256x128xbf16, #tpu.memory_space<vmem>>, vector<256x128xbf16>
      %cst_40 = arith.constant dense<0.000000e+00> : vector<16x128xf32>
      %61 = tpu.matmul %33, %60, %cst_40 {dimension_numbers = #tpu.dot_dimension_numbers<[1], [0], [0], [1], [0, 0, 1, 1], [], []>} : vector<16x256xbf16>, vector<256x128xbf16>, vector<16x128xf32> -> vector<16x128xf32>
      %c0_41 = arith.constant 0 : index
      %c0_42 = arith.constant 0 : index
      %62 = vector.load %arg12[%c0_41, %c0_42] : memref<1x128xf32, #tpu.memory_space<vmem>>, vector<1x128xf32>
      %63 = vector.broadcast %62 : vector<1x128xf32> to vector<16x128xf32>
      %64 = arith.addf %61, %63 : vector<16x128xf32>
      %c0_43 = arith.constant 0 : index
      %c0_44 = arith.constant 0 : index
      %65 = vector.load %arg13[%c0_43, %c0_44] : memref<16x128xf32, #tpu.memory_space<vmem>>, vector<16x128xf32>
      tpu.vector_store %arg13[%c0_43, %c0_44], %64 {strides = array<i32>} : memref<16x128xf32, #tpu.memory_space<vmem>>, vector<16x128xf32>,
      %c0_45 = arith.constant 0 : index
      %c0_46 = arith.constant 0 : index
      %66 = vector.load %arg14[%c0_45, %c0_46] : memref<16x512xf32, #tpu.memory_space<vmem>>, vector<16x512xf32>
      tpu.vector_store %arg14[%c0_45, %c0_46], %57 {strides = array<i32>} : memref<16x512xf32, #tpu.memory_space<vmem>>, vector<16x512xf32>,
      %67 = arith.truncf %59 : vector<16x512xf32> to vector<16x512xbf16>
      %c0_47 = arith.constant 0 : index
      %c0_48 = arith.constant 0 : index
      %68 = vector.load %arg15[%c0_47, %c0_48] : memref<16x512xbf16, #tpu.memory_space<vmem>>, vector<16x512xbf16>
      tpu.vector_store %arg15[%c0_47, %c0_48], %67 {strides = array<i32>} : memref<16x512xbf16, #tpu.memory_space<vmem>>, vector<16x512xbf16>,
    } else {
    }
    return
  }
  func.func @transform_0(%arg0: i32, %arg1: i32) -> (i32, i32) {
    %c0_i32 = arith.constant 0 : i32
    return %arg0, %arg1 : i32, i32
  }
  func.func @transform_1(%arg0: i32, %arg1: i32) -> (i32, i32) {
    %c0_i32 = arith.constant 0 : i32
    %c0_i32_0 = arith.constant 0 : i32
    return %arg1, %c0_i32 : i32, i32
  }
  func.func @transform_2(%arg0: i32, %arg1: i32) -> (i32, i32) {
    %c0_i32 = arith.constant 0 : i32
    %c0_i32_0 = arith.constant 0 : i32
    %c0_i32_1 = arith.constant 0 : i32
    return %c0_i32, %c0_i32_0 : i32, i32
  }
  func.func @transform_3(%arg0: i32, %arg1: i32) -> (i32, i32) {
    %c0_i32 = arith.constant 0 : i32
    %c0_i32_0 = arith.constant 0 : i32
    %c0_i32_1 = arith.constant 0 : i32
    return %c0_i32, %c0_i32_0 : i32, i32
  }
  func.func @transform_4(%arg0: i32, %arg1: i32) -> (i32, i32) {
    %c0_i32 = arith.constant 0 : i32
    %c0_i32_0 = arith.constant 0 : i32
    %c0_i32_1 = arith.constant 0 : i32
    return %c0_i32, %c0_i32_0 : i32, i32
  }
  func.func @transform_5(%arg0: i32, %arg1: i32) -> (i32, i32) {
    %c0_i32 = arith.constant 0 : i32
    %c0_i32_0 = arith.constant 0 : i32
    %c0_i32_1 = arith.constant 0 : i32
    return %c0_i32, %c0_i32_0 : i32, i32
  }
  func.func @transform_6(%arg0: i32, %arg1: i32) -> (i32, i32) {
    %c0_i32 = arith.constant 0 : i32
    %c0_i32_0 = arith.constant 0 : i32
    %c0_i32_1 = arith.constant 0 : i32
    return %c0_i32, %c0_i32_0 : i32, i32
  }
  func.func @transform_7(%arg0: i32, %arg1: i32) -> (i32, i32) {
    %c0_i32 = arith.constant 0 : i32
    %c0_i32_0 = arith.constant 0 : i32
    %c0_i32_1 = arith.constant 0 : i32
    return %c0_i32, %c0_i32_0 : i32, i32
  }
  func.func @transform_8(%arg0: i32, %arg1: i32) -> (i32, i32) {
    %c0_i32 = arith.constant 0 : i32
    %c0_i32_0 = arith.constant 0 : i32
    %c0_i32_1 = arith.constant 0 : i32
    return %c0_i32, %c0_i32_0 : i32, i32
  }
  func.func @transform_9(%arg0: i32, %arg1: i32) -> (i32, i32) {
    %c0_i32 = arith.constant 0 : i32
    %c0_i32_0 = arith.constant 0 : i32
    %c0_i32_1 = arith.constant 0 : i32
    return %c0_i32, %c0_i32_0 : i32, i32
  }
  func.func @transform_10(%arg0: i32, %arg1: i32) -> (i32, i32) {
    %c0_i32 = arith.constant 0 : i32
    %c0_i32_0 = arith.constant 0 : i32
    %c0_i32_1 = arith.constant 0 : i32
    return %c0_i32, %c0_i32_0 : i32, i32
  }
  func.func @transform_11(%arg0: i32, %arg1: i32) -> (i32, i32) {
    %c0_i32 = arith.constant 0 : i32
    %c0_i32_0 = arith.constant 0 : i32
    return %arg0, %c0_i32 : i32, i32
  }
  func.func @transform_12(%arg0: i32, %arg1: i32) -> (i32, i32) {
    %c0_i32 = arith.constant 0 : i32
    %c0_i32_0 = arith.constant 0 : i32
    return %arg0, %c0_i32 : i32, i32
  }
  func.func @transform_13(%arg0: i32, %arg1: i32) -> (i32, i32) {
    %c0_i32 = arith.constant 0 : i32
    %c0_i32_0 = arith.constant 0 : i32
    return %arg0, %c0_i32 : i32, i32
  }
}

</mosaic_0001>

<llo_original>
// kernel: model_forward.3
$region0: #{model_forward.3}
  #allocation0 [shape = 'u32[]', space=smem, size = 0x4, offset = 0x4, fixed_abs, tag = 'smem constant byte address 0x4 - core index']
  #allocation1 [shape = 'u32[144,128]{1,0:T(1,128)}', space=vmem, size = 0x12000, scoped, tag = 'internal scratch']
  %s0 = inlined_call_operand.vmem [shape: bf16[16,512], index: 0, kind: input, shape index: {}]
  %s1 = inlined_call_operand.vmem [shape: bf16[512,128], index: 1, kind: input, shape index: {}]
  %s2 = inlined_call_operand.vmem [shape: f32[1,128], index: 2, kind: input, shape index: {}]
  %s3 = inlined_call_operand.vmem [shape: bf16[16,128], index: 3, kind: output, shape index: {}]
  %s4 = sld [smem:[#allocation0]]
  $region22: #{model_forward.3} parent=0
    _
  %s6 = ssub.s32 1, %s4
  %s7 = scalar_select 0, %s6, %s4
  // Predicated region
  $region2: #{model_forward.3} parent=0 // pred_check
    _
  $region3: #{model_forward.3} parent=0 // pred_check_branch
    %9 = sbr.rel (0) target = $region5
  $region4: #{model_forward.3} parent=0 // pred_region
    _
  $region5: #{model_forward.3} parent=0 // pred_fallthru
    _
  // Predicated region
  $region6: #{model_forward.3} parent=0 // pred_check
    _
  $region7: #{model_forward.3} parent=0 // pred_check_branch
    %11 = sbr.rel (0) target = $region9
  $region8: #{model_forward.3} parent=0 // pred_region
    _
  $region9: #{model_forward.3} parent=0 // pred_fallthru
    _
  // Predicated region
  $region10: #{model_forward.3} parent=0 // pred_check
    _
  $region11: #{model_forward.3} parent=0 // pred_check_branch
    %13 = sbr.rel (0) target = $region13
  $region12: #{model_forward.3} parent=0 // pred_region
    _
  $region13: #{model_forward.3} parent=0 // pred_fallthru
    _
  %v15 = vld [vmem:[%s0] sm:$0xff]
  %v16 = vld [vmem:[%s0 + $0x8] sm:$0xff]
  %v17 = vld [vmem:[%s0 + $0x10] sm:$0xff]
  %v18 = vld [vmem:[%s0 + $0x18] sm:$0xff]
  %v19 = vld [vmem:[%s1] sm:$0xf]
  %v20 = vld [vmem:[%s1 + $0x4] sm:$0xf]
  %v21 = vld [vmem:[%s1 + $0x8] sm:$0xf]
  %v22 = vld [vmem:[%s1 + $0xc] sm:$0xf]
  %v23 = vld [vmem:[%s1 + $0x10] sm:$0xf]
  %v24 = vld [vmem:[%s1 + $0x14] sm:$0xf]
  %v25 = vld [vmem:[%s1 + $0x18] sm:$0xf]
  %v26 = vld [vmem:[%s1 + $0x1c] sm:$0xf]
  %v27 = vld [vmem:[%s1 + $0x20] sm:$0xf]
  %v28 = vld [vmem:[%s1 + $0x24] sm:$0xf]
  %v29 = vld [vmem:[%s1 + $0x28] sm:$0xf]
  %v30 = vld [vmem:[%s1 + $0x2c] sm:$0xf]
  %v31 = vld [vmem:[%s1 + $0x30] sm:$0xf]
  %v32 = vld [vmem:[%s1 + $0x34] sm:$0xf]
  %v33 = vld [vmem:[%s1 + $0x38] sm:$0xf]
  %v34 = vld [vmem:[%s1 + $0x3c] sm:$0xf]
  %v35 = vld [vmem:[%s1 + $0x40] sm:$0xf]
  %v36 = vld [vmem:[%s1 + $0x44] sm:$0xf]
  %v37 = vld [vmem:[%s1 + $0x48] sm:$0xf]
  %v38 = vld [vmem:[%s1 + $0x4c] sm:$0xf]
  %v39 = vld [vmem:[%s1 + $0x50] sm:$0xf]
  %v40 = vld [vmem:[%s1 + $0x54] sm:$0xf]
  %v41 = vld [vmem:[%s1 + $0x58] sm:$0xf]
  %v42 = vld [vmem:[%s1 + $0x5c] sm:$0xf]
  %v43 = vld [vmem:[%s1 + $0x60] sm:$0xf]
  %v44 = vld [vmem:[%s1 + $0x64] sm:$0xf]
  %v45 = vld [vmem:[%s1 + $0x68] sm:$0xf]
  %v46 = vld [vmem:[%s1 + $0x6c] sm:$0xf]
  %v47 = vld [vmem:[%s1 + $0x70] sm:$0xf]
  %v48 = vld [vmem:[%s1 + $0x74] sm:$0xf]
  %v49 = vld [vmem:[%s1 + $0x78] sm:$0xf]
  %v50 = vld [vmem:[%s1 + $0x7c] sm:$0xf]
  %v51 = vld [vmem:[%s1 + $0x80] sm:$0xf]
  %v52 = vld [vmem:[%s1 + $0x84] sm:$0xf]
  %v53 = vld [vmem:[%s1 + $0x88] sm:$0xf]
  %v54 = vld [vmem:[%s1 + $0x8c] sm:$0xf]
  %v55 = vld [vmem:[%s1 + $0x90] sm:$0xf]
  %v56 = vld [vmem:[%s1 + $0x94] sm:$0xf]
  %v57 = vld [vmem:[%s1 + $0x98] sm:$0xf]
  %v58 = vld [vmem:[%s1 + $0x9c] sm:$0xf]
  %v59 = vld [vmem:[%s1 + $0xa0] sm:$0xf]
  %v60 = vld [vmem:[%s1 + $0xa4] sm:$0xf]
  %v61 = vld [vmem:[%s1 + $0xa8] sm:$0xf]
  %v62 = vld [vmem:[%s1 + $0xac] sm:$0xf]
  %v63 = vld [vmem:[%s1 + $0xb0] sm:$0xf]
  %v64 = vld [vmem:[%s1 + $0xb4] sm:$0xf]
  %v65 = vld [vmem:[%s1 + $0xb8] sm:$0xf]
  %v66 = vld [vmem:[%s1 + $0xbc] sm:$0xf]
  %v67 = vld [vmem:[%s1 + $0xc0] sm:$0xf]
  %v68 = vld [vmem:[%s1 + $0xc4] sm:$0xf]
  %v69 = vld [vmem:[%s1 + $0xc8] sm:$0xf]
  %v70 = vld [vmem:[%s1 + $0xcc] sm:$0xf]
  %v71 = vld [vmem:[%s1 + $0xd0] sm:$0xf]
  %v72 = vld [vmem:[%s1 + $0xd4] sm:$0xf]
  %v73 = vld [vmem:[%s1 + $0xd8] sm:$0xf]
  %v74 = vld [vmem:[%s1 + $0xdc] sm:$0xf]
  %v75 = vld [vmem:[%s1 + $0xe0] sm:$0xf]
  %v76 = vld [vmem:[%s1 + $0xe4] sm:$0xf]
  %v77 = vld [vmem:[%s1 + $0xe8] sm:$0xf]
  %v78 = vld [vmem:[%s1 + $0xec] sm:$0xf]
  %v79 = vld [vmem:[%s1 + $0xf0] sm:$0xf]
  %v80 = vld [vmem:[%s1 + $0xf4] sm:$0xf]
  %v81 = vld [vmem:[%s1 + $0xf8] sm:$0xf]
  %v82 = vld [vmem:[%s1 + $0xfc] sm:$0xf]
  %v83 = vld [vmem:[%s2] sm:$0x1]
  %v85 = vlaneseq
  %v86 = vshrl.u32 %v85, 7
  %v87 = vsub.s32 0, %v86
  %v88 = vrot.slane %v83, %v87
  %v94 = vunpack.c.l.b16 %v15
  %v95 = vunpack.c.h.b16 %v15
  %v96 = vunpack.c.l.b16 %v16
  %v97 = vunpack.c.h.b16 %v16
  %v98 = vunpack.c.l.b16 %v17
  %v99 = vunpack.c.h.b16 %v17
  %v100 = vunpack.c.l.b16 %v18
  %v101 = vunpack.c.h.b16 %v18
  %v102 = vpack.c.b16 %v98, %v94
  %v103 = vpack.c.b16 %v99, %v95
  %v104 = vpack.c.b16 %v100, %v96
  %v105 = vpack.c.b16 %v101, %v97
  %v174 = vunpack.c.l.b16 %v19
  %v175 = vunpack.c.l.b16 %v20
  %v176 = vunpack.c.l.b16 %v21
  %v177 = vunpack.c.l.b16 %v22
  %v178 = vunpack.c.l.b16 %v23
  %v179 = vunpack.c.l.b16 %v24
  %v180 = vunpack.c.l.b16 %v25
  %v181 = vunpack.c.l.b16 %v26
  %v182 = vunpack.c.l.b16 %v27
  %v183 = vunpack.c.l.b16 %v28
  %v184 = vunpack.c.l.b16 %v29
  %v185 = vunpack.c.l.b16 %v30
  %v186 = vunpack.c.l.b16 %v31
  %v187 = vunpack.c.l.b16 %v32
  %v188 = vunpack.c.l.b16 %v33
  %v189 = vunpack.c.l.b16 %v34
  %v190 = vunpack.c.l.b16 %v35
  %v191 = vunpack.c.l.b16 %v36
  %v192 = vunpack.c.l.b16 %v37
  %v193 = vunpack.c.l.b16 %v38
  %v194 = vunpack.c.l.b16 %v39
  %v195 = vunpack.c.l.b16 %v40
  %v196 = vunpack.c.l.b16 %v41
  %v197 = vunpack.c.l.b16 %v42
  %v198 = vunpack.c.l.b16 %v43
  %v199 = vunpack.c.l.b16 %v44
  %v200 = vunpack.c.l.b16 %v45
  %v201 = vunpack.c.l.b16 %v46
  %v202 = vunpack.c.l.b16 %v47
  %v203 = vunpack.c.l.b16 %v48
  %v204 = vunpack.c.l.b16 %v49
  %v205 = vunpack.c.l.b16 %v50
  %v206 = vunpack.c.l.b16 %v51
  %v207 = vunpack.c.l.b16 %v52
  %v208 = vunpack.c.l.b16 %v53
  %v209 = vunpack.c.l.b16 %v54
  %v210 = vunpack.c.l.b16 %v55
  %v211 = vunpack.c.l.b16 %v56
  %v212 = vunpack.c.l.b16 %v57
  %v213 = vunpack.c.l.b16 %v58
  %v214 = vunpack.c.l.b16 %v59
  %v215 = vunpack.c.l.b16 %v60
  %v216 = vunpack.c.l.b16 %v61
  %v217 = vunpack.c.l.b16 %v62
  %v218 = vunpack.c.l.b16 %v63
  %v219 = vunpack.c.l.b16 %v64
  %v220 = vunpack.c.l.b16 %v65
  %v221 = vunpack.c.l.b16 %v66
  %v222 = vunpack.c.l.b16 %v67
  %v223 = vunpack.c.l.b16 %v68
  %v224 = vunpack.c.l.b16 %v69
  %v225 = vunpack.c.l.b16 %v70
  %v226 = vunpack.c.l.b16 %v71
  %v227 = vunpack.c.l.b16 %v72
  %v228 = vunpack.c.l.b16 %v73
  %v229 = vunpack.c.l.b16 %v74
  %v230 = vunpack.c.l.b16 %v75
  %v231 = vunpack.c.l.b16 %v76
  %v232 = vunpack.c.l.b16 %v77
  %v233 = vunpack.c.l.b16 %v78
  %v234 = vunpack.c.l.b16 %v79
  %v235 = vunpack.c.l.b16 %v80
  %v236 = vunpack.c.l.b16 %v81
  %v237 = vunpack.c.l.b16 %v82
  %v238 = vpack.c.b16 %v175, %v174
  %v239 = vpack.c.b16 %v177, %v176
  %v240 = vpack.c.b16 %v179, %v178
  %v241 = vpack.c.b16 %v181, %v180
  %v242 = vpack.c.b16 %v183, %v182
  %v243 = vpack.c.b16 %v185, %v184
  %v244 = vpack.c.b16 %v187, %v186
  %v245 = vpack.c.b16 %v189, %v188
  %v246 = vpack.c.b16 %v191, %v190
  %v247 = vpack.c.b16 %v193, %v192
  %v248 = vpack.c.b16 %v195, %v194
  %v249 = vpack.c.b16 %v197, %v196
  %v250 = vpack.c.b16 %v199, %v198
  %v251 = vpack.c.b16 %v201, %v200
  %v252 = vpack.c.b16 %v203, %v202
  %v253 = vpack.c.b16 %v205, %v204
  %v254 = vpack.c.b16 %v207, %v206
  %v255 = vpack.c.b16 %v209, %v208
  %v256 = vpack.c.b16 %v211, %v210
  %v257 = vpack.c.b16 %v213, %v212
  %v258 = vpack.c.b16 %v215, %v214
  %v259 = vpack.c.b16 %v217, %v216
  %v260 = vpack.c.b16 %v219, %v218
  %v261 = vpack.c.b16 %v221, %v220
  %v262 = vpack.c.b16 %v223, %v222
  %v263 = vpack.c.b16 %v225, %v224
  %v264 = vpack.c.b16 %v227, %v226
  %v265 = vpack.c.b16 %v229, %v228
  %v266 = vpack.c.b16 %v231, %v230
  %v267 = vpack.c.b16 %v233, %v232
  %v268 = vpack.c.b16 %v235, %v234
  %v269 = vpack.c.b16 %v237, %v236
  %302 = vmatprep.subr.bf16.mxu0 0
  %303 = vmatpush1.bf16.msra.mxu0 %v245
  %304 = vmatprep.subr.bf16.mxu0 0
  %305 = vmatpush1.bf16.msra.mxu0 %v244
  %306 = vmatprep.subr.bf16.mxu0 0
  %307 = vmatpush1.bf16.msra.mxu0 %v243
  %308 = vmatprep.subr.bf16.mxu0 0
  %309 = vmatpush1.bf16.msra.mxu0 %v242
  %310 = vmatprep.subr.bf16.mxu0 0
  %311 = vmatpush1.bf16.msra.mxu0 %v241
  %312 = vmatprep.subr.bf16.mxu0 0
  %313 = vmatpush1.bf16.msra.mxu0 %v240
  %314 = vmatprep.subr.bf16.mxu0 0
  %315 = vmatpush1.bf16.msra.mxu0 %v239
  %316 = vmatprep.subr.bf16.mxu0 0
  %317 = vmatpush1.bf16.msra.mxu0 %v238
  %318 = vmatprep.subr.bf16.mxu0 0
  %319 = vmatpush2.bf16.msra.mxu0 %v253
  %320 = vmatprep.subr.bf16.mxu0 0
  %321 = vmatpush2.bf16.msra.mxu0 %v252
  %322 = vmatprep.subr.bf16.mxu0 0
  %323 = vmatpush2.bf16.msra.mxu0 %v251
  %324 = vmatprep.subr.bf16.mxu0 0
  %325 = vmatpush2.bf16.msra.mxu0 %v250
  %326 = vmatprep.subr.bf16.mxu0 0
  %327 = vmatpush2.bf16.msra.mxu0 %v249
  %328 = vmatprep.subr.bf16.mxu0 0
  %329 = vmatpush2.bf16.msra.mxu0 %v248
  %330 = vmatprep.subr.bf16.mxu0 0
  %331 = vmatpush2.bf16.msra.mxu0 %v247
  %332 = vmatprep.subr.bf16.mxu0 0
  %333 = vmatpush2.bf16.msra.mxu0 %v246
  %334 = vmatprep.mubr.bf16.mxu0 %v103
  %335 = vmatmul.mubr.bf16.gmra.mxu0 %v102
  %v336 = vpop.f32.mrf.mxu0
  %v337 = vadd.f32 %v88, %v336
  %v338 = vpop.f32.mrf.mxu0
  %v339 = vpop.f32.mrf.mxu0
  %v340 = vadd.f32 %v88, %v339
  %v341 = vpop.f32.mrf.mxu0
  %342 = vdwg.mxu0
  %343 = vmatprep.subr.bf16.mxu0 0
  %344 = vmatpush1.bf16.msra.mxu0 %v261
  %345 = vmatprep.subr.bf16.mxu0 0
  %346 = vmatpush1.bf16.msra.mxu0 %v260
  %347 = vmatprep.subr.bf16.mxu0 0
  %348 = vmatpush1.bf16.msra.mxu0 %v259
  %349 = vmatprep.subr.bf16.mxu0 0
  %350 = vmatpush1.bf16.msra.mxu0 %v258
  %351 = vmatprep.subr.bf16.mxu0 0
  %352 = vmatpush1.bf16.msra.mxu0 %v257
  %353 = vmatprep.subr.bf16.mxu0 0
  %354 = vmatpush1.bf16.msra.mxu0 %v256
  %355 = vmatprep.subr.bf16.mxu0 0
  %356 = vmatpush1.bf16.msra.mxu0 %v255
  %357 = vmatprep.subr.bf16.mxu0 0
  %358 = vmatpush1.bf16.msra.mxu0 %v254
  %359 = vmatprep.subr.bf16.mxu0 0
  %360 = vmatpush2.bf16.msra.mxu0 %v269
  %361 = vmatprep.subr.bf16.mxu0 0
  %362 = vmatpush2.bf16.msra.mxu0 %v268
  %363 = vmatprep.subr.bf16.mxu0 0
  %364 = vmatpush2.bf16.msra.mxu0 %v267
  %365 = vmatprep.subr.bf16.mxu0 0
  %366 = vmatpush2.bf16.msra.mxu0 %v266
  %367 = vmatprep.subr.bf16.mxu0 0
  %368 = vmatpush2.bf16.msra.mxu0 %v265
  %369 = vmatprep.subr.bf16.mxu0 0
  %370 = vmatpush2.bf16.msra.mxu0 %v264
  %371 = vmatprep.subr.bf16.mxu0 0
  %372 = vmatpush2.bf16.msra.mxu0 %v263
  %373 = vmatprep.subr.bf16.mxu0 0
  %374 = vmatpush2.bf16.msra.mxu0 %v262
  %375 = vmatprep.mubr.bf16.mxu0 %v105
  %376 = vmatmul.mubr.bf16.gmra.mxu0 %v104
  %v377 = vpop.f32.mrf.mxu0
  %v378 = vadd.f32 %v337, %v377
  %v379 = vpop.f32.mrf.mxu0
  %v380 = vpop.f32.mrf.mxu0
  %v381 = vadd.f32 %v340, %v380
  %v382 = vpop.f32.mrf.mxu0
  %383 = vdwg.mxu0
  %v384 = vpack.c.bf16 %v381, %v378
  %v386 = vunpack.c.l.b16 %v384
  %v387 = vunpack.c.h.b16 %v384
  %v388 = vpack.c.b16 %v386, %v386
  %v389 = vpack.c.b16 %v387, %v387
  %392 = vst [vmem:[%s3] sm:$0xf] %v388
  %393 = vst [vmem:[%s3 + $0x4] sm:$0xf] %v389
  // Predicated region
  $region14: #{model_forward.3} parent=0 // pred_check
    _
  $region15: #{model_forward.3} parent=0 // pred_check_branch
    %395 = sbr.rel (0) target = $region17
  $region16: #{model_forward.3} parent=0 // pred_region
    _
  $region17: #{model_forward.3} parent=0 // pred_fallthru
    _
  // Predicated region
  $region18: #{model_forward.3} parent=0 // pred_check
    _
  $region19: #{model_forward.3} parent=0 // pred_check_branch
    %397 = sbr.rel (0) target = $region21
  $region20: #{model_forward.3} parent=0 // pred_region
    _
  $region21: #{model_forward.3} parent=0 // pred_fallthru
    _

// kernel: model_forward.2
$region0: #{model_forward.2}
  #allocation0 [shape = 'u32[]', space=smem, size = 0x4, offset = 0x4, fixed_abs, tag = 'smem constant byte address 0x4 - core index']
  #allocation1 [shape = 'u32[144,128]{1,0:T(1,128)}', space=vmem, size = 0x12000, scoped, tag = 'internal scratch']
  #allocation2 [shape = 'f32[16,512]{1,0:T(8,128)}', space=vmem, size = 0x8000, scoped, tag = 'scratch operand']
  %s0 = inlined_call_operand.vmem [shape: f32[16,128], index: 0, kind: input, shape index: {}]
  %s1 = inlined_call_operand.hbm [shape: bf16[128,512], index: 1, kind: input, shape index: {}]
  %s2 = inlined_call_operand.vmem [shape: f32[1,512], index: 2, kind: input, shape index: {}]
  %s3 = inlined_call_operand.hbm [shape: bf16[512,256], index: 3, kind: input, shape index: {}]
  %s4 = inlined_call_operand.vmem [shape: f32[1,256], index: 4, kind: input, shape index: {}]
  %s5 = inlined_call_operand.hbm [shape: bf16[256,512], index: 5, kind: input, shape index: {}]
  %s6 = inlined_call_operand.vmem [shape: f32[1,512], index: 6, kind: input, shape index: {}]
  %s7 = inlined_call_operand.hbm [shape: bf16[1024,512], index: 7, kind: input, shape index: {}]
  %s8 = inlined_call_operand.vmem [shape: f32[1,512], index: 8, kind: input, shape index: {}]
  %s9 = inlined_call_operand.hbm [shape: bf16[256,128], index: 9, kind: input, shape index: {}]
  %s10 = inlined_call_operand.vmem [shape: f32[1,128], index: 10, kind: input, shape index: {}]
  %s11 = inlined_call_operand.vmem [shape: f32[16,128], index: 11, kind: output, shape index: {0}]
  %s12 = inlined_call_operand.vmem [shape: f32[16,512], index: 12, kind: output, shape index: {1}]
  %s13 = inlined_call_operand.vmem [shape: bf16[16,512], index: 13, kind: output, shape index: {2}]
  %14 = xla_tuple %s11, %s12, %s13
  %s15 = sld [smem:[#allocation0]]
  $region98: #{model_forward.2} parent=0
    _
  %s17 = ssub.s32 1, %s15
  %s18 = scalar_select 0, %s17, %s15
  $region1: #{model_forward.2} parent=0
    #allocation3 [shape = 'u8[131072]{0}', space=vmem, size = 0x20000, scoped, tag = 'input window, operand 1, single buffered']
    #allocation4 [shape = 's32[1]{0}', space=sflag, size = 0x4, scoped, tag = 'scoped memory for model_forward.2']
    #allocation5 [shape = 'u8[262144]{0}', space=vmem, size = 0x40000, scoped, tag = 'input window, operand 3, single buffered']
    #allocation6 [shape = 's32[1]{0}', space=sflag, size = 0x4, scoped, tag = 'scoped memory for model_forward.2']
    #allocation7 [shape = 'u8[262144]{0}', space=vmem, size = 0x40000, scoped, tag = 'input window, operand 5, single buffered']
    #allocation8 [shape = 'u8[1048576]{0}', space=vmem, size = 0x100000, scoped, tag = 'input window, operand 7, single buffered']
    #allocation9 [shape = 's32[1]{0}', space=sflag, size = 0x4, scoped, tag = 'scoped memory for model_forward.2']
    #allocation10 [shape = 'u8[65536]{0}', space=vmem, size = 0x10000, scoped, tag = 'input window, operand 9, single buffered']
    %19 = vsyncpa [#allocation4], 0
    %20 = vsyncpa [#allocation6], 0
    %21 = vsyncpa [#allocation9], 0
    // Predicated region
    $region2: #{model_forward.2} parent=1 // pred_check
      _
    $region3: #{model_forward.2} parent=1 // pred_check_branch
      %23 = sbr.rel (0) target = $region5
    $region4: #{model_forward.2} parent=1 // pred_region
      _
    $region5: #{model_forward.2} parent=1 // pred_fallthru
      _
    // Predicated region
    $region6: #{model_forward.2} parent=1 // pred_check
      _
    $region7: #{model_forward.2} parent=1 // pred_check_branch
      %25 = sbr.rel (0) target = $region9
    $region8: #{model_forward.2} parent=1 // pred_region
      %s27 = ssub.s32 4096, 4096
      %28 = vsyncadd [#allocation4], %s27
      %s29 = sshll.u32 [#allocation3], 4
      %s30 = int_to_ptr.vmem [resolvable:$true] %s29
      %35 = dma.hbm_to_vmem [thread:$0]  %s1, 4096, %s30, [#allocation4], 256, 256, 16
    $region9: #{model_forward.2} parent=1 // pred_fallthru
      _
    // Predicated region
    $region10: #{model_forward.2} parent=1 // pred_check
      _
    $region11: #{model_forward.2} parent=1 // pred_check_branch
      %37 = sbr.rel (0) target = $region13
    $region12: #{model_forward.2} parent=1 // pred_region
      _
    $region13: #{model_forward.2} parent=1 // pred_fallthru
      _
    // Predicated region
    $region14: #{model_forward.2} parent=1 // pred_check
      _
    $region15: #{model_forward.2} parent=1 // pred_check_branch
      %39 = sbr.rel (0) target = $region17
    $region16: #{model_forward.2} parent=1 // pred_region
      %s41 = ssub.s32 8192, 8192
      %42 = vsyncadd [#allocation6], %s41
      %s43 = sshll.u32 [#allocation5], 4
      %s44 = int_to_ptr.vmem [resolvable:$true] %s43
      %49 = dma.hbm_to_vmem [thread:$0]  %s3, 8192, %s44, [#allocation6], 128, 128, 8
    $region17: #{model_forward.2} parent=1 // pred_fallthru
      _
    // Predicated region
    $region18: #{model_forward.2} parent=1 // pred_check
      _
    $region19: #{model_forward.2} parent=1 // pred_check_branch
      %51 = sbr.rel (0) target = $region21
    $region20: #{model_forward.2} parent=1 // pred_region
      _
    $region21: #{model_forward.2} parent=1 // pred_fallthru
      _
    // Predicated region
    $region22: #{model_forward.2} parent=1 // pred_check
      _
    $region23: #{model_forward.2} parent=1 // pred_check_branch
      %53 = sbr.rel (0) target = $region25
    $region24: #{model_forward.2} parent=1 // pred_region
      %s55 = ssub.s32 8192, 8192
      %56 = vsyncadd [#allocation6], %s55
      %s57 = sshll.u32 [#allocation7], 4
      %s58 = int_to_ptr.vmem [resolvable:$true] %s57
      %63 = dma.hbm_to_vmem [thread:$0]  %s5, 8192, %s58, [#allocation6], 256, 256, 16
    $region25: #{model_forward.2} parent=1 // pred_fallthru
      _
    // Predicated region
    $region26: #{model_forward.2} parent=1 // pred_check
      _
    $region27: #{model_forward.2} parent=1 // pred_check_branch
      %65 = sbr.rel (0) target = $region29
    $region28: #{model_forward.2} parent=1 // pred_region
      _
    $region29: #{model_forward.2} parent=1 // pred_fallthru
      _
    // Predicated region
    $region30: #{model_forward.2} parent=1 // pred_check
      _
    $region31: #{model_forward.2} parent=1 // pred_check_branch
      %67 = sbr.rel (0) target = $region33
    $region32: #{model_forward.2} parent=1 // pred_region
      %s69 = ssub.s32 32768, 32768
      %70 = vsyncadd [#allocation9], %s69
      %s71 = sshll.u32 [#allocation8], 4
      %s72 = int_to_ptr.vmem [resolvable:$true] %s71
      %77 = dma.hbm_to_vmem [thread:$0]  %s7, 32768, %s72, [#allocation9], 256, 256, 16
    $region33: #{model_forward.2} parent=1 // pred_fallthru
      _
    // Predicated region
    $region34: #{model_forward.2} parent=1 // pred_check
      _
    $region35: #{model_forward.2} parent=1 // pred_check_branch
      %79 = sbr.rel (0) target = $region37
    $region36: #{model_forward.2} parent=1 // pred_region
      _
    $region37: #{model_forward.2} parent=1 // pred_fallthru
      _
    // Predicated region
    $region38: #{model_forward.2} parent=1 // pred_check
      _
    $region39: #{model_forward.2} parent=1 // pred_check_branch
      %81 = sbr.rel (0) target = $region41
    $region40: #{model_forward.2} parent=1 // pred_region
      %s83 = ssub.s32 2048, 2048
      %84 = vsyncadd [#allocation9], %s83
      %s85 = sshll.u32 [#allocation10], 4
      %s86 = int_to_ptr.vmem [resolvable:$true] %s85
      %91 = dma.hbm_to_vmem [thread:$0]  %s9, 2048, %s86, [#allocation9], 64, 64, 4
    $region41: #{model_forward.2} parent=1 // pred_fallthru
      _
    // Predicated region
    $region42: #{model_forward.2} parent=1 // pred_check
      _
    $region43: #{model_forward.2} parent=1 // pred_check_branch
      %93 = sbr.rel (0) target = $region45
    $region44: #{model_forward.2} parent=1 // pred_region
      _
    $region45: #{model_forward.2} parent=1 // pred_fallthru
      _
    // Predicated region
    $region46: #{model_forward.2} parent=1 // pred_check
      _
    $region47: #{model_forward.2} parent=1 // pred_check_branch
      %95 = sbr.rel (0) target = $region49
    $region48: #{model_forward.2} parent=1 // pred_region
      %96 = dma.done [#allocation4], 4096
    $region49: #{model_forward.2} parent=1 // pred_fallthru
      _
    // Predicated region
    $region50: #{model_forward.2} parent=1 // pred_check
      _
    $region51: #{model_forward.2} parent=1 // pred_check_branch
      %98 = sbr.rel (0) target = $region53
    $region52: #{model_forward.2} parent=1 // pred_region
      %99 = dma.done [#allocation6], 8192
    $region53: #{model_forward.2} parent=1 // pred_fallthru
      _
    // Predicated region
    $region54: #{model_forward.2} parent=1 // pred_check
      _
    $region55: #{model_forward.2} parent=1 // pred_check_branch
      %101 = sbr.rel (0) target = $region57
    $region56: #{model_forward.2} parent=1 // pred_region
      %102 = dma.done [#allocation6], 8192
    $region57: #{model_forward.2} parent=1 // pred_fallthru
      _
    // Predicated region
    $region58: #{model_forward.2} parent=1 // pred_check
      _
    $region59: #{model_forward.2} parent=1 // pred_check_branch
      %104 = sbr.rel (0) target = $region61
    $region60: #{model_forward.2} parent=1 // pred_region
      %105 = dma.done [#allocation9], 32768
    $region61: #{model_forward.2} parent=1 // pred_fallthru
      _
    // Predicated region
    $region62: #{model_forward.2} parent=1 // pred_check
      _
    $region63: #{model_forward.2} parent=1 // pred_check_branch
      %107 = sbr.rel (0) target = $region65
    $region64: #{model_forward.2} parent=1 // pred_region
      %108 = dma.done [#allocation9], 2048
    $region65: #{model_forward.2} parent=1 // pred_fallthru
      _
    %p110 = scmp.eq.s32.totalorder 0, 0
    // Predicated region
    $region66: #{model_forward.2} parent=1 // pred_check
      %p111 = pneg %p110
    $region67: #{model_forward.2} parent=1 // pred_check_branch
      %113 = sbr.rel (%p111) target = $region69
    $region68: #{model_forward.2} parent=1 // pred_region
      %114 = vst [vmem:[#allocation2] sm:$0xff] 0.0
      %115 = vst [vmem:[#allocation2 + $0x8] sm:$0xff] 0.0
      %116 = vst [vmem:[#allocation2 + $0x10] sm:$0xff] 0.0
      %117 = vst [vmem:[#allocation2 + $0x18] sm:$0xff] 0.0
      %118 = vst [vmem:[#allocation2 + $0x20] sm:$0xff] 0.0
      %119 = vst [vmem:[#allocation2 + $0x28] sm:$0xff] 0.0
      %120 = vst [vmem:[#allocation2 + $0x30] sm:$0xff] 0.0
      %121 = vst [vmem:[#allocation2 + $0x38] sm:$0xff] 0.0
    $region69: #{model_forward.2} parent=1 // pred_fallthru
      _
    %v122 = vld [vmem:[%s0] sm:$0xff]
    %v123 = vld [vmem:[%s0 + $0x8] sm:$0xff]
    %v124 = vpack.c.bf16 %v123, %v122
    %v125 = vld [vmem:[#allocation2] sm:$0xff]
    %v126 = vld [vmem:[#allocation2 + $0x8] sm:$0xff]
    %v127 = vld [vmem:[#allocation2 + $0x10] sm:$0xff]
    %v128 = vld [vmem:[#allocation2 + $0x18] sm:$0xff]
    %v129 = vld [vmem:[#allocation2 + $0x20] sm:$0xff]
    %v130 = vld [vmem:[#allocation2 + $0x28] sm:$0xff]
    %v131 = vld [vmem:[#allocation2 + $0x30] sm:$0xff]
    %v132 = vld [vmem:[#allocation2 + $0x38] sm:$0xff]
    %v133 = vld [vmem:[#allocation3] sm:$0xff]
    %v134 = vld [vmem:[#allocation3 + $0x8] sm:$0xff]
    %v135 = vld [vmem:[#allocation3 + $0x10] sm:$0xff]
    %v136 = vld [vmem:[#allocation3 + $0x18] sm:$0xff]
    %v137 = vld [vmem:[#allocation3 + $0x20] sm:$0xff]
    %v138 = vld [vmem:[#allocation3 + $0x28] sm:$0xff]
    %v139 = vld [vmem:[#allocation3 + $0x30] sm:$0xff]
    %v140 = vld [vmem:[#allocation3 + $0x38] sm:$0xff]
    %v141 = vld [vmem:[#allocation3 + $0x40] sm:$0xff]
    %v142 = vld [vmem:[#allocation3 + $0x48] sm:$0xff]
    %v143 = vld [vmem:[#allocation3 + $0x50] sm:$0xff]
    %v144 = vld [vmem:[#allocation3 + $0x58] sm:$0xff]
    %v145 = vld [vmem:[#allocation3 + $0x60] sm:$0xff]
    %v146 = vld [vmem:[#allocation3 + $0x68] sm:$0xff]
    %v147 = vld [vmem:[#allocation3 + $0x70] sm:$0xff]
    %v148 = vld [vmem:[#allocation3 + $0x78] sm:$0xff]
    %v149 = vld [vmem:[#allocation3 + $0x80] sm:$0xff]
    %v150 = vld [vmem:[#allocation3 + $0x88] sm:$0xff]
    %v151 = vld [vmem:[#allocation3 + $0x90] sm:$0xff]
    %v152 = vld [vmem:[#allocation3 + $0x98] sm:$0xff]
    %v153 = vld [vmem:[#allocation3 + $0xa0] sm:$0xff]
    %v154 = vld [vmem:[#allocation3 + $0xa8] sm:$0xff]
    %v155 = vld [vmem:[#allocation3 + $0xb0] sm:$0xff]
    %v156 = vld [vmem:[#allocation3 + $0xb8] sm:$0xff]
    %v157 = vld [vmem:[#allocation3 + $0xc0] sm:$0xff]
    %v158 = vld [vmem:[#allocation3 + $0xc8] sm:$0xff]
    %v159 = vld [vmem:[#allocation3 + $0xd0] sm:$0xff]
    %v160 = vld [vmem:[#allocation3 + $0xd8] sm:$0xff]
    %v161 = vld [vmem:[#allocation3 + $0xe0] sm:$0xff]
    %v162 = vld [vmem:[#allocation3 + $0xe8] sm:$0xff]
    %v163 = vld [vmem:[#allocation3 + $0xf0] sm:$0xff]
    %v164 = vld [vmem:[#allocation3 + $0xf8] sm:$0xff]
    %v197 = vunpack.c.l.b16 %v133
    %v198 = vunpack.c.h.b16 %v133
    %v199 = vunpack.c.l.b16 %v134
    %v200 = vunpack.c.h.b16 %v134
    %v201 = vunpack.c.l.b16 %v135
    %v202 = vunpack.c.h.b16 %v135
    %v203 = vunpack.c.l.b16 %v136
    %v204 = vunpack.c.h.b16 %v136
    %v205 = vunpack.c.l.b16 %v137
    %v206 = vunpack.c.h.b16 %v137
    %v207 = vunpack.c.l.b16 %v138
    %v208 = vunpack.c.h.b16 %v138
    %v209 = vunpack.c.l.b16 %v139
    %v210 = vunpack.c.h.b16 %v139
    %v211 = vunpack.c.l.b16 %v140
    %v212 = vunpack.c.h.b16 %v140
    %v213 = vunpack.c.l.b16 %v141
    %v214 = vunpack.c.h.b16 %v141
    %v215 = vunpack.c.l.b16 %v142
    %v216 = vunpack.c.h.b16 %v142
    %v217 = vunpack.c.l.b16 %v143
    %v218 = vunpack.c.h.b16 %v143
    %v219 = vunpack.c.l.b16 %v144
    %v220 = vunpack.c.h.b16 %v144
    %v221 = vunpack.c.l.b16 %v145
    %v222 = vunpack.c.h.b16 %v145
    %v223 = vunpack.c.l.b16 %v146
    %v224 = vunpack.c.h.b16 %v146
    %v225 = vunpack.c.l.b16 %v147
    %v226 = vunpack.c.h.b16 %v147
    %v227 = vunpack.c.l.b16 %v148
    %v228 = vunpack.c.h.b16 %v148
    %v229 = vunpack.c.l.b16 %v149
    %v230 = vunpack.c.h.b16 %v149
    %v231 = vunpack.c.l.b16 %v150
    %v232 = vunpack.c.h.b16 %v150
    %v233 = vunpack.c.l.b16 %v151
    %v234 = vunpack.c.h.b16 %v151
    %v235 = vunpack.c.l.b16 %v152
    %v236 = vunpack.c.h.b16 %v152
    %v237 = vunpack.c.l.b16 %v153
    %v238 = vunpack.c.h.b16 %v153
    %v239 = vunpack.c.l.b16 %v154
    %v240 = vunpack.c.h.b16 %v154
    %v241 = vunpack.c.l.b16 %v155
    %v242 = vunpack.c.h.b16 %v155
    %v243 = vunpack.c.l.b16 %v156
    %v244 = vunpack.c.h.b16 %v156
    %v245 = vunpack.c.l.b16 %v157
    %v246 = vunpack.c.h.b16 %v157
    %v247 = vunpack.c.l.b16 %v158
    %v248 = vunpack.c.h.b16 %v158
    %v249 = vunpack.c.l.b16 %v159
    %v250 = vunpack.c.h.b16 %v159
    %v251 = vunpack.c.l.b16 %v160
    %v252 = vunpack.c.h.b16 %v160
    %v253 = vunpack.c.l.b16 %v161
    %v254 = vunpack.c.h.b16 %v161
    %v255 = vunpack.c.l.b16 %v162
    %v256 = vunpack.c.h.b16 %v162
    %v257 = vunpack.c.l.b16 %v163
    %v258 = vunpack.c.h.b16 %v163
    %v259 = vunpack.c.l.b16 %v164
    %v260 = vunpack.c.h.b16 %v164
    %v261 = vpack.c.b16 %v201, %v197
    %v262 = vpack.c.b16 %v202, %v198
    %v263 = vpack.c.b16 %v203, %v199
    %v264 = vpack.c.b16 %v204, %v200
    %v265 = vpack.c.b16 %v209, %v205
    %v266 = vpack.c.b16 %v210, %v206
    %v267 = vpack.c.b16 %v211, %v207
    %v268 = vpack.c.b16 %v212, %v208
    %v269 = vpack.c.b16 %v217, %v213
    %v270 = vpack.c.b16 %v218, %v214
    %v271 = vpack.c.b16 %v219, %v215
    %v272 = vpack.c.b16 %v220, %v216
    %v273 = vpack.c.b16 %v225, %v221
    %v274 = vpack.c.b16 %v226, %v222
    %v275 = vpack.c.b16 %v227, %v223
    %v276 = vpack.c.b16 %v228, %v224
    %v277 = vpack.c.b16 %v233, %v229
    %v278 = vpack.c.b16 %v234, %v230
    %v279 = vpack.c.b16 %v235, %v231
    %v280 = vpack.c.b16 %v236, %v232
    %v281 = vpack.c.b16 %v241, %v237
    %v282 = vpack.c.b16 %v242, %v238
    %v283 = vpack.c.b16 %v243, %v239
    %v284 = vpack.c.b16 %v244, %v240
    %v285 = vpack.c.b16 %v249, %v245
    %v286 = vpack.c.b16 %v250, %v246
    %v287 = vpack.c.b16 %v251, %v247
    %v288 = vpack.c.b16 %v252, %v248
    %v289 = vpack.c.b16 %v257, %v253
    %v290 = vpack.c.b16 %v258, %v254
    %v291 = vpack.c.b16 %v259, %v255
    %v292 = vpack.c.b16 %v260, %v256
    %325 = vmatprep.subr.bf16.mxu0 %v290
    %326 = vmatpush1.bf16.msra.mxu0 %v289
    %327 = vmatprep.subr.bf16.mxu0 %v286
    %328 = vmatpush1.bf16.msra.mxu0 %v285
    %329 = vmatprep.subr.bf16.mxu0 %v282
    %330 = vmatpush1.bf16.msra.mxu0 %v281
    %331 = vmatprep.subr.bf16.mxu0 %v278
    %332 = vmatpush1.bf16.msra.mxu0 %v277
    %333 = vmatprep.subr.bf16.mxu0 %v274
    %334 = vmatpush1.bf16.msra.mxu0 %v273
    %335 = vmatprep.subr.bf16.mxu0 %v270
    %336 = vmatpush1.bf16.msra.mxu0 %v269
    %337 = vmatprep.subr.bf16.mxu0 %v266
    %338 = vmatpush1.bf16.msra.mxu0 %v265
    %339 = vmatprep.subr.bf16.mxu0 %v262
    %340 = vmatpush1.bf16.msra.mxu0 %v261
    %341 = vmatprep.subr.bf16.mxu0 0
    %342 = vmatpush2.bf16.msra.mxu0 0
    %343 = vmatprep.subr.bf16.mxu0 0
    %344 = vmatpush2.bf16.msra.mxu0 0
    %345 = vmatprep.subr.bf16.mxu0 0
    %346 = vmatpush2.bf16.msra.mxu0 0
    %347 = vmatprep.subr.bf16.mxu0 0
    %348 = vmatpush2.bf16.msra.mxu0 0
    %349 = vmatprep.subr.bf16.mxu0 0
    %350 = vmatpush2.bf16.msra.mxu0 0
    %351 = vmatprep.subr.bf16.mxu0 0
    %352 = vmatpush2.bf16.msra.mxu0 0
    %353 = vmatprep.subr.bf16.mxu0 0
    %354 = vmatpush2.bf16.msra.mxu0 0
    %355 = vmatprep.subr.bf16.mxu0 0
    %356 = vmatpush2.bf16.msra.mxu0 0
    %357 = vmatprep.mubr.bf16.mxu0 0
    %358 = vmatmul.mubr.bf16.gmra.mxu0 %v124
    %v359 = vpop.f32.mrf.mxu0
    %v360 = vadd.f32 0.0, %v359
    %v361 = vpop.f32.mrf.mxu0
    %v362 = vadd.f32 0.0, %v361
    %v363 = vpop.f32.mrf.mxu0
    %v364 = vadd.f32 0.0, %v363
    %v365 = vpop.f32.mrf.mxu0
    %v366 = vadd.f32 0.0, %v365
    %367 = vdwg.mxu0
    %368 = vmatprep.subr.bf16.mxu0 %v292
    %369 = vmatpush1.bf16.msra.mxu0 %v291
    %370 = vmatprep.subr.bf16.mxu0 %v288
    %371 = vmatpush1.bf16.msra.mxu0 %v287
    %372 = vmatprep.subr.bf16.mxu0 %v284
    %373 = vmatpush1.bf16.msra.mxu0 %v283
    %374 = vmatprep.subr.bf16.mxu0 %v280
    %375 = vmatpush1.bf16.msra.mxu0 %v279
    %376 = vmatprep.subr.bf16.mxu0 %v276
    %377 = vmatpush1.bf16.msra.mxu0 %v275
    %378 = vmatprep.subr.bf16.mxu0 %v272
    %379 = vmatpush1.bf16.msra.mxu0 %v271
    %380 = vmatprep.subr.bf16.mxu0 %v268
    %381 = vmatpush1.bf16.msra.mxu0 %v267
    %382 = vmatprep.subr.bf16.mxu0 %v264
    %383 = vmatpush1.bf16.msra.mxu0 %v263
    %384 = vmatprep.subr.bf16.mxu0 0
    %385 = vmatpush2.bf16.msra.mxu0 0
    %386 = vmatprep.subr.bf16.mxu0 0
    %387 = vmatpush2.bf16.msra.mxu0 0
    %388 = vmatprep.subr.bf16.mxu0 0
    %389 = vmatpush2.bf16.msra.mxu0 0
    %390 = vmatprep.subr.bf16.mxu0 0
    %391 = vmatpush2.bf16.msra.mxu0 0
    %392 = vmatprep.subr.bf16.mxu0 0
    %393 = vmatpush2.bf16.msra.mxu0 0
    %394 = vmatprep.subr.bf16.mxu0 0
    %395 = vmatpush2.bf16.msra.mxu0 0
    %396 = vmatprep.subr.bf16.mxu0 0
    %397 = vmatpush2.bf16.msra.mxu0 0
    %398 = vmatprep.subr.bf16.mxu0 0
    %399 = vmatpush2.bf16.msra.mxu0 0
    %400 = vmatprep.mubr.bf16.mxu0 0
    %401 = vmatmul.mubr.bf16.gmra.mxu0 %v124
    %v402 = vpop.f32.mrf.mxu0
    %v403 = vadd.f32 0.0, %v402
    %v404 = vpop.f32.mrf.mxu0
    %v405 = vadd.f32 0.0, %v404
    %v406 = vpop.f32.mrf.mxu0
    %v407 = vadd.f32 0.0, %v406
    %v408 = vpop.f32.mrf.mxu0
    %v409 = vadd.f32 0.0, %v408
    %410 = vdwg.mxu0
    %v411 = vadd.f32 %v125, %v360
    %v412 = vadd.f32 %v126, %v362
    %v413 = vadd.f32 %v127, %v403
    %v414 = vadd.f32 %v128, %v405
    %v415 = vadd.f32 %v129, %v364
    %v416 = vadd.f32 %v130, %v366
    %v417 = vadd.f32 %v131, %v407
    %v418 = vadd.f32 %v132, %v409
    %419 = vst [vmem:[#allocation2] sm:$0xff] %v411
    %420 = vst [vmem:[#allocation2 + $0x8] sm:$0xff] %v412
    %421 = vst [vmem:[#allocation2 + $0x10] sm:$0xff] %v413
    %422 = vst [vmem:[#allocation2 + $0x18] sm:$0xff] %v414
    %423 = vst [vmem:[#allocation2 + $0x20] sm:$0xff] %v415
    %424 = vst [vmem:[#allocation2 + $0x28] sm:$0xff] %v416
    %425 = vst [vmem:[#allocation2 + $0x30] sm:$0xff] %v417
    %426 = vst [vmem:[#allocation2 + $0x38] sm:$0xff] %v418
    // Predicated region
    $region70: #{model_forward.2} parent=1 // pred_check
      %p427 = pneg %p110
    $region71: #{model_forward.2} parent=1 // pred_check_branch
      %429 = sbr.rel (%p427) target = $region73
    $region72: #{model_forward.2} parent=1 // pred_region
      %v430 = vld [vmem:[#allocation2] sm:$0xff]
      %v431 = vld [vmem:[#allocation2 + $0x8] sm:$0xff]
      %v432 = vld [vmem:[#allocation2 + $0x10] sm:$0xff]
      %v433 = vld [vmem:[#allocation2 + $0x18] sm:$0xff]
      %v434 = vld [vmem:[#allocation2 + $0x20] sm:$0xff]
      %v435 = vld [vmem:[#allocation2 + $0x28] sm:$0xff]
      %v436 = vld [vmem:[#allocation2 + $0x30] sm:$0xff]
      %v437 = vld [vmem:[#allocation2 + $0x38] sm:$0xff]
      %v438 = vld [vmem:[%s2] sm:$0xf]
      %v440 = vlaneseq
      %v441 = vshrl.u32 %v440, 7
      %v442 = vsub.s32 0, %v441
      %v443 = vrot.slane %v438, %v442
      %v444 = vlaneseq
      %v445 = vshrl.u32 %v444, 7
      %v446 = vsub.s32 1, %v445
      %v447 = vrot.slane %v438, %v446
      %v448 = vlaneseq
      %v449 = vshrl.u32 %v448, 7
      %v450 = vsub.s32 2, %v449
      %v451 = vrot.slane %v438, %v450
      %v452 = vlaneseq
      %v453 = vshrl.u32 %v452, 7
      %v454 = vsub.s32 3, %v453
      %v455 = vrot.slane %v438, %v454
      %v460 = vadd.f32 %v430, %v443
      %v461 = vadd.f32 %v431, %v447
      %v462 = vadd.f32 %v432, %v451
      %v463 = vadd.f32 %v433, %v455
      %v464 = vadd.f32 %v434, %v443
      %v465 = vadd.f32 %v435, %v447
      %v466 = vadd.f32 %v436, %v451
      %v467 = vadd.f32 %v437, %v455
      %vm468 = vcmp.gt.f32.partialorder %v460, 0.0
      %vm469 = vcmp.gt.f32.partialorder %v461, 0.0
      %vm470 = vcmp.gt.f32.partialorder %v462, 0.0
      %vm471 = vcmp.gt.f32.partialorder %v463, 0.0
      %vm472 = vcmp.gt.f32.partialorder %v464, 0.0
      %vm473 = vcmp.gt.f32.partialorder %v465, 0.0
      %vm474 = vcmp.gt.f32.partialorder %v466, 0.0
      %vm475 = vcmp.gt.f32.partialorder %v467, 0.0
      %v476 = vmul.f32 %v460, 0.01
      %v477 = vmul.f32 %v461, 0.01
      %v478 = vmul.f32 %v462, 0.01
      %v479 = vmul.f32 %v463, 0.01
      %v480 = vmul.f32 %v464, 0.01
      %v481 = vmul.f32 %v465, 0.01
      %v482 = vmul.f32 %v466, 0.01
      %v483 = vmul.f32 %v467, 0.01
      %v484 = vsel %vm468, %v460, %v476
      %v485 = vsel %vm469, %v461, %v477
      %v486 = vsel %vm470, %v462, %v478
      %v487 = vsel %vm471, %v463, %v479
      %v488 = vsel %vm472, %v464, %v480
      %v489 = vsel %vm473, %v465, %v481
      %v490 = vsel %vm474, %v466, %v482
      %v491 = vsel %vm475, %v467, %v483
      %v492 = vpack.c.bf16 %v488, %v484
      %v493 = vpack.c.bf16 %v489, %v485
      %v494 = vpack.c.bf16 %v490, %v486
      %v495 = vpack.c.bf16 %v491, %v487
      %v496 = vld [vmem:[#allocation5] sm:$0xff]
      %v497 = vld [vmem:[#allocation5 + $0x8] sm:$0xff]
      %v498 = vld [vmem:[#allocation5 + $0x10] sm:$0xff]
      %v499 = vld [vmem:[#allocation5 + $0x18] sm:$0xff]
      %v500 = vld [vmem:[#allocation5 + $0x20] sm:$0xff]
      %v501 = vld [vmem:[#allocation5 + $0x28] sm:$0xff]
      %v502 = vld [vmem:[#allocation5 + $0x30] sm:$0xff]
      %v503 = vld [vmem:[#allocation5 + $0x38] sm:$0xff]
      %v504 = vld [vmem:[#allocation5 + $0x40] sm:$0xff]
      %v505 = vld [vmem:[#allocation5 + $0x48] sm:$0xff]
      %v506 = vld [vmem:[#allocation5 + $0x50] sm:$0xff]
      %v507 = vld [vmem:[#allocation5 + $0x58] sm:$0xff]
      %v508 = vld [vmem:[#allocation5 + $0x60] sm:$0xff]
      %v509 = vld [vmem:[#allocation5 + $0x68] sm:$0xff]
      %v510 = vld [vmem:[#allocation5 + $0x70] sm:$0xff]
      %v511 = vld [vmem:[#allocation5 + $0x78] sm:$0xff]
      %v512 = vld [vmem:[#allocation5 + $0x80] sm:$0xff]
      %v513 = vld [vmem:[#allocation5 + $0x88] sm:$0xff]
      %v514 = vld [vmem:[#allocation5 + $0x90] sm:$0xff]
      %v515 = vld [vmem:[#allocation5 + $0x98] sm:$0xff]
      %v516 = vld [vmem:[#allocation5 + $0xa0] sm:$0xff]
      %v517 = vld [vmem:[#allocation5 + $0xa8] sm:$0xff]
      %v518 = vld [vmem:[#allocation5 + $0xb0] sm:$0xff]
      %v519 = vld [vmem:[#allocation5 + $0xb8] sm:$0xff]
      %v520 = vld [vmem:[#allocation5 + $0xc0] sm:$0xff]
      %v521 = vld [vmem:[#allocation5 + $0xc8] sm:$0xff]
      %v522 = vld [vmem:[#allocation5 + $0xd0] sm:$0xff]
      %v523 = vld [vmem:[#allocation5 + $0xd8] sm:$0xff]
      %v524 = vld [vmem:[#allocation5 + $0xe0] sm:$0xff]
      %v525 = vld [vmem:[#allocation5 + $0xe8] sm:$0xff]
      %v526 = vld [vmem:[#allocation5 + $0xf0] sm:$0xff]
      %v527 = vld [vmem:[#allocation5 + $0xf8] sm:$0xff]
      %v528 = vld [vmem:[#allocation5 + $0x100] sm:$0xff]
      %v529 = vld [vmem:[#allocation5 + $0x108] sm:$0xff]
      %v530 = vld [vmem:[#allocation5 + $0x110] sm:$0xff]
      %v531 = vld [vmem:[#allocation5 + $0x118] sm:$0xff]
      %v532 = vld [vmem:[#allocation5 + $0x120] sm:$0xff]
      %v533 = vld [vmem:[#allocation5 + $0x128] sm:$0xff]
      %v534 = vld [vmem:[#allocation5 + $0x130] sm:$0xff]
      %v535 = vld [vmem:[#allocation5 + $0x138] sm:$0xff]
      %v536 = vld [vmem:[#allocation5 + $0x140] sm:$0xff]
      %v537 = vld [vmem:[#allocation5 + $0x148] sm:$0xff]
      %v538 = vld [vmem:[#allocation5 + $0x150] sm:$0xff]
      %v539 = vld [vmem:[#allocation5 + $0x158] sm:$0xff]
      %v540 = vld [vmem:[#allocation5 + $0x160] sm:$0xff]
      %v541 = vld [vmem:[#allocation5 + $0x168] sm:$0xff]
      %v542 = vld [vmem:[#allocation5 + $0x170] sm:$0xff]
      %v543 = vld [vmem:[#allocation5 + $0x178] sm:$0xff]
      %v544 = vld [vmem:[#allocation5 + $0x180] sm:$0xff]
      %v545 = vld [vmem:[#allocation5 + $0x188] sm:$0xff]
      %v546 = vld [vmem:[#allocation5 + $0x190] sm:$0xff]
      %v547 = vld [vmem:[#allocation5 + $0x198] sm:$0xff]
      %v548 = vld [vmem:[#allocation5 + $0x1a0] sm:$0xff]
      %v549 = vld [vmem:[#allocation5 + $0x1a8] sm:$0xff]
      %v550 = vld [vmem:[#allocation5 + $0x1b0] sm:$0xff]
      %v551 = vld [vmem:[#allocation5 + $0x1b8] sm:$0xff]
      %v552 = vld [vmem:[#allocation5 + $0x1c0] sm:$0xff]
      %v553 = vld [vmem:[#allocation5 + $0x1c8] sm:$0xff]
      %v554 = vld [vmem:[#allocation5 + $0x1d0] sm:$0xff]
      %v555 = vld [vmem:[#allocation5 + $0x1d8] sm:$0xff]
      %v556 = vld [vmem:[#allocation5 + $0x1e0] sm:$0xff]
      %v557 = vld [vmem:[#allocation5 + $0x1e8] sm:$0xff]
      %v558 = vld [vmem:[#allocation5 + $0x1f0] sm:$0xff]
      %v559 = vld [vmem:[#allocation5 + $0x1f8] sm:$0xff]
      %v560 = vld [vmem:[%s4] sm:$0x3]
      %v562 = vlaneseq
      %v563 = vshrl.u32 %v562, 7
      %v564 = vsub.s32 0, %v563
      %v565 = vrot.slane %v560, %v564
      %v566 = vlaneseq
      %v567 = vshrl.u32 %v566, 7
      %v568 = vsub.s32 1, %v567
      %v569 = vrot.slane %v560, %v568
      %v636 = vunpack.c.l.b16 %v496
      %v637 = vunpack.c.h.b16 %v496
      %v638 = vunpack.c.l.b16 %v497
      %v639 = vunpack.c.h.b16 %v497
      %v640 = vunpack.c.l.b16 %v498
      %v641 = vunpack.c.h.b16 %v498
      %v642 = vunpack.c.l.b16 %v499
      %v643 = vunpack.c.h.b16 %v499
      %v644 = vunpack.c.l.b16 %v500
      %v645 = vunpack.c.h.b16 %v500
      %v646 = vunpack.c.l.b16 %v501
      %v647 = vunpack.c.h.b16 %v501
      %v648 = vunpack.c.l.b16 %v502
      %v649 = vunpack.c.h.b16 %v502
      %v650 = vunpack.c.l.b16 %v503
      %v651 = vunpack.c.h.b16 %v503
      %v652 = vunpack.c.l.b16 %v504
      %v653 = vunpack.c.h.b16 %v504
      %v654 = vunpack.c.l.b16 %v505
      %v655 = vunpack.c.h.b16 %v505
      %v656 = vunpack.c.l.b16 %v506
      %v657 = vunpack.c.h.b16 %v506
      %v658 = vunpack.c.l.b16 %v507
      %v659 = vunpack.c.h.b16 %v507
      %v660 = vunpack.c.l.b16 %v508
      %v661 = vunpack.c.h.b16 %v508
      %v662 = vunpack.c.l.b16 %v509
      %v663 = vunpack.c.h.b16 %v509
      %v664 = vunpack.c.l.b16 %v510
      %v665 = vunpack.c.h.b16 %v510
      %v666 = vunpack.c.l.b16 %v511
      %v667 = vunpack.c.h.b16 %v511
      %v668 = vunpack.c.l.b16 %v512
      %v669 = vunpack.c.h.b16 %v512
      %v670 = vunpack.c.l.b16 %v513
      %v671 = vunpack.c.h.b16 %v513
      %v672 = vunpack.c.l.b16 %v514
      %v673 = vunpack.c.h.b16 %v514
      %v674 = vunpack.c.l.b16 %v515
      %v675 = vunpack.c.h.b16 %v515
      %v676 = vunpack.c.l.b16 %v516
      %v677 = vunpack.c.h.b16 %v516
      %v678 = vunpack.c.l.b16 %v517
      %v679 = vunpack.c.h.b16 %v517
      %v680 = vunpack.c.l.b16 %v518
      %v681 = vunpack.c.h.b16 %v518
      %v682 = vunpack.c.l.b16 %v519
      %v683 = vunpack.c.h.b16 %v519
      %v684 = vunpack.c.l.b16 %v520
      %v685 = vunpack.c.h.b16 %v520
      %v686 = vunpack.c.l.b16 %v521
      %v687 = vunpack.c.h.b16 %v521
      %v688 = vunpack.c.l.b16 %v522
      %v689 = vunpack.c.h.b16 %v522
      %v690 = vunpack.c.l.b16 %v523
      %v691 = vunpack.c.h.b16 %v523
      %v692 = vunpack.c.l.b16 %v524
      %v693 = vunpack.c.h.b16 %v524
      %v694 = vunpack.c.l.b16 %v525
      %v695 = vunpack.c.h.b16 %v525
      %v696 = vunpack.c.l.b16 %v526
      %v697 = vunpack.c.h.b16 %v526
      %v698 = vunpack.c.l.b16 %v527
      %v699 = vunpack.c.h.b16 %v527
      %v700 = vunpack.c.l.b16 %v528
      %v701 = vunpack.c.h.b16 %v528
      %v702 = vunpack.c.l.b16 %v529
      %v703 = vunpack.c.h.b16 %v529
      %v704 = vunpack.c.l.b16 %v530
      %v705 = vunpack.c.h.b16 %v530
      %v706 = vunpack.c.l.b16 %v531
      %v707 = vunpack.c.h.b16 %v531
      %v708 = vunpack.c.l.b16 %v532
      %v709 = vunpack.c.h.b16 %v532
      %v710 = vunpack.c.l.b16 %v533
      %v711 = vunpack.c.h.b16 %v533
      %v712 = vunpack.c.l.b16 %v534
      %v713 = vunpack.c.h.b16 %v534
      %v714 = vunpack.c.l.b16 %v535
      %v715 = vunpack.c.h.b16 %v535
      %v716 = vunpack.c.l.b16 %v536
      %v717 = vunpack.c.h.b16 %v536
      %v718 = vunpack.c.l.b16 %v537
      %v719 = vunpack.c.h.b16 %v537
      %v720 = vunpack.c.l.b16 %v538
      %v721 = vunpack.c.h.b16 %v538
      %v722 = vunpack.c.l.b16 %v539
      %v723 = vunpack.c.h.b16 %v539
      %v724 = vunpack.c.l.b16 %v540
      %v725 = vunpack.c.h.b16 %v540
      %v726 = vunpack.c.l.b16 %v541
      %v727 = vunpack.c.h.b16 %v541
      %v728 = vunpack.c.l.b16 %v542
      %v729 = vunpack.c.h.b16 %v542
      %v730 = vunpack.c.l.b16 %v543
      %v731 = vunpack.c.h.b16 %v543
      %v732 = vunpack.c.l.b16 %v544
      %v733 = vunpack.c.h.b16 %v544
      %v734 = vunpack.c.l.b16 %v545
      %v735 = vunpack.c.h.b16 %v545
      %v736 = vunpack.c.l.b16 %v546
      %v737 = vunpack.c.h.b16 %v546
      %v738 = vunpack.c.l.b16 %v547
      %v739 = vunpack.c.h.b16 %v547
      %v740 = vunpack.c.l.b16 %v548
      %v741 = vunpack.c.h.b16 %v548
      %v742 = vunpack.c.l.b16 %v549
      %v743 = vunpack.c.h.b16 %v549
      %v744 = vunpack.c.l.b16 %v550
      %v745 = vunpack.c.h.b16 %v550
      %v746 = vunpack.c.l.b16 %v551
      %v747 = vunpack.c.h.b16 %v551
      %v748 = vunpack.c.l.b16 %v552
      %v749 = vunpack.c.h.b16 %v552
      %v750 = vunpack.c.l.b16 %v553
      %v751 = vunpack.c.h.b16 %v553
      %v752 = vunpack.c.l.b16 %v554
      %v753 = vunpack.c.h.b16 %v554
      %v754 = vunpack.c.l.b16 %v555
      %v755 = vunpack.c.h.b16 %v555
      %v756 = vunpack.c.l.b16 %v556
      %v757 = vunpack.c.h.b16 %v556
      %v758 = vunpack.c.l.b16 %v557
      %v759 = vunpack.c.h.b16 %v557
      %v760 = vunpack.c.l.b16 %v558
      %v761 = vunpack.c.h.b16 %v558
      %v762 = vunpack.c.l.b16 %v559
      %v763 = vunpack.c.h.b16 %v559
      %v764 = vpack.c.b16 %v638, %v636
      %v765 = vpack.c.b16 %v639, %v637
      %v766 = vpack.c.b16 %v642, %v640
      %v767 = vpack.c.b16 %v643, %v641
      %v768 = vpack.c.b16 %v646, %v644
      %v769 = vpack.c.b16 %v647, %v645
      %v770 = vpack.c.b16 %v650, %v648
      %v771 = vpack.c.b16 %v651, %v649
      %v772 = vpack.c.b16 %v654, %v652
      %v773 = vpack.c.b16 %v655, %v653
      %v774 = vpack.c.b16 %v658, %v656
      %v775 = vpack.c.b16 %v659, %v657
      %v776 = vpack.c.b16 %v662, %v660
      %v777 = vpack.c.b16 %v663, %v661
      %v778 = vpack.c.b16 %v666, %v664
      %v779 = vpack.c.b16 %v667, %v665
      %v780 = vpack.c.b16 %v670, %v668
      %v781 = vpack.c.b16 %v671, %v669
      %v782 = vpack.c.b16 %v674, %v672
      %v783 = vpack.c.b16 %v675, %v673
      %v784 = vpack.c.b16 %v678, %v676
      %v785 = vpack.c.b16 %v679, %v677
      %v786 = vpack.c.b16 %v682, %v680
      %v787 = vpack.c.b16 %v683, %v681
      %v788 = vpack.c.b16 %v686, %v684
      %v789 = vpack.c.b16 %v687, %v685
      %v790 = vpack.c.b16 %v690, %v688
      %v791 = vpack.c.b16 %v691, %v689
      %v792 = vpack.c.b16 %v694, %v692
      %v793 = vpack.c.b16 %v695, %v693
      %v794 = vpack.c.b16 %v698, %v696
      %v795 = vpack.c.b16 %v699, %v697
      %v796 = vpack.c.b16 %v702, %v700
      %v797 = vpack.c.b16 %v703, %v701
      %v798 = vpack.c.b16 %v706, %v704
      %v799 = vpack.c.b16 %v707, %v705
      %v800 = vpack.c.b16 %v710, %v708
      %v801 = vpack.c.b16 %v711, %v709
      %v802 = vpack.c.b16 %v714, %v712
      %v803 = vpack.c.b16 %v715, %v713
      %v804 = vpack.c.b16 %v718, %v716
      %v805 = vpack.c.b16 %v719, %v717
      %v806 = vpack.c.b16 %v722, %v720
      %v807 = vpack.c.b16 %v723, %v721
      %v808 = vpack.c.b16 %v726, %v724
      %v809 = vpack.c.b16 %v727, %v725
      %v810 = vpack.c.b16 %v730, %v728
      %v811 = vpack.c.b16 %v731, %v729
      %v812 = vpack.c.b16 %v734, %v732
      %v813 = vpack.c.b16 %v735, %v733
      %v814 = vpack.c.b16 %v738, %v736
      %v815 = vpack.c.b16 %v739, %v737
      %v816 = vpack.c.b16 %v742, %v740
      %v817 = vpack.c.b16 %v743, %v741
      %v818 = vpack.c.b16 %v746, %v744
      %v819 = vpack.c.b16 %v747, %v745
      %v820 = vpack.c.b16 %v750, %v748
      %v821 = vpack.c.b16 %v751, %v749
      %v822 = vpack.c.b16 %v754, %v752
      %v823 = vpack.c.b16 %v755, %v753
      %v824 = vpack.c.b16 %v758, %v756
      %v825 = vpack.c.b16 %v759, %v757
      %v826 = vpack.c.b16 %v762, %v760
      %v827 = vpack.c.b16 %v763, %v761
      %892 = vmatprep.subr.bf16.mxu0 %v779
      %893 = vmatpush1.bf16.msra.mxu0 %v778
      %894 = vmatprep.subr.bf16.mxu0 %v777
      %895 = vmatpush1.bf16.msra.mxu0 %v776
      %896 = vmatprep.subr.bf16.mxu0 %v775
      %897 = vmatpush1.bf16.msra.mxu0 %v774
      %898 = vmatprep.subr.bf16.mxu0 %v773
      %899 = vmatpush1.bf16.msra.mxu0 %v772
      %900 = vmatprep.subr.bf16.mxu0 %v771
      %901 = vmatpush1.bf16.msra.mxu0 %v770
      %902 = vmatprep.subr.bf16.mxu0 %v769
      %903 = vmatpush1.bf16.msra.mxu0 %v768
      %904 = vmatprep.subr.bf16.mxu0 %v767
      %905 = vmatpush1.bf16.msra.mxu0 %v766
      %906 = vmatprep.subr.bf16.mxu0 %v765
      %907 = vmatpush1.bf16.msra.mxu0 %v764
      %908 = vmatprep.subr.bf16.mxu0 %v795
      %909 = vmatpush2.bf16.msra.mxu0 %v794
      %910 = vmatprep.subr.bf16.mxu0 %v793
      %911 = vmatpush2.bf16.msra.mxu0 %v792
      %912 = vmatprep.subr.bf16.mxu0 %v791
      %913 = vmatpush2.bf16.msra.mxu0 %v790
      %914 = vmatprep.subr.bf16.mxu0 %v789
      %915 = vmatpush2.bf16.msra.mxu0 %v788
      %916 = vmatprep.subr.bf16.mxu0 %v787
      %917 = vmatpush2.bf16.msra.mxu0 %v786
      %918 = vmatprep.subr.bf16.mxu0 %v785
      %919 = vmatpush2.bf16.msra.mxu0 %v784
      %920 = vmatprep.subr.bf16.mxu0 %v783
      %921 = vmatpush2.bf16.msra.mxu0 %v782
      %922 = vmatprep.subr.bf16.mxu0 %v781
      %923 = vmatpush2.bf16.msra.mxu0 %v780
      %924 = vmatprep.mubr.bf16.mxu0 %v493
      %925 = vmatmul.mubr.bf16.gmra.mxu0 %v492
      %v926 = vpop.f32.mrf.mxu0
      %v927 = vadd.f32 %v565, %v926
      %v928 = vpop.f32.mrf.mxu0
      %v929 = vadd.f32 %v569, %v928
      %v930 = vpop.f32.mrf.mxu0
      %v931 = vadd.f32 %v565, %v930
      %v932 = vpop.f32.mrf.mxu0
      %v933 = vadd.f32 %v569, %v932
      %934 = vdwg.mxu0
      %935 = vmatprep.subr.bf16.mxu0 %v811
      %936 = vmatpush1.bf16.msra.mxu0 %v810
      %937 = vmatprep.subr.bf16.mxu0 %v809
      %938 = vmatpush1.bf16.msra.mxu0 %v808
      %939 = vmatprep.subr.bf16.mxu0 %v807
      %940 = vmatpush1.bf16.msra.mxu0 %v806
      %941 = vmatprep.subr.bf16.mxu0 %v805
      %942 = vmatpush1.bf16.msra.mxu0 %v804
      %943 = vmatprep.subr.bf16.mxu0 %v803
      %944 = vmatpush1.bf16.msra.mxu0 %v802
      %945 = vmatprep.subr.bf16.mxu0 %v801
      %946 = vmatpush1.bf16.msra.mxu0 %v800
      %947 = vmatprep.subr.bf16.mxu0 %v799
      %948 = vmatpush1.bf16.msra.mxu0 %v798
      %949 = vmatprep.subr.bf16.mxu0 %v797
      %950 = vmatpush1.bf16.msra.mxu0 %v796
      %951 = vmatprep.subr.bf16.mxu0 %v827
      %952 = vmatpush2.bf16.msra.mxu0 %v826
      %953 = vmatprep.subr.bf16.mxu0 %v825
      %954 = vmatpush2.bf16.msra.mxu0 %v824
      %955 = vmatprep.subr.bf16.mxu0 %v823
      %956 = vmatpush2.bf16.msra.mxu0 %v822
      %957 = vmatprep.subr.bf16.mxu0 %v821
      %958 = vmatpush2.bf16.msra.mxu0 %v820
      %959 = vmatprep.subr.bf16.mxu0 %v819
      %960 = vmatpush2.bf16.msra.mxu0 %v818
      %961 = vmatprep.subr.bf16.mxu0 %v817
      %962 = vmatpush2.bf16.msra.mxu0 %v816
      %963 = vmatprep.subr.bf16.mxu0 %v815
      %964 = vmatpush2.bf16.msra.mxu0 %v814
      %965 = vmatprep.subr.bf16.mxu0 %v813
      %966 = vmatpush2.bf16.msra.mxu0 %v812
      %967 = vmatprep.mubr.bf16.mxu0 %v495
      %968 = vmatmul.mubr.bf16.gmra.mxu0 %v494
      %v969 = vpop.f32.mrf.mxu0
      %v970 = vadd.f32 %v927, %v969
      %v971 = vpop.f32.mrf.mxu0
      %v972 = vadd.f32 %v929, %v971
      %v973 = vpop.f32.mrf.mxu0
      %v974 = vadd.f32 %v931, %v973
      %v975 = vpop.f32.mrf.mxu0
      %v976 = vadd.f32 %v933, %v975
      %977 = vdwg.mxu0
      %vm978 = vcmp.gt.f32.partialorder %v970, 0.0
      %vm979 = vcmp.gt.f32.partialorder %v972, 0.0
      %vm980 = vcmp.gt.f32.partialorder %v974, 0.0
      %vm981 = vcmp.gt.f32.partialorder %v976, 0.0
      %v982 = vmul.f32 %v970, 0.01
      %v983 = vmul.f32 %v972, 0.01
      %v984 = vmul.f32 %v974, 0.01
      %v985 = vmul.f32 %v976, 0.01
      %v986 = vsel %vm978, %v970, %v982
      %v987 = vsel %vm979, %v972, %v983
      %v988 = vsel %vm980, %v974, %v984
      %v989 = vsel %vm981, %v976, %v985
      %v990 = vpack.c.bf16 %v988, %v986
      %v991 = vpack.c.bf16 %v989, %v987
      %v992 = vld [vmem:[#allocation7] sm:$0xff]
      %v993 = vld [vmem:[#allocation7 + $0x8] sm:$0xff]
      %v994 = vld [vmem:[#allocation7 + $0x10] sm:$0xff]
      %v995 = vld [vmem:[#allocation7 + $0x18] sm:$0xff]
      %v996 = vld [vmem:[#allocation7 + $0x20] sm:$0xff]
      %v997 = vld [vmem:[#allocation7 + $0x28] sm:$0xff]
      %v998 = vld [vmem:[#allocation7 + $0x30] sm:$0xff]
      %v999 = vld [vmem:[#allocation7 + $0x38] sm:$0xff]
      %v1000 = vld [vmem:[#allocation7 + $0x40] sm:$0xff]
      %v1001 = vld [vmem:[#allocation7 + $0x48] sm:$0xff]
      %v1002 = vld [vmem:[#allocation7 + $0x50] sm:$0xff]
      %v1003 = vld [vmem:[#allocation7 + $0x58] sm:$0xff]
      %v1004 = vld [vmem:[#allocation7 + $0x60] sm:$0xff]
      %v1005 = vld [vmem:[#allocation7 + $0x68] sm:$0xff]
      %v1006 = vld [vmem:[#allocation7 + $0x70] sm:$0xff]
      %v1007 = vld [vmem:[#allocation7 + $0x78] sm:$0xff]
      %v1008 = vld [vmem:[#allocation7 + $0x80] sm:$0xff]
      %v1009 = vld [vmem:[#allocation7 + $0x88] sm:$0xff]
      %v1010 = vld [vmem:[#allocation7 + $0x90] sm:$0xff]
      %v1011 = vld [vmem:[#allocation7 + $0x98] sm:$0xff]
      %v1012 = vld [vmem:[#allocation7 + $0xa0] sm:$0xff]
      %v1013 = vld [vmem:[#allocation7 + $0xa8] sm:$0xff]
      %v1014 = vld [vmem:[#allocation7 + $0xb0] sm:$0xff]
      %v1015 = vld [vmem:[#allocation7 + $0xb8] sm:$0xff]
      %v1016 = vld [vmem:[#allocation7 + $0xc0] sm:$0xff]
      %v1017 = vld [vmem:[#allocation7 + $0xc8] sm:$0xff]
      %v1018 = vld [vmem:[#allocation7 + $0xd0] sm:$0xff]
      %v1019 = vld [vmem:[#allocation7 + $0xd8] sm:$0xff]
      %v1020 = vld [vmem:[#allocation7 + $0xe0] sm:$0xff]
      %v1021 = vld [vmem:[#allocation7 + $0xe8] sm:$0xff]
      %v1022 = vld [vmem:[#allocation7 + $0xf0] sm:$0xff]
      %v1023 = vld [vmem:[#allocation7 + $0xf8] sm:$0xff]
      %v1024 = vld [vmem:[#allocation7 + $0x100] sm:$0xff]
      %v1025 = vld [vmem:[#allocation7 + $0x108] sm:$0xff]
      %v1026 = vld [vmem:[#allocation7 + $0x110] sm:$0xff]
      %v1027 = vld [vmem:[#allocation7 + $0x118] sm:$0xff]
      %v1028 = vld [vmem:[#allocation7 + $0x120] sm:$0xff]
      %v1029 = vld [vmem:[#allocation7 + $0x128] sm:$0xff]
      %v1030 = vld [vmem:[#allocation7 + $0x130] sm:$0xff]
      %v1031 = vld [vmem:[#allocation7 + $0x138] sm:$0xff]
      %v1032 = vld [vmem:[#allocation7 + $0x140] sm:$0xff]
      %v1033 = vld [vmem:[#allocation7 + $0x148] sm:$0xff]
      %v1034 = vld [vmem:[#allocation7 + $0x150] sm:$0xff]
      %v1035 = vld [vmem:[#allocation7 + $0x158] sm:$0xff]
      %v1036 = vld [vmem:[#allocation7 + $0x160] sm:$0xff]
      %v1037 = vld [vmem:[#allocation7 + $0x168] sm:$0xff]
      %v1038 = vld [vmem:[#allocation7 + $0x170] sm:$0xff]
      %v1039 = vld [vmem:[#allocation7 + $0x178] sm:$0xff]
      %v1040 = vld [vmem:[#allocation7 + $0x180] sm:$0xff]
      %v1041 = vld [vmem:[#allocation7 + $0x188] sm:$0xff]
      %v1042 = vld [vmem:[#allocation7 + $0x190] sm:$0xff]
      %v1043 = vld [vmem:[#allocation7 + $0x198] sm:$0xff]
      %v1044 = vld [vmem:[#allocation7 + $0x1a0] sm:$0xff]
      %v1045 = vld [vmem:[#allocation7 + $0x1a8] sm:$0xff]
      %v1046 = vld [vmem:[#allocation7 + $0x1b0] sm:$0xff]
      %v1047 = vld [vmem:[#allocation7 + $0x1b8] sm:$0xff]
      %v1048 = vld [vmem:[#allocation7 + $0x1c0] sm:$0xff]
      %v1049 = vld [vmem:[#allocation7 + $0x1c8] sm:$0xff]
      %v1050 = vld [vmem:[#allocation7 + $0x1d0] sm:$0xff]
      %v1051 = vld [vmem:[#allocation7 + $0x1d8] sm:$0xff]
      %v1052 = vld [vmem:[#allocation7 + $0x1e0] sm:$0xff]
      %v1053 = vld [vmem:[#allocation7 + $0x1e8] sm:$0xff]
      %v1054 = vld [vmem:[#allocation7 + $0x1f0] sm:$0xff]
      %v1055 = vld [vmem:[#allocation7 + $0x1f8] sm:$0xff]
      %v1056 = vld [vmem:[%s6] sm:$0xf]
      %v1058 = vlaneseq
      %v1059 = vshrl.u32 %v1058, 7
      %v1060 = vsub.s32 0, %v1059
      %v1061 = vrot.slane %v1056, %v1060
      %v1062 = vlaneseq
      %v1063 = vshrl.u32 %v1062, 7
      %v1064 = vsub.s32 1, %v1063
      %v1065 = vrot.slane %v1056, %v1064
      %v1066 = vlaneseq
      %v1067 = vshrl.u32 %v1066, 7
      %v1068 = vsub.s32 2, %v1067
      %v1069 = vrot.slane %v1056, %v1068
      %v1070 = vlaneseq
      %v1071 = vshrl.u32 %v1070, 7
      %v1072 = vsub.s32 3, %v1071
      %v1073 = vrot.slane %v1056, %v1072
      %v1142 = vunpack.c.l.b16 %v992
      %v1143 = vunpack.c.h.b16 %v992
      %v1144 = vunpack.c.l.b16 %v993
      %v1145 = vunpack.c.h.b16 %v993
      %v1146 = vunpack.c.l.b16 %v994
      %v1147 = vunpack.c.h.b16 %v994
      %v1148 = vunpack.c.l.b16 %v995
      %v1149 = vunpack.c.h.b16 %v995
      %v1150 = vunpack.c.l.b16 %v996
      %v1151 = vunpack.c.h.b16 %v996
      %v1152 = vunpack.c.l.b16 %v997
      %v1153 = vunpack.c.h.b16 %v997
      %v1154 = vunpack.c.l.b16 %v998
      %v1155 = vunpack.c.h.b16 %v998
      %v1156 = vunpack.c.l.b16 %v999
      %v1157 = vunpack.c.h.b16 %v999
      %v1158 = vunpack.c.l.b16 %v1000
      %v1159 = vunpack.c.h.b16 %v1000
      %v1160 = vunpack.c.l.b16 %v1001
      %v1161 = vunpack.c.h.b16 %v1001
      %v1162 = vunpack.c.l.b16 %v1002
      %v1163 = vunpack.c.h.b16 %v1002
      %v1164 = vunpack.c.l.b16 %v1003
      %v1165 = vunpack.c.h.b16 %v1003
      %v1166 = vunpack.c.l.b16 %v1004
      %v1167 = vunpack.c.h.b16 %v1004
      %v1168 = vunpack.c.l.b16 %v1005
      %v1169 = vunpack.c.h.b16 %v1005
      %v1170 = vunpack.c.l.b16 %v1006
      %v1171 = vunpack.c.h.b16 %v1006
      %v1172 = vunpack.c.l.b16 %v1007
      %v1173 = vunpack.c.h.b16 %v1007
      %v1174 = vunpack.c.l.b16 %v1008
      %v1175 = vunpack.c.h.b16 %v1008
      %v1176 = vunpack.c.l.b16 %v1009
      %v1177 = vunpack.c.h.b16 %v1009
      %v1178 = vunpack.c.l.b16 %v1010
      %v1179 = vunpack.c.h.b16 %v1010
      %v1180 = vunpack.c.l.b16 %v1011
      %v1181 = vunpack.c.h.b16 %v1011
      %v1182 = vunpack.c.l.b16 %v1012
      %v1183 = vunpack.c.h.b16 %v1012
      %v1184 = vunpack.c.l.b16 %v1013
      %v1185 = vunpack.c.h.b16 %v1013
      %v1186 = vunpack.c.l.b16 %v1014
      %v1187 = vunpack.c.h.b16 %v1014
      %v1188 = vunpack.c.l.b16 %v1015
      %v1189 = vunpack.c.h.b16 %v1015
      %v1190 = vunpack.c.l.b16 %v1016
      %v1191 = vunpack.c.h.b16 %v1016
      %v1192 = vunpack.c.l.b16 %v1017
      %v1193 = vunpack.c.h.b16 %v1017
      %v1194 = vunpack.c.l.b16 %v1018
      %v1195 = vunpack.c.h.b16 %v1018
      %v1196 = vunpack.c.l.b16 %v1019
      %v1197 = vunpack.c.h.b16 %v1019
      %v1198 = vunpack.c.l.b16 %v1020
      %v1199 = vunpack.c.h.b16 %v1020
      %v1200 = vunpack.c.l.b16 %v1021
      %v1201 = vunpack.c.h.b16 %v1021
      %v1202 = vunpack.c.l.b16 %v1022
      %v1203 = vunpack.c.h.b16 %v1022
      %v1204 = vunpack.c.l.b16 %v1023
      %v1205 = vunpack.c.h.b16 %v1023
      %v1206 = vunpack.c.l.b16 %v1024
      %v1207 = vunpack.c.h.b16 %v1024
      %v1208 = vunpack.c.l.b16 %v1025
      %v1209 = vunpack.c.h.b16 %v1025
      %v1210 = vunpack.c.l.b16 %v1026
      %v1211 = vunpack.c.h.b16 %v1026
      %v1212 = vunpack.c.l.b16 %v1027
      %v1213 = vunpack.c.h.b16 %v1027
      %v1214 = vunpack.c.l.b16 %v1028
      %v1215 = vunpack.c.h.b16 %v1028
      %v1216 = vunpack.c.l.b16 %v1029
      %v1217 = vunpack.c.h.b16 %v1029
      %v1218 = vunpack.c.l.b16 %v1030
      %v1219 = vunpack.c.h.b16 %v1030
      %v1220 = vunpack.c.l.b16 %v1031
      %v1221 = vunpack.c.h.b16 %v1031
      %v1222 = vunpack.c.l.b16 %v1032
      %v1223 = vunpack.c.h.b16 %v1032
      %v1224 = vunpack.c.l.b16 %v1033
      %v1225 = vunpack.c.h.b16 %v1033
      %v1226 = vunpack.c.l.b16 %v1034
      %v1227 = vunpack.c.h.b16 %v1034
      %v1228 = vunpack.c.l.b16 %v1035
      %v1229 = vunpack.c.h.b16 %v1035
      %v1230 = vunpack.c.l.b16 %v1036
      %v1231 = vunpack.c.h.b16 %v1036
      %v1232 = vunpack.c.l.b16 %v1037
      %v1233 = vunpack.c.h.b16 %v1037
      %v1234 = vunpack.c.l.b16 %v1038
      %v1235 = vunpack.c.h.b16 %v1038
      %v1236 = vunpack.c.l.b16 %v1039
      %v1237 = vunpack.c.h.b16 %v1039
      %v1238 = vunpack.c.l.b16 %v1040
      %v1239 = vunpack.c.h.b16 %v1040
      %v1240 = vunpack.c.l.b16 %v1041
      %v1241 = vunpack.c.h.b16 %v1041
      %v1242 = vunpack.c.l.b16 %v1042
      %v1243 = vunpack.c.h.b16 %v1042
      %v1244 = vunpack.c.l.b16 %v1043
      %v1245 = vunpack.c.h.b16 %v1043
      %v1246 = vunpack.c.l.b16 %v1044
      %v1247 = vunpack.c.h.b16 %v1044
      %v1248 = vunpack.c.l.b16 %v1045
      %v1249 = vunpack.c.h.b16 %v1045
      %v1250 = vunpack.c.l.b16 %v1046
      %v1251 = vunpack.c.h.b16 %v1046
      %v1252 = vunpack.c.l.b16 %v1047
      %v1253 = vunpack.c.h.b16 %v1047
      %v1254 = vunpack.c.l.b16 %v1048
      %v1255 = vunpack.c.h.b16 %v1048
      %v1256 = vunpack.c.l.b16 %v1049
      %v1257 = vunpack.c.h.b16 %v1049
      %v1258 = vunpack.c.l.b16 %v1050
      %v1259 = vunpack.c.h.b16 %v1050
      %v1260 = vunpack.c.l.b16 %v1051
      %v1261 = vunpack.c.h.b16 %v1051
      %v1262 = vunpack.c.l.b16 %v1052
      %v1263 = vunpack.c.h.b16 %v1052
      %v1264 = vunpack.c.l.b16 %v1053
      %v1265 = vunpack.c.h.b16 %v1053
      %v1266 = vunpack.c.l.b16 %v1054
      %v1267 = vunpack.c.h.b16 %v1054
      %v1268 = vunpack.c.l.b16 %v1055
      %v1269 = vunpack.c.h.b16 %v1055
      %v1270 = vpack.c.b16 %v1146, %v1142
      %v1271 = vpack.c.b16 %v1147, %v1143
      %v1272 = vpack.c.b16 %v1148, %v1144
      %v1273 = vpack.c.b16 %v1149, %v1145
      %v1274 = vpack.c.b16 %v1154, %v1150
      %v1275 = vpack.c.b16 %v1155, %v1151
      %v1276 = vpack.c.b16 %v1156, %v1152
      %v1277 = vpack.c.b16 %v1157, %v1153
      %v1278 = vpack.c.b16 %v1162, %v1158
      %v1279 = vpack.c.b16 %v1163, %v1159
      %v1280 = vpack.c.b16 %v1164, %v1160
      %v1281 = vpack.c.b16 %v1165, %v1161
      %v1282 = vpack.c.b16 %v1170, %v1166
      %v1283 = vpack.c.b16 %v1171, %v1167
      %v1284 = vpack.c.b16 %v1172, %v1168
      %v1285 = vpack.c.b16 %v1173, %v1169
      %v1286 = vpack.c.b16 %v1178, %v1174
      %v1287 = vpack.c.b16 %v1179, %v1175
      %v1288 = vpack.c.b16 %v1180, %v1176
      %v1289 = vpack.c.b16 %v1181, %v1177
      %v1290 = vpack.c.b16 %v1186, %v1182
      %v1291 = vpack.c.b16 %v1187, %v1183
      %v1292 = vpack.c.b16 %v1188, %v1184
      %v1293 = vpack.c.b16 %v1189, %v1185
      %v1294 = vpack.c.b16 %v1194, %v1190
      %v1295 = vpack.c.b16 %v1195, %v1191
      %v1296 = vpack.c.b16 %v1196, %v1192
      %v1297 = vpack.c.b16 %v1197, %v1193
      %v1298 = vpack.c.b16 %v1202, %v1198
      %v1299 = vpack.c.b16 %v1203, %v1199
      %v1300 = vpack.c.b16 %v1204, %v1200
      %v1301 = vpack.c.b16 %v1205, %v1201
      %v1302 = vpack.c.b16 %v1210, %v1206
      %v1303 = vpack.c.b16 %v1211, %v1207
      %v1304 = vpack.c.b16 %v1212, %v1208
      %v1305 = vpack.c.b16 %v1213, %v1209
      %v1306 = vpack.c.b16 %v1218, %v1214
      %v1307 = vpack.c.b16 %v1219, %v1215
      %v1308 = vpack.c.b16 %v1220, %v1216
      %v1309 = vpack.c.b16 %v1221, %v1217
      %v1310 = vpack.c.b16 %v1226, %v1222
      %v1311 = vpack.c.b16 %v1227, %v1223
      %v1312 = vpack.c.b16 %v1228, %v1224
      %v1313 = vpack.c.b16 %v1229, %v1225
      %v1314 = vpack.c.b16 %v1234, %v1230
      %v1315 = vpack.c.b16 %v1235, %v1231
      %v1316 = vpack.c.b16 %v1236, %v1232
      %v1317 = vpack.c.b16 %v1237, %v1233
      %v1318 = vpack.c.b16 %v1242, %v1238
      %v1319 = vpack.c.b16 %v1243, %v1239
      %v1320 = vpack.c.b16 %v1244, %v1240
      %v1321 = vpack.c.b16 %v1245, %v1241
      %v1322 = vpack.c.b16 %v1250, %v1246
      %v1323 = vpack.c.b16 %v1251, %v1247
      %v1324 = vpack.c.b16 %v1252, %v1248
      %v1325 = vpack.c.b16 %v1253, %v1249
      %v1326 = vpack.c.b16 %v1258, %v1254
      %v1327 = vpack.c.b16 %v1259, %v1255
      %v1328 = vpack.c.b16 %v1260, %v1256
      %v1329 = vpack.c.b16 %v1261, %v1257
      %v1330 = vpack.c.b16 %v1266, %v1262
      %v1331 = vpack.c.b16 %v1267, %v1263
      %v1332 = vpack.c.b16 %v1268, %v1264
      %v1333 = vpack.c.b16 %v1269, %v1265
      %1398 = vmatprep.subr.bf16.mxu0 %v1299
      %1399 = vmatpush1.bf16.msra.mxu0 %v1298
      %1400 = vmatprep.subr.bf16.mxu0 %v1295
      %1401 = vmatpush1.bf16.msra.mxu0 %v1294
      %1402 = vmatprep.subr.bf16.mxu0 %v1291
      %1403 = vmatpush1.bf16.msra.mxu0 %v1290
      %1404 = vmatprep.subr.bf16.mxu0 %v1287
      %1405 = vmatpush1.bf16.msra.mxu0 %v1286
      %1406 = vmatprep.subr.bf16.mxu0 %v1283
      %1407 = vmatpush1.bf16.msra.mxu0 %v1282
      %1408 = vmatprep.subr.bf16.mxu0 %v1279
      %1409 = vmatpush1.bf16.msra.mxu0 %v1278
      %1410 = vmatprep.subr.bf16.mxu0 %v1275
      %1411 = vmatpush1.bf16.msra.mxu0 %v1274
      %1412 = vmatprep.subr.bf16.mxu0 %v1271
      %1413 = vmatpush1.bf16.msra.mxu0 %v1270
      %1414 = vmatprep.subr.bf16.mxu0 %v1331
      %1415 = vmatpush2.bf16.msra.mxu0 %v1330
      %1416 = vmatprep.subr.bf16.mxu0 %v1327
      %1417 = vmatpush2.bf16.msra.mxu0 %v1326
      %1418 = vmatprep.subr.bf16.mxu0 %v1323
      %1419 = vmatpush2.bf16.msra.mxu0 %v1322
      %1420 = vmatprep.subr.bf16.mxu0 %v1319
      %1421 = vmatpush2.bf16.msra.mxu0 %v1318
      %1422 = vmatprep.subr.bf16.mxu0 %v1315
      %1423 = vmatpush2.bf16.msra.mxu0 %v1314
      %1424 = vmatprep.subr.bf16.mxu0 %v1311
      %1425 = vmatpush2.bf16.msra.mxu0 %v1310
      %1426 = vmatprep.subr.bf16.mxu0 %v1307
      %1427 = vmatpush2.bf16.msra.mxu0 %v1306
      %1428 = vmatprep.subr.bf16.mxu0 %v1303
      %1429 = vmatpush2.bf16.msra.mxu0 %v1302
      %1430 = vmatprep.mubr.bf16.mxu0 %v991
      %1431 = vmatmul.mubr.bf16.gmra.mxu0 %v990
      %v1432 = vpop.f32.mrf.mxu0
      %v1433 = vadd.f32 %v1061, %v1432
      %v1434 = vpop.f32.mrf.mxu0
      %v1435 = vadd.f32 %v1065, %v1434
      %v1436 = vpop.f32.mrf.mxu0
      %v1437 = vadd.f32 %v1061, %v1436
      %v1438 = vpop.f32.mrf.mxu0
      %v1439 = vadd.f32 %v1065, %v1438
      %1440 = vdwg.mxu0
      %1441 = vmatprep.subr.bf16.mxu0 %v1301
      %1442 = vmatpush1.bf16.msra.mxu0 %v1300
      %1443 = vmatprep.subr.bf16.mxu0 %v1297
      %1444 = vmatpush1.bf16.msra.mxu0 %v1296
      %1445 = vmatprep.subr.bf16.mxu0 %v1293
      %1446 = vmatpush1.bf16.msra.mxu0 %v1292
      %1447 = vmatprep.subr.bf16.mxu0 %v1289
      %1448 = vmatpush1.bf16.msra.mxu0 %v1288
      %1449 = vmatprep.subr.bf16.mxu0 %v1285
      %1450 = vmatpush1.bf16.msra.mxu0 %v1284
      %1451 = vmatprep.subr.bf16.mxu0 %v1281
      %1452 = vmatpush1.bf16.msra.mxu0 %v1280
      %1453 = vmatprep.subr.bf16.mxu0 %v1277
      %1454 = vmatpush1.bf16.msra.mxu0 %v1276
      %1455 = vmatprep.subr.bf16.mxu0 %v1273
      %1456 = vmatpush1.bf16.msra.mxu0 %v1272
      %1457 = vmatprep.subr.bf16.mxu0 %v1333
      %1458 = vmatpush2.bf16.msra.mxu0 %v1332
      %1459 = vmatprep.subr.bf16.mxu0 %v1329
      %1460 = vmatpush2.bf16.msra.mxu0 %v1328
      %1461 = vmatprep.subr.bf16.mxu0 %v1325
      %1462 = vmatpush2.bf16.msra.mxu0 %v1324
      %1463 = vmatprep.subr.bf16.mxu0 %v1321
      %1464 = vmatpush2.bf16.msra.mxu0 %v1320
      %1465 = vmatprep.subr.bf16.mxu0 %v1317
      %1466 = vmatpush2.bf16.msra.mxu0 %v1316
      %1467 = vmatprep.subr.bf16.mxu0 %v1313
      %1468 = vmatpush2.bf16.msra.mxu0 %v1312
      %1469 = vmatprep.subr.bf16.mxu0 %v1309
      %1470 = vmatpush2.bf16.msra.mxu0 %v1308
      %1471 = vmatprep.subr.bf16.mxu0 %v1305
      %1472 = vmatpush2.bf16.msra.mxu0 %v1304
      %1473 = vmatprep.mubr.bf16.mxu0 %v991
      %1474 = vmatmul.mubr.bf16.gmra.mxu0 %v990
      %v1475 = vpop.f32.mrf.mxu0
      %v1476 = vadd.f32 %v1069, %v1475
      %v1477 = vpop.f32.mrf.mxu0
      %v1478 = vadd.f32 %v1073, %v1477
      %v1479 = vpop.f32.mrf.mxu0
      %v1480 = vadd.f32 %v1069, %v1479
      %v1481 = vpop.f32.mrf.mxu0
      %v1482 = vadd.f32 %v1073, %v1481
      %1483 = vdwg.mxu0
      %vm1484 = vcmp.gt.f32.partialorder %v1433, 0.0
      %vm1485 = vcmp.gt.f32.partialorder %v1435, 0.0
      %vm1486 = vcmp.gt.f32.partialorder %v1476, 0.0
      %vm1487 = vcmp.gt.f32.partialorder %v1478, 0.0
      %vm1488 = vcmp.gt.f32.partialorder %v1437, 0.0
      %vm1489 = vcmp.gt.f32.partialorder %v1439, 0.0
      %vm1490 = vcmp.gt.f32.partialorder %v1480, 0.0
      %vm1491 = vcmp.gt.f32.partialorder %v1482, 0.0
      %v1492 = vmul.f32 %v1433, 0.01
      %v1493 = vmul.f32 %v1435, 0.01
      %v1494 = vmul.f32 %v1476, 0.01
      %v1495 = vmul.f32 %v1478, 0.01
      %v1496 = vmul.f32 %v1437, 0.01
      %v1497 = vmul.f32 %v1439, 0.01
      %v1498 = vmul.f32 %v1480, 0.01
      %v1499 = vmul.f32 %v1482, 0.01
      %v1500 = vsel %vm1484, %v1433, %v1492
      %v1501 = vsel %vm1485, %v1435, %v1493
      %v1502 = vsel %vm1486, %v1476, %v1494
      %v1503 = vsel %vm1487, %v1478, %v1495
      %v1504 = vsel %vm1488, %v1437, %v1496
      %v1505 = vsel %vm1489, %v1439, %v1497
      %v1506 = vsel %vm1490, %v1480, %v1498
      %v1507 = vsel %vm1491, %v1482, %v1499
      %v1508 = vpack.c.bf16 %v1504, %v1500
      %v1509 = vpack.c.bf16 %v1505, %v1501
      %v1510 = vpack.c.bf16 %v1506, %v1502
      %v1511 = vpack.c.bf16 %v1507, %v1503
      %v1512 = vld [vmem:[#allocation8] sm:$0xff]
      %v1513 = vld [vmem:[#allocation8 + $0x8] sm:$0xff]
      %v1514 = vld [vmem:[#allocation8 + $0x10] sm:$0xff]
      %v1515 = vld [vmem:[#allocation8 + $0x18] sm:$0xff]
      %v1516 = vld [vmem:[#allocation8 + $0x20] sm:$0xff]
      %v1517 = vld [vmem:[#allocation8 + $0x28] sm:$0xff]
      %v1518 = vld [vmem:[#allocation8 + $0x30] sm:$0xff]
      %v1519 = vld [vmem:[#allocation8 + $0x38] sm:$0xff]
      %v1520 = vld [vmem:[#allocation8 + $0x40] sm:$0xff]
      %v1521 = vld [vmem:[#allocation8 + $0x48] sm:$0xff]
      %v1522 = vld [vmem:[#allocation8 + $0x50] sm:$0xff]
      %v1523 = vld [vmem:[#allocation8 + $0x58] sm:$0xff]
      %v1524 = vld [vmem:[#allocation8 + $0x60] sm:$0xff]
      %v1525 = vld [vmem:[#allocation8 + $0x68] sm:$0xff]
      %v1526 = vld [vmem:[#allocation8 + $0x70] sm:$0xff]
      %v1527 = vld [vmem:[#allocation8 + $0x78] sm:$0xff]
      %v1528 = vld [vmem:[#allocation8 + $0x80] sm:$0xff]
      %v1529 = vld [vmem:[#allocation8 + $0x88] sm:$0xff]
      %v1530 = vld [vmem:[#allocation8 + $0x90] sm:$0xff]
      %v1531 = vld [vmem:[#allocation8 + $0x98] sm:$0xff]
      %v1532 = vld [vmem:[#allocation8 + $0xa0] sm:$0xff]
      %v1533 = vld [vmem:[#allocation8 + $0xa8] sm:$0xff]
      %v1534 = vld [vmem:[#allocation8 + $0xb0] sm:$0xff]
      %v1535 = vld [vmem:[#allocation8 + $0xb8] sm:$0xff]
      %v1536 = vld [vmem:[#allocation8 + $0xc0] sm:$0xff]
      %v1537 = vld [vmem:[#allocation8 + $0xc8] sm:$0xff]
      %v1538 = vld [vmem:[#allocation8 + $0xd0] sm:$0xff]
      %v1539 = vld [vmem:[#allocation8 + $0xd8] sm:$0xff]
      %v1540 = vld [vmem:[#allocation8 + $0xe0] sm:$0xff]
      %v1541 = vld [vmem:[#allocation8 + $0xe8] sm:$0xff]
      %v1542 = vld [vmem:[#allocation8 + $0xf0] sm:$0xff]
      %v1543 = vld [vmem:[#allocation8 + $0xf8] sm:$0xff]
      %v1544 = vld [vmem:[#allocation8 + $0x100] sm:$0xff]
      %v1545 = vld [vmem:[#allocation8 + $0x108] sm:$0xff]
      %v1546 = vld [vmem:[#allocation8 + $0x110] sm:$0xff]
      %v1547 = vld [vmem:[#allocation8 + $0x118] sm:$0xff]
      %v1548 = vld [vmem:[#allocation8 + $0x120] sm:$0xff]
      %v1549 = vld [vmem:[#allocation8 + $0x128] sm:$0xff]
      %v1550 = vld [vmem:[#allocation8 + $0x130] sm:$0xff]
      %v1551 = vld [vmem:[#allocation8 + $0x138] sm:$0xff]
      %v1552 = vld [vmem:[#allocation8 + $0x140] sm:$0xff]
      %v1553 = vld [vmem:[#allocation8 + $0x148] sm:$0xff]
      %v1554 = vld [vmem:[#allocation8 + $0x150] sm:$0xff]
      %v1555 = vld [vmem:[#allocation8 + $0x158] sm:$0xff]
      %v1556 = vld [vmem:[#allocation8 + $0x160] sm:$0xff]
      %v1557 = vld [vmem:[#allocation8 + $0x168] sm:$0xff]
      %v1558 = vld [vmem:[#allocation8 + $0x170] sm:$0xff]
      %v1559 = vld [vmem:[#allocation8 + $0x178] sm:$0xff]
      %v1560 = vld [vmem:[#allocation8 + $0x180] sm:$0xff]
      %v1561 = vld [vmem:[#allocation8 + $0x188] sm:$0xff]
      %v1562 = vld [vmem:[#allocation8 + $0x190] sm:$0xff]
      %v1563 = vld [vmem:[#allocation8 + $0x198] sm:$0xff]
      %v1564 = vld [vmem:[#allocation8 + $0x1a0] sm:$0xff]
      %v1565 = vld [vmem:[#allocation8 + $0x1a8] sm:$0xff]
      %v1566 = vld [vmem:[#allocation8 + $0x1b0] sm:$0xff]
      %v1567 = vld [vmem:[#allocation8 + $0x1b8] sm:$0xff]
      %v1568 = vld [vmem:[#allocation8 + $0x1c0] sm:$0xff]
      %v1569 = vld [vmem:[#allocation8 + $0x1c8] sm:$0xff]
      %v1570 = vld [vmem:[#allocation8 + $0x1d0] sm:$0xff]
      %v1571 = vld [vmem:[#allocation8 + $0x1d8] sm:$0xff]
      %v1572 = vld [vmem:[#allocation8 + $0x1e0] sm:$0xff]
      %v1573 = vld [vmem:[#allocation8 + $0x1e8] sm:$0xff]
      %v1574 = vld [vmem:[#allocation8 + $0x1f0] sm:$0xff]
      %v1575 = vld [vmem:[#allocation8 + $0x1f8] sm:$0xff]
      %v1576 = vld [vmem:[#allocation8 + $0x200] sm:$0xff]
      %v1577 = vld [vmem:[#allocation8 + $0x208] sm:$0xff]
      %v1578 = vld [vmem:[#allocation8 + $0x210] sm:$0xff]
      %v1579 = vld [vmem:[#allocation8 + $0x218] sm:$0xff]
      %v1580 = vld [vmem:[#allocation8 + $0x220] sm:$0xff]
      %v1581 = vld [vmem:[#allocation8 + $0x228] sm:$0xff]
      %v1582 = vld [vmem:[#allocation8 + $0x230] sm:$0xff]
      %v1583 = vld [vmem:[#allocation8 + $0x238] sm:$0xff]
      %v1584 = vld [vmem:[#allocation8 + $0x240] sm:$0xff]
      %v1585 = vld [vmem:[#allocation8 + $0x248] sm:$0xff]
      %v1586 = vld [vmem:[#allocation8 + $0x250] sm:$0xff]
      %v1587 = vld [vmem:[#allocation8 + $0x258] sm:$0xff]
      %v1588 = vld [vmem:[#allocation8 + $0x260] sm:$0xff]
      %v1589 = vld [vmem:[#allocation8 + $0x268] sm:$0xff]
      %v1590 = vld [vmem:[#allocation8 + $0x270] sm:$0xff]
      %v1591 = vld [vmem:[#allocation8 + $0x278] sm:$0xff]
      %v1592 = vld [vmem:[#allocation8 + $0x280] sm:$0xff]
      %v1593 = vld [vmem:[#allocation8 + $0x288] sm:$0xff]
      %v1594 = vld [vmem:[#allocation8 + $0x290] sm:$0xff]
      %v1595 = vld [vmem:[#allocation8 + $0x298] sm:$0xff]
      %v1596 = vld [vmem:[#allocation8 + $0x2a0] sm:$0xff]
      %v1597 = vld [vmem:[#allocation8 + $0x2a8] sm:$0xff]
      %v1598 = vld [vmem:[#allocation8 + $0x2b0] sm:$0xff]
      %v1599 = vld [vmem:[#allocation8 + $0x2b8] sm:$0xff]
      %v1600 = vld [vmem:[#allocation8 + $0x2c0] sm:$0xff]
      %v1601 = vld [vmem:[#allocation8 + $0x2c8] sm:$0xff]
      %v1602 = vld [vmem:[#allocation8 + $0x2d0] sm:$0xff]
      %v1603 = vld [vmem:[#allocation8 + $0x2d8] sm:$0xff]
      %v1604 = vld [vmem:[#allocation8 + $0x2e0] sm:$0xff]
      %v1605 = vld [vmem:[#allocation8 + $0x2e8] sm:$0xff]
      %v1606 = vld [vmem:[#allocation8 + $0x2f0] sm:$0xff]
      %v1607 = vld [vmem:[#allocation8 + $0x2f8] sm:$0xff]
      %v1608 = vld [vmem:[#allocation8 + $0x300] sm:$0xff]
      %v1609 = vld [vmem:[#allocation8 + $0x308] sm:$0xff]
      %v1610 = vld [vmem:[#allocation8 + $0x310] sm:$0xff]
      %v1611 = vld [vmem:[#allocation8 + $0x318] sm:$0xff]
      %v1612 = vld [vmem:[#allocation8 + $0x320] sm:$0xff]
      %v1613 = vld [vmem:[#allocation8 + $0x328] sm:$0xff]
      %v1614 = vld [vmem:[#allocation8 + $0x330] sm:$0xff]
      %v1615 = vld [vmem:[#allocation8 + $0x338] sm:$0xff]
      %v1616 = vld [vmem:[#allocation8 + $0x340] sm:$0xff]
      %v1617 = vld [vmem:[#allocation8 + $0x348] sm:$0xff]
      %v1618 = vld [vmem:[#allocation8 + $0x350] sm:$0xff]
      %v1619 = vld [vmem:[#allocation8 + $0x358] sm:$0xff]
      %v1620 = vld [vmem:[#allocation8 + $0x360] sm:$0xff]
      %v1621 = vld [vmem:[#allocation8 + $0x368] sm:$0xff]
      %v1622 = vld [vmem:[#allocation8 + $0x370] sm:$0xff]
      %v1623 = vld [vmem:[#allocation8 + $0x378] sm:$0xff]
      %v1624 = vld [vmem:[#allocation8 + $0x380] sm:$0xff]
      %v1625 = vld [vmem:[#allocation8 + $0x388] sm:$0xff]
      %v1626 = vld [vmem:[#allocation8 + $0x390] sm:$0xff]
      %v1627 = vld [vmem:[#allocation8 + $0x398] sm:$0xff]
      %v1628 = vld [vmem:[#allocation8 + $0x3a0] sm:$0xff]
      %v1629 = vld [vmem:[#allocation8 + $0x3a8] sm:$0xff]
      %v1630 = vld [vmem:[#allocation8 + $0x3b0] sm:$0xff]
      %v1631 = vld [vmem:[#allocation8 + $0x3b8] sm:$0xff]
      %v1632 = vld [vmem:[#allocation8 + $0x3c0] sm:$0xff]
      %v1633 = vld [vmem:[#allocation8 + $0x3c8] sm:$0xff]
      %v1634 = vld [vmem:[#allocation8 + $0x3d0] sm:$0xff]
      %v1635 = vld [vmem:[#allocation8 + $0x3d8] sm:$0xff]
      %v1636 = vld [vmem:[#allocation8 + $0x3e0] sm:$0xff]
      %v1637 = vld [vmem:[#allocation8 + $0x3e8] sm:$0xff]
      %v1638 = vld [vmem:[#allocation8 + $0x3f0] sm:$0xff]
      %v1639 = vld [vmem:[#allocation8 + $0x3f8] sm:$0xff]
      %v1640 = vld [vmem:[#allocation8 + $0x400] sm:$0xff]
      %v1641 = vld [vmem:[#allocation8 + $0x408] sm:$0xff]
      %v1642 = vld [vmem:[#allocation8 + $0x410] sm:$0xff]
      %v1643 = vld [vmem:[#allocation8 + $0x418] sm:$0xff]
      %v1644 = vld [vmem:[#allocation8 + $0x420] sm:$0xff]
      %v1645 = vld [vmem:[#allocation8 + $0x428] sm:$0xff]
      %v1646 = vld [vmem:[#allocation8 + $0x430] sm:$0xff]
      %v1647 = vld [vmem:[#allocation8 + $0x438] sm:$0xff]
      %v1648 = vld [vmem:[#allocation8 + $0x440] sm:$0xff]
      %v1649 = vld [vmem:[#allocation8 + $0x448] sm:$0xff]
      %v1650 = vld [vmem:[#allocation8 + $0x450] sm:$0xff]
      %v1651 = vld [vmem:[#allocation8 + $0x458] sm:$0xff]
      %v1652 = vld [vmem:[#allocation8 + $0x460] sm:$0xff]
      %v1653 = vld [vmem:[#allocation8 + $0x468] sm:$0xff]
      %v1654 = vld [vmem:[#allocation8 + $0x470] sm:$0xff]
      %v1655 = vld [vmem:[#allocation8 + $0x478] sm:$0xff]
      %v1656 = vld [vmem:[#allocation8 + $0x480] sm:$0xff]
      %v1657 = vld [vmem:[#allocation8 + $0x488] sm:$0xff]
      %v1658 = vld [vmem:[#allocation8 + $0x490] sm:$0xff]
      %v1659 = vld [vmem:[#allocation8 + $0x498] sm:$0xff]
      %v1660 = vld [vmem:[#allocation8 + $0x4a0] sm:$0xff]
      %v1661 = vld [vmem:[#allocation8 + $0x4a8] sm:$0xff]
      %v1662 = vld [vmem:[#allocation8 + $0x4b0] sm:$0xff]
      %v1663 = vld [vmem:[#allocation8 + $0x4b8] sm:$0xff]
      %v1664 = vld [vmem:[#allocation8 + $0x4c0] sm:$0xff]
      %v1665 = vld [vmem:[#allocation8 + $0x4c8] sm:$0xff]
      %v1666 = vld [vmem:[#allocation8 + $0x4d0] sm:$0xff]
      %v1667 = vld [vmem:[#allocation8 + $0x4d8] sm:$0xff]
      %v1668 = vld [vmem:[#allocation8 + $0x4e0] sm:$0xff]
      %v1669 = vld [vmem:[#allocation8 + $0x4e8] sm:$0xff]
      %v1670 = vld [vmem:[#allocation8 + $0x4f0] sm:$0xff]
      %v1671 = vld [vmem:[#allocation8 + $0x4f8] sm:$0xff]
      %v1672 = vld [vmem:[#allocation8 + $0x500] sm:$0xff]
      %v1673 = vld [vmem:[#allocation8 + $0x508] sm:$0xff]
      %v1674 = vld [vmem:[#allocation8 + $0x510] sm:$0xff]
      %v1675 = vld [vmem:[#allocation8 + $0x518] sm:$0xff]
      %v1676 = vld [vmem:[#allocation8 + $0x520] sm:$0xff]
      %v1677 = vld [vmem:[#allocation8 + $0x528] sm:$0xff]
      %v1678 = vld [vmem:[#allocation8 + $0x530] sm:$0xff]
      %v1679 = vld [vmem:[#allocation8 + $0x538] sm:$0xff]
      %v1680 = vld [vmem:[#allocation8 + $0x540] sm:$0xff]
      %v1681 = vld [vmem:[#allocation8 + $0x548] sm:$0xff]
      %v1682 = vld [vmem:[#allocation8 + $0x550] sm:$0xff]
      %v1683 = vld [vmem:[#allocation8 + $0x558] sm:$0xff]
      %v1684 = vld [vmem:[#allocation8 + $0x560] sm:$0xff]
      %v1685 = vld [vmem:[#allocation8 + $0x568] sm:$0xff]
      %v1686 = vld [vmem:[#allocation8 + $0x570] sm:$0xff]
      %v1687 = vld [vmem:[#allocation8 + $0x578] sm:$0xff]
      %v1688 = vld [vmem:[#allocation8 + $0x580] sm:$0xff]
      %v1689 = vld [vmem:[#allocation8 + $0x588] sm:$0xff]
      %v1690 = vld [vmem:[#allocation8 + $0x590] sm:$0xff]
      %v1691 = vld [vmem:[#allocation8 + $0x598] sm:$0xff]
      %v1692 = vld [vmem:[#allocation8 + $0x5a0] sm:$0xff]
      %v1693 = vld [vmem:[#allocation8 + $0x5a8] sm:$0xff]
      %v1694 = vld [vmem:[#allocation8 + $0x5b0] sm:$0xff]
      %v1695 = vld [vmem:[#allocation8 + $0x5b8] sm:$0xff]
      %v1696 = vld [vmem:[#allocation8 + $0x5c0] sm:$0xff]
      %v1697 = vld [vmem:[#allocation8 + $0x5c8] sm:$0xff]
      %v1698 = vld [vmem:[#allocation8 + $0x5d0] sm:$0xff]
      %v1699 = vld [vmem:[#allocation8 + $0x5d8] sm:$0xff]
      %v1700 = vld [vmem:[#allocation8 + $0x5e0] sm:$0xff]
      %v1701 = vld [vmem:[#allocation8 + $0x5e8] sm:$0xff]
      %v1702 = vld [vmem:[#allocation8 + $0x5f0] sm:$0xff]
      %v1703 = vld [vmem:[#allocation8 + $0x5f8] sm:$0xff]
      %v1704 = vld [vmem:[#allocation8 + $0x600] sm:$0xff]
      %v1705 = vld [vmem:[#allocation8 + $0x608] sm:$0xff]
      %v1706 = vld [vmem:[#allocation8 + $0x610] sm:$0xff]
      %v1707 = vld [vmem:[#allocation8 + $0x618] sm:$0xff]
      %v1708 = vld [vmem:[#allocation8 + $0x620] sm:$0xff]
      %v1709 = vld [vmem:[#allocation8 + $0x628] sm:$0xff]
      %v1710 = vld [vmem:[#allocation8 + $0x630] sm:$0xff]
      %v1711 = vld [vmem:[#allocation8 + $0x638] sm:$0xff]
      %v1712 = vld [vmem:[#allocation8 + $0x640] sm:$0xff]
      %v1713 = vld [vmem:[#allocation8 + $0x648] sm:$0xff]
      %v1714 = vld [vmem:[#allocation8 + $0x650] sm:$0xff]
      %v1715 = vld [vmem:[#allocation8 + $0x658] sm:$0xff]
      %v1716 = vld [vmem:[#allocation8 + $0x660] sm:$0xff]
      %v1717 = vld [vmem:[#allocation8 + $0x668] sm:$0xff]
      %v1718 = vld [vmem:[#allocation8 + $0x670] sm:$0xff]
      %v1719 = vld [vmem:[#allocation8 + $0x678] sm:$0xff]
      %v1720 = vld [vmem:[#allocation8 + $0x680] sm:$0xff]
      %v1721 = vld [vmem:[#allocation8 + $0x688] sm:$0xff]
      %v1722 = vld [vmem:[#allocation8 + $0x690] sm:$0xff]
      %v1723 = vld [vmem:[#allocation8 + $0x698] sm:$0xff]
      %v1724 = vld [vmem:[#allocation8 + $0x6a0] sm:$0xff]
      %v1725 = vld [vmem:[#allocation8 + $0x6a8] sm:$0xff]
      %v1726 = vld [vmem:[#allocation8 + $0x6b0] sm:$0xff]
      %v1727 = vld [vmem:[#allocation8 + $0x6b8] sm:$0xff]
      %v1728 = vld [vmem:[#allocation8 + $0x6c0] sm:$0xff]
      %v1729 = vld [vmem:[#allocation8 + $0x6c8] sm:$0xff]
      %v1730 = vld [vmem:[#allocation8 + $0x6d0] sm:$0xff]
      %v1731 = vld [vmem:[#allocation8 + $0x6d8] sm:$0xff]
      %v1732 = vld [vmem:[#allocation8 + $0x6e0] sm:$0xff]
      %v1733 = vld [vmem:[#allocation8 + $0x6e8] sm:$0xff]
      %v1734 = vld [vmem:[#allocation8 + $0x6f0] sm:$0xff]
      %v1735 = vld [vmem:[#allocation8 + $0x6f8] sm:$0xff]
      %v1736 = vld [vmem:[#allocation8 + $0x700] sm:$0xff]
      %v1737 = vld [vmem:[#allocation8 + $0x708] sm:$0xff]
      %v1738 = vld [vmem:[#allocation8 + $0x710] sm:$0xff]
      %v1739 = vld [vmem:[#allocation8 + $0x718] sm:$0xff]
      %v1740 = vld [vmem:[#allocation8 + $0x720] sm:$0xff]
      %v1741 = vld [vmem:[#allocation8 + $0x728] sm:$0xff]
      %v1742 = vld [vmem:[#allocation8 + $0x730] sm:$0xff]
      %v1743 = vld [vmem:[#allocation8 + $0x738] sm:$0xff]
      %v1744 = vld [vmem:[#allocation8 + $0x740] sm:$0xff]
      %v1745 = vld [vmem:[#allocation8 + $0x748] sm:$0xff]
      %v1746 = vld [vmem:[#allocation8 + $0x750] sm:$0xff]
      %v1747 = vld [vmem:[#allocation8 + $0x758] sm:$0xff]
      %v1748 = vld [vmem:[#allocation8 + $0x760] sm:$0xff]
      %v1749 = vld [vmem:[#allocation8 + $0x768] sm:$0xff]
      %v1750 = vld [vmem:[#allocation8 + $0x770] sm:$0xff]
      %v1751 = vld [vmem:[#allocation8 + $0x778] sm:$0xff]
      %v1752 = vld [vmem:[#allocation8 + $0x780] sm:$0xff]
      %v1753 = vld [vmem:[#allocation8 + $0x788] sm:$0xff]
      %v1754 = vld [vmem:[#allocation8 + $0x790] sm:$0xff]
      %v1755 = vld [vmem:[#allocation8 + $0x798] sm:$0xff]
      %v1756 = vld [vmem:[#allocation8 + $0x7a0] sm:$0xff]
      %v1757 = vld [vmem:[#allocation8 + $0x7a8] sm:$0xff]
      %v1758 = vld [vmem:[#allocation8 + $0x7b0] sm:$0xff]
      %v1759 = vld [vmem:[#allocation8 + $0x7b8] sm:$0xff]
      %v1760 = vld [vmem:[#allocation8 + $0x7c0] sm:$0xff]
      %v1761 = vld [vmem:[#allocation8 + $0x7c8] sm:$0xff]
      %v1762 = vld [vmem:[#allocation8 + $0x7d0] sm:$0xff]
      %v1763 = vld [vmem:[#allocation8 + $0x7d8] sm:$0xff]
      %v1764 = vld [vmem:[#allocation8 + $0x7e0] sm:$0xff]
      %v1765 = vld [vmem:[#allocation8 + $0x7e8] sm:$0xff]
      %v1766 = vld [vmem:[#allocation8 + $0x7f0] sm:$0xff]
      %v1767 = vld [vmem:[#allocation8 + $0x7f8] sm:$0xff]
      %v1896 = vunpack.c.l.b16 %v1640
      %v1897 = vunpack.c.h.b16 %v1640
      %v1898 = vunpack.c.l.b16 %v1641
      %v1899 = vunpack.c.h.b16 %v1641
      %v1900 = vunpack.c.l.b16 %v1642
      %v1901 = vunpack.c.h.b16 %v1642
      %v1902 = vunpack.c.l.b16 %v1643
      %v1903 = vunpack.c.h.b16 %v1643
      %v1904 = vunpack.c.l.b16 %v1644
      %v1905 = vunpack.c.h.b16 %v1644
      %v1906 = vunpack.c.l.b16 %v1645
      %v1907 = vunpack.c.h.b16 %v1645
      %v1908 = vunpack.c.l.b16 %v1646
      %v1909 = vunpack.c.h.b16 %v1646
      %v1910 = vunpack.c.l.b16 %v1647
      %v1911 = vunpack.c.h.b16 %v1647
      %v1912 = vunpack.c.l.b16 %v1648
      %v1913 = vunpack.c.h.b16 %v1648
      %v1914 = vunpack.c.l.b16 %v1649
      %v1915 = vunpack.c.h.b16 %v1649
      %v1916 = vunpack.c.l.b16 %v1650
      %v1917 = vunpack.c.h.b16 %v1650
      %v1918 = vunpack.c.l.b16 %v1651
      %v1919 = vunpack.c.h.b16 %v1651
      %v1920 = vunpack.c.l.b16 %v1652
      %v1921 = vunpack.c.h.b16 %v1652
      %v1922 = vunpack.c.l.b16 %v1653
      %v1923 = vunpack.c.h.b16 %v1653
      %v1924 = vunpack.c.l.b16 %v1654
      %v1925 = vunpack.c.h.b16 %v1654
      %v1926 = vunpack.c.l.b16 %v1655
      %v1927 = vunpack.c.h.b16 %v1655
      %v1928 = vunpack.c.l.b16 %v1656
      %v1929 = vunpack.c.h.b16 %v1656
      %v1930 = vunpack.c.l.b16 %v1657
      %v1931 = vunpack.c.h.b16 %v1657
      %v1932 = vunpack.c.l.b16 %v1658
      %v1933 = vunpack.c.h.b16 %v1658
      %v1934 = vunpack.c.l.b16 %v1659
      %v1935 = vunpack.c.h.b16 %v1659
      %v1936 = vunpack.c.l.b16 %v1660
      %v1937 = vunpack.c.h.b16 %v1660
      %v1938 = vunpack.c.l.b16 %v1661
      %v1939 = vunpack.c.h.b16 %v1661
      %v1940 = vunpack.c.l.b16 %v1662
      %v1941 = vunpack.c.h.b16 %v1662
      %v1942 = vunpack.c.l.b16 %v1663
      %v1943 = vunpack.c.h.b16 %v1663
      %v1944 = vunpack.c.l.b16 %v1664
      %v1945 = vunpack.c.h.b16 %v1664
      %v1946 = vunpack.c.l.b16 %v1665
      %v1947 = vunpack.c.h.b16 %v1665
      %v1948 = vunpack.c.l.b16 %v1666
      %v1949 = vunpack.c.h.b16 %v1666
      %v1950 = vunpack.c.l.b16 %v1667
      %v1951 = vunpack.c.h.b16 %v1667
      %v1952 = vunpack.c.l.b16 %v1668
      %v1953 = vunpack.c.h.b16 %v1668
      %v1954 = vunpack.c.l.b16 %v1669
      %v1955 = vunpack.c.h.b16 %v1669
      %v1956 = vunpack.c.l.b16 %v1670
      %v1957 = vunpack.c.h.b16 %v1670
      %v1958 = vunpack.c.l.b16 %v1671
      %v1959 = vunpack.c.h.b16 %v1671
      %v1960 = vunpack.c.l.b16 %v1672
      %v1961 = vunpack.c.h.b16 %v1672
      %v1962 = vunpack.c.l.b16 %v1673
      %v1963 = vunpack.c.h.b16 %v1673
      %v1964 = vunpack.c.l.b16 %v1674
      %v1965 = vunpack.c.h.b16 %v1674
      %v1966 = vunpack.c.l.b16 %v1675
      %v1967 = vunpack.c.h.b16 %v1675
      %v1968 = vunpack.c.l.b16 %v1676
      %v1969 = vunpack.c.h.b16 %v1676
      %v1970 = vunpack.c.l.b16 %v1677
      %v1971 = vunpack.c.h.b16 %v1677
      %v1972 = vunpack.c.l.b16 %v1678
      %v1973 = vunpack.c.h.b16 %v1678
      %v1974 = vunpack.c.l.b16 %v1679
      %v1975 = vunpack.c.h.b16 %v1679
      %v1976 = vunpack.c.l.b16 %v1680
      %v1977 = vunpack.c.h.b16 %v1680
      %v1978 = vunpack.c.l.b16 %v1681
      %v1979 = vunpack.c.h.b16 %v1681
      %v1980 = vunpack.c.l.b16 %v1682
      %v1981 = vunpack.c.h.b16 %v1682
      %v1982 = vunpack.c.l.b16 %v1683
      %v1983 = vunpack.c.h.b16 %v1683
      %v1984 = vunpack.c.l.b16 %v1684
      %v1985 = vunpack.c.h.b16 %v1684
      %v1986 = vunpack.c.l.b16 %v1685
      %v1987 = vunpack.c.h.b16 %v1685
      %v1988 = vunpack.c.l.b16 %v1686
      %v1989 = vunpack.c.h.b16 %v1686
      %v1990 = vunpack.c.l.b16 %v1687
      %v1991 = vunpack.c.h.b16 %v1687
      %v1992 = vunpack.c.l.b16 %v1688
      %v1993 = vunpack.c.h.b16 %v1688
      %v1994 = vunpack.c.l.b16 %v1689
      %v1995 = vunpack.c.h.b16 %v1689
      %v1996 = vunpack.c.l.b16 %v1690
      %v1997 = vunpack.c.h.b16 %v1690
      %v1998 = vunpack.c.l.b16 %v1691
      %v1999 = vunpack.c.h.b16 %v1691
      %v2000 = vunpack.c.l.b16 %v1692
      %v2001 = vunpack.c.h.b16 %v1692
      %v2002 = vunpack.c.l.b16 %v1693
      %v2003 = vunpack.c.h.b16 %v1693
      %v2004 = vunpack.c.l.b16 %v1694
      %v2005 = vunpack.c.h.b16 %v1694
      %v2006 = vunpack.c.l.b16 %v1695
      %v2007 = vunpack.c.h.b16 %v1695
      %v2008 = vunpack.c.l.b16 %v1696
      %v2009 = vunpack.c.h.b16 %v1696
      %v2010 = vunpack.c.l.b16 %v1697
      %v2011 = vunpack.c.h.b16 %v1697
      %v2012 = vunpack.c.l.b16 %v1698
      %v2013 = vunpack.c.h.b16 %v1698
      %v2014 = vunpack.c.l.b16 %v1699
      %v2015 = vunpack.c.h.b16 %v1699
      %v2016 = vunpack.c.l.b16 %v1700
      %v2017 = vunpack.c.h.b16 %v1700
      %v2018 = vunpack.c.l.b16 %v1701
      %v2019 = vunpack.c.h.b16 %v1701
      %v2020 = vunpack.c.l.b16 %v1702
      %v2021 = vunpack.c.h.b16 %v1702
      %v2022 = vunpack.c.l.b16 %v1703
      %v2023 = vunpack.c.h.b16 %v1703
      %v2024 = vunpack.c.l.b16 %v1704
      %v2025 = vunpack.c.h.b16 %v1704
      %v2026 = vunpack.c.l.b16 %v1705
      %v2027 = vunpack.c.h.b16 %v1705
      %v2028 = vunpack.c.l.b16 %v1706
      %v2029 = vunpack.c.h.b16 %v1706
      %v2030 = vunpack.c.l.b16 %v1707
      %v2031 = vunpack.c.h.b16 %v1707
      %v2032 = vunpack.c.l.b16 %v1708
      %v2033 = vunpack.c.h.b16 %v1708
      %v2034 = vunpack.c.l.b16 %v1709
      %v2035 = vunpack.c.h.b16 %v1709
      %v2036 = vunpack.c.l.b16 %v1710
      %v2037 = vunpack.c.h.b16 %v1710
      %v2038 = vunpack.c.l.b16 %v1711
      %v2039 = vunpack.c.h.b16 %v1711
      %v2040 = vunpack.c.l.b16 %v1712
      %v2041 = vunpack.c.h.b16 %v1712
      %v2042 = vunpack.c.l.b16 %v1713
      %v2043 = vunpack.c.h.b16 %v1713
      %v2044 = vunpack.c.l.b16 %v1714
      %v2045 = vunpack.c.h.b16 %v1714
      %v2046 = vunpack.c.l.b16 %v1715
      %v2047 = vunpack.c.h.b16 %v1715
      %v2048 = vunpack.c.l.b16 %v1716
      %v2049 = vunpack.c.h.b16 %v1716
      %v2050 = vunpack.c.l.b16 %v1717
      %v2051 = vunpack.c.h.b16 %v1717
      %v2052 = vunpack.c.l.b16 %v1718
      %v2053 = vunpack.c.h.b16 %v1718
      %v2054 = vunpack.c.l.b16 %v1719
      %v2055 = vunpack.c.h.b16 %v1719
      %v2056 = vunpack.c.l.b16 %v1720
      %v2057 = vunpack.c.h.b16 %v1720
      %v2058 = vunpack.c.l.b16 %v1721
      %v2059 = vunpack.c.h.b16 %v1721
      %v2060 = vunpack.c.l.b16 %v1722
      %v2061 = vunpack.c.h.b16 %v1722
      %v2062 = vunpack.c.l.b16 %v1723
      %v2063 = vunpack.c.h.b16 %v1723
      %v2064 = vunpack.c.l.b16 %v1724
      %v2065 = vunpack.c.h.b16 %v1724
      %v2066 = vunpack.c.l.b16 %v1725
      %v2067 = vunpack.c.h.b16 %v1725
      %v2068 = vunpack.c.l.b16 %v1726
      %v2069 = vunpack.c.h.b16 %v1726
      %v2070 = vunpack.c.l.b16 %v1727
      %v2071 = vunpack.c.h.b16 %v1727
      %v2072 = vunpack.c.l.b16 %v1728
      %v2073 = vunpack.c.h.b16 %v1728
      %v2074 = vunpack.c.l.b16 %v1729
      %v2075 = vunpack.c.h.b16 %v1729
      %v2076 = vunpack.c.l.b16 %v1730
      %v2077 = vunpack.c.h.b16 %v1730
      %v2078 = vunpack.c.l.b16 %v1731
      %v2079 = vunpack.c.h.b16 %v1731
      %v2080 = vunpack.c.l.b16 %v1732
      %v2081 = vunpack.c.h.b16 %v1732
      %v2082 = vunpack.c.l.b16 %v1733
      %v2083 = vunpack.c.h.b16 %v1733
      %v2084 = vunpack.c.l.b16 %v1734
      %v2085 = vunpack.c.h.b16 %v1734
      %v2086 = vunpack.c.l.b16 %v1735
      %v2087 = vunpack.c.h.b16 %v1735
      %v2088 = vunpack.c.l.b16 %v1736
      %v2089 = vunpack.c.h.b16 %v1736
      %v2090 = vunpack.c.l.b16 %v1737
      %v2091 = vunpack.c.h.b16 %v1737
      %v2092 = vunpack.c.l.b16 %v1738
      %v2093 = vunpack.c.h.b16 %v1738
      %v2094 = vunpack.c.l.b16 %v1739
      %v2095 = vunpack.c.h.b16 %v1739
      %v2096 = vunpack.c.l.b16 %v1740
      %v2097 = vunpack.c.h.b16 %v1740
      %v2098 = vunpack.c.l.b16 %v1741
      %v2099 = vunpack.c.h.b16 %v1741
      %v2100 = vunpack.c.l.b16 %v1742
      %v2101 = vunpack.c.h.b16 %v1742
      %v2102 = vunpack.c.l.b16 %v1743
      %v2103 = vunpack.c.h.b16 %v1743
      %v2104 = vunpack.c.l.b16 %v1744
      %v2105 = vunpack.c.h.b16 %v1744
      %v2106 = vunpack.c.l.b16 %v1745
      %v2107 = vunpack.c.h.b16 %v1745
      %v2108 = vunpack.c.l.b16 %v1746
      %v2109 = vunpack.c.h.b16 %v1746
      %v2110 = vunpack.c.l.b16 %v1747
      %v2111 = vunpack.c.h.b16 %v1747
      %v2112 = vunpack.c.l.b16 %v1748
      %v2113 = vunpack.c.h.b16 %v1748
      %v2114 = vunpack.c.l.b16 %v1749
      %v2115 = vunpack.c.h.b16 %v1749
      %v2116 = vunpack.c.l.b16 %v1750
      %v2117 = vunpack.c.h.b16 %v1750
      %v2118 = vunpack.c.l.b16 %v1751
      %v2119 = vunpack.c.h.b16 %v1751
      %v2120 = vunpack.c.l.b16 %v1752
      %v2121 = vunpack.c.h.b16 %v1752
      %v2122 = vunpack.c.l.b16 %v1753
      %v2123 = vunpack.c.h.b16 %v1753
      %v2124 = vunpack.c.l.b16 %v1754
      %v2125 = vunpack.c.h.b16 %v1754
      %v2126 = vunpack.c.l.b16 %v1755
      %v2127 = vunpack.c.h.b16 %v1755
      %v2128 = vunpack.c.l.b16 %v1756
      %v2129 = vunpack.c.h.b16 %v1756
      %v2130 = vunpack.c.l.b16 %v1757
      %v2131 = vunpack.c.h.b16 %v1757
      %v2132 = vunpack.c.l.b16 %v1758
      %v2133 = vunpack.c.h.b16 %v1758
      %v2134 = vunpack.c.l.b16 %v1759
      %v2135 = vunpack.c.h.b16 %v1759
      %v2136 = vunpack.c.l.b16 %v1760
      %v2137 = vunpack.c.h.b16 %v1760
      %v2138 = vunpack.c.l.b16 %v1761
      %v2139 = vunpack.c.h.b16 %v1761
      %v2140 = vunpack.c.l.b16 %v1762
      %v2141 = vunpack.c.h.b16 %v1762
      %v2142 = vunpack.c.l.b16 %v1763
      %v2143 = vunpack.c.h.b16 %v1763
      %v2144 = vunpack.c.l.b16 %v1764
      %v2145 = vunpack.c.h.b16 %v1764
      %v2146 = vunpack.c.l.b16 %v1765
      %v2147 = vunpack.c.h.b16 %v1765
      %v2148 = vunpack.c.l.b16 %v1766
      %v2149 = vunpack.c.h.b16 %v1766
      %v2150 = vunpack.c.l.b16 %v1767
      %v2151 = vunpack.c.h.b16 %v1767
      %v2152 = vpack.c.b16 %v1900, %v1896
      %v2153 = vpack.c.b16 %v1901, %v1897
      %v2154 = vpack.c.b16 %v1902, %v1898
      %v2155 = vpack.c.b16 %v1903, %v1899
      %v2156 = vpack.c.b16 %v1908, %v1904
      %v2157 = vpack.c.b16 %v1909, %v1905
      %v2158 = vpack.c.b16 %v1910, %v1906
      %v2159 = vpack.c.b16 %v1911, %v1907
      %v2160 = vpack.c.b16 %v1916, %v1912
      %v2161 = vpack.c.b16 %v1917, %v1913
      %v2162 = vpack.c.b16 %v1918, %v1914
      %v2163 = vpack.c.b16 %v1919, %v1915
      %v2164 = vpack.c.b16 %v1924, %v1920
      %v2165 = vpack.c.b16 %v1925, %v1921
      %v2166 = vpack.c.b16 %v1926, %v1922
      %v2167 = vpack.c.b16 %v1927, %v1923
      %v2168 = vpack.c.b16 %v1932, %v1928
      %v2169 = vpack.c.b16 %v1933, %v1929
      %v2170 = vpack.c.b16 %v1934, %v1930
      %v2171 = vpack.c.b16 %v1935, %v1931
      %v2172 = vpack.c.b16 %v1940, %v1936
      %v2173 = vpack.c.b16 %v1941, %v1937
      %v2174 = vpack.c.b16 %v1942, %v1938
      %v2175 = vpack.c.b16 %v1943, %v1939
      %v2176 = vpack.c.b16 %v1948, %v1944
      %v2177 = vpack.c.b16 %v1949, %v1945
      %v2178 = vpack.c.b16 %v1950, %v1946
      %v2179 = vpack.c.b16 %v1951, %v1947
      %v2180 = vpack.c.b16 %v1956, %v1952
      %v2181 = vpack.c.b16 %v1957, %v1953
      %v2182 = vpack.c.b16 %v1958, %v1954
      %v2183 = vpack.c.b16 %v1959, %v1955
      %v2184 = vpack.c.b16 %v1964, %v1960
      %v2185 = vpack.c.b16 %v1965, %v1961
      %v2186 = vpack.c.b16 %v1966, %v1962
      %v2187 = vpack.c.b16 %v1967, %v1963
      %v2188 = vpack.c.b16 %v1972, %v1968
      %v2189 = vpack.c.b16 %v1973, %v1969
      %v2190 = vpack.c.b16 %v1974, %v1970
      %v2191 = vpack.c.b16 %v1975, %v1971
      %v2192 = vpack.c.b16 %v1980, %v1976
      %v2193 = vpack.c.b16 %v1981, %v1977
      %v2194 = vpack.c.b16 %v1982, %v1978
      %v2195 = vpack.c.b16 %v1983, %v1979
      %v2196 = vpack.c.b16 %v1988, %v1984
      %v2197 = vpack.c.b16 %v1989, %v1985
      %v2198 = vpack.c.b16 %v1990, %v1986
      %v2199 = vpack.c.b16 %v1991, %v1987
      %v2200 = vpack.c.b16 %v1996, %v1992
      %v2201 = vpack.c.b16 %v1997, %v1993
      %v2202 = vpack.c.b16 %v1998, %v1994
      %v2203 = vpack.c.b16 %v1999, %v1995
      %v2204 = vpack.c.b16 %v2004, %v2000
      %v2205 = vpack.c.b16 %v2005, %v2001
      %v2206 = vpack.c.b16 %v2006, %v2002
      %v2207 = vpack.c.b16 %v2007, %v2003
      %v2208 = vpack.c.b16 %v2012, %v2008
      %v2209 = vpack.c.b16 %v2013, %v2009
      %v2210 = vpack.c.b16 %v2014, %v2010
      %v2211 = vpack.c.b16 %v2015, %v2011
      %v2212 = vpack.c.b16 %v2020, %v2016
      %v2213 = vpack.c.b16 %v2021, %v2017
      %v2214 = vpack.c.b16 %v2022, %v2018
      %v2215 = vpack.c.b16 %v2023, %v2019
      %v2216 = vpack.c.b16 %v2028, %v2024
      %v2217 = vpack.c.b16 %v2029, %v2025
      %v2218 = vpack.c.b16 %v2030, %v2026
      %v2219 = vpack.c.b16 %v2031, %v2027
      %v2220 = vpack.c.b16 %v2036, %v2032
      %v2221 = vpack.c.b16 %v2037, %v2033
      %v2222 = vpack.c.b16 %v2038, %v2034
      %v2223 = vpack.c.b16 %v2039, %v2035
      %v2224 = vpack.c.b16 %v2044, %v2040
      %v2225 = vpack.c.b16 %v2045, %v2041
      %v2226 = vpack.c.b16 %v2046, %v2042
      %v2227 = vpack.c.b16 %v2047, %v2043
      %v2228 = vpack.c.b16 %v2052, %v2048
      %v2229 = vpack.c.b16 %v2053, %v2049
      %v2230 = vpack.c.b16 %v2054, %v2050
      %v2231 = vpack.c.b16 %v2055, %v2051
      %v2232 = vpack.c.b16 %v2060, %v2056
      %v2233 = vpack.c.b16 %v2061, %v2057
      %v2234 = vpack.c.b16 %v2062, %v2058
      %v2235 = vpack.c.b16 %v2063, %v2059
      %v2236 = vpack.c.b16 %v2068, %v2064
      %v2237 = vpack.c.b16 %v2069, %v2065
      %v2238 = vpack.c.b16 %v2070, %v2066
      %v2239 = vpack.c.b16 %v2071, %v2067
      %v2240 = vpack.c.b16 %v2076, %v2072
      %v2241 = vpack.c.b16 %v2077, %v2073
      %v2242 = vpack.c.b16 %v2078, %v2074
      %v2243 = vpack.c.b16 %v2079, %v2075
      %v2244 = vpack.c.b16 %v2084, %v2080
      %v2245 = vpack.c.b16 %v2085, %v2081
      %v2246 = vpack.c.b16 %v2086, %v2082
      %v2247 = vpack.c.b16 %v2087, %v2083
      %v2248 = vpack.c.b16 %v2092, %v2088
      %v2249 = vpack.c.b16 %v2093, %v2089
      %v2250 = vpack.c.b16 %v2094, %v2090
      %v2251 = vpack.c.b16 %v2095, %v2091
      %v2252 = vpack.c.b16 %v2100, %v2096
      %v2253 = vpack.c.b16 %v2101, %v2097
      %v2254 = vpack.c.b16 %v2102, %v2098
      %v2255 = vpack.c.b16 %v2103, %v2099
      %v2256 = vpack.c.b16 %v2108, %v2104
      %v2257 = vpack.c.b16 %v2109, %v2105
      %v2258 = vpack.c.b16 %v2110, %v2106
      %v2259 = vpack.c.b16 %v2111, %v2107
      %v2260 = vpack.c.b16 %v2116, %v2112
      %v2261 = vpack.c.b16 %v2117, %v2113
      %v2262 = vpack.c.b16 %v2118, %v2114
      %v2263 = vpack.c.b16 %v2119, %v2115
      %v2264 = vpack.c.b16 %v2124, %v2120
      %v2265 = vpack.c.b16 %v2125, %v2121
      %v2266 = vpack.c.b16 %v2126, %v2122
      %v2267 = vpack.c.b16 %v2127, %v2123
      %v2268 = vpack.c.b16 %v2132, %v2128
      %v2269 = vpack.c.b16 %v2133, %v2129
      %v2270 = vpack.c.b16 %v2134, %v2130
      %v2271 = vpack.c.b16 %v2135, %v2131
      %v2272 = vpack.c.b16 %v2140, %v2136
      %v2273 = vpack.c.b16 %v2141, %v2137
      %v2274 = vpack.c.b16 %v2142, %v2138
      %v2275 = vpack.c.b16 %v2143, %v2139
      %v2276 = vpack.c.b16 %v2148, %v2144
      %v2277 = vpack.c.b16 %v2149, %v2145
      %v2278 = vpack.c.b16 %v2150, %v2146
      %v2279 = vpack.c.b16 %v2151, %v2147
      %2408 = vmatprep.subr.bf16.mxu0 %v2181
      %2409 = vmatpush1.bf16.msra.mxu0 %v2180
      %2410 = vmatprep.subr.bf16.mxu0 %v2177
      %2411 = vmatpush1.bf16.msra.mxu0 %v2176
      %2412 = vmatprep.subr.bf16.mxu0 %v2173
      %2413 = vmatpush1.bf16.msra.mxu0 %v2172
      %2414 = vmatprep.subr.bf16.mxu0 %v2169
      %2415 = vmatpush1.bf16.msra.mxu0 %v2168
      %2416 = vmatprep.subr.bf16.mxu0 %v2165
      %2417 = vmatpush1.bf16.msra.mxu0 %v2164
      %2418 = vmatprep.subr.bf16.mxu0 %v2161
      %2419 = vmatpush1.bf16.msra.mxu0 %v2160
      %2420 = vmatprep.subr.bf16.mxu0 %v2157
      %2421 = vmatpush1.bf16.msra.mxu0 %v2156
      %2422 = vmatprep.subr.bf16.mxu0 %v2153
      %2423 = vmatpush1.bf16.msra.mxu0 %v2152
      %2424 = vmatprep.subr.bf16.mxu0 %v2213
      %2425 = vmatpush2.bf16.msra.mxu0 %v2212
      %2426 = vmatprep.subr.bf16.mxu0 %v2209
      %2427 = vmatpush2.bf16.msra.mxu0 %v2208
      %2428 = vmatprep.subr.bf16.mxu0 %v2205
      %2429 = vmatpush2.bf16.msra.mxu0 %v2204
      %2430 = vmatprep.subr.bf16.mxu0 %v2201
      %2431 = vmatpush2.bf16.msra.mxu0 %v2200
      %2432 = vmatprep.subr.bf16.mxu0 %v2197
      %2433 = vmatpush2.bf16.msra.mxu0 %v2196
      %2434 = vmatprep.subr.bf16.mxu0 %v2193
      %2435 = vmatpush2.bf16.msra.mxu0 %v2192
      %2436 = vmatprep.subr.bf16.mxu0 %v2189
      %2437 = vmatpush2.bf16.msra.mxu0 %v2188
      %2438 = vmatprep.subr.bf16.mxu0 %v2185
      %2439 = vmatpush2.bf16.msra.mxu0 %v2184
      %2440 = vmatprep.mubr.bf16.mxu0 %v1509
      %2441 = vmatmul.mubr.bf16.gmra.mxu0 %v1508
      %v2442 = vpop.f32.mrf.mxu0
      %v2443 = vadd.f32 0.0, %v2442
      %v2444 = vpop.f32.mrf.mxu0
      %v2445 = vadd.f32 0.0, %v2444
      %v2446 = vpop.f32.mrf.mxu0
      %v2447 = vadd.f32 0.0, %v2446
      %v2448 = vpop.f32.mrf.mxu0
      %v2449 = vadd.f32 0.0, %v2448
      %2450 = vdwg.mxu0
      %2451 = vmatprep.subr.bf16.mxu0 %v2245
      %2452 = vmatpush1.bf16.msra.mxu0 %v2244
      %2453 = vmatprep.subr.bf16.mxu0 %v2241
      %2454 = vmatpush1.bf16.msra.mxu0 %v2240
      %2455 = vmatprep.subr.bf16.mxu0 %v2237
      %2456 = vmatpush1.bf16.msra.mxu0 %v2236
      %2457 = vmatprep.subr.bf16.mxu0 %v2233
      %2458 = vmatpush1.bf16.msra.mxu0 %v2232
      %2459 = vmatprep.subr.bf16.mxu0 %v2229
      %2460 = vmatpush1.bf16.msra.mxu0 %v2228
      %2461 = vmatprep.subr.bf16.mxu0 %v2225
      %2462 = vmatpush1.bf16.msra.mxu0 %v2224
      %2463 = vmatprep.subr.bf16.mxu0 %v2221
      %2464 = vmatpush1.bf16.msra.mxu0 %v2220
      %2465 = vmatprep.subr.bf16.mxu0 %v2217
      %2466 = vmatpush1.bf16.msra.mxu0 %v2216
      %2467 = vmatprep.subr.bf16.mxu0 %v2277
      %2468 = vmatpush2.bf16.msra.mxu0 %v2276
      %2469 = vmatprep.subr.bf16.mxu0 %v2273
      %2470 = vmatpush2.bf16.msra.mxu0 %v2272
      %2471 = vmatprep.subr.bf16.mxu0 %v2269
      %2472 = vmatpush2.bf16.msra.mxu0 %v2268
      %2473 = vmatprep.subr.bf16.mxu0 %v2265
      %2474 = vmatpush2.bf16.msra.mxu0 %v2264
      %2475 = vmatprep.subr.bf16.mxu0 %v2261
      %2476 = vmatpush2.bf16.msra.mxu0 %v2260
      %2477 = vmatprep.subr.bf16.mxu0 %v2257
      %2478 = vmatpush2.bf16.msra.mxu0 %v2256
      %2479 = vmatprep.subr.bf16.mxu0 %v2253
      %2480 = vmatpush2.bf16.msra.mxu0 %v2252
      %2481 = vmatprep.subr.bf16.mxu0 %v2249
      %2482 = vmatpush2.bf16.msra.mxu0 %v2248
      %2483 = vmatprep.mubr.bf16.mxu0 %v1511
      %2484 = vmatmul.mubr.bf16.gmra.mxu0 %v1510
      %v2485 = vpop.f32.mrf.mxu0
      %v2486 = vadd.f32 %v2443, %v2485
      %v2487 = vpop.f32.mrf.mxu0
      %v2488 = vadd.f32 %v2445, %v2487
      %v2489 = vpop.f32.mrf.mxu0
      %v2490 = vadd.f32 %v2447, %v2489
      %v2491 = vpop.f32.mrf.mxu0
      %v2492 = vadd.f32 %v2449, %v2491
      %2493 = vdwg.mxu0
      %2494 = vmatprep.subr.bf16.mxu0 %v2183
      %2495 = vmatpush1.bf16.msra.mxu0 %v2182
      %2496 = vmatprep.subr.bf16.mxu0 %v2179
      %2497 = vmatpush1.bf16.msra.mxu0 %v2178
      %2498 = vmatprep.subr.bf16.mxu0 %v2175
      %2499 = vmatpush1.bf16.msra.mxu0 %v2174
      %2500 = vmatprep.subr.bf16.mxu0 %v2171
      %2501 = vmatpush1.bf16.msra.mxu0 %v2170
      %2502 = vmatprep.subr.bf16.mxu0 %v2167
      %2503 = vmatpush1.bf16.msra.mxu0 %v2166
      %2504 = vmatprep.subr.bf16.mxu0 %v2163
      %2505 = vmatpush1.bf16.msra.mxu0 %v2162
      %2506 = vmatprep.subr.bf16.mxu0 %v2159
      %2507 = vmatpush1.bf16.msra.mxu0 %v2158
      %2508 = vmatprep.subr.bf16.mxu0 %v2155
      %2509 = vmatpush1.bf16.msra.mxu0 %v2154
      %2510 = vmatprep.subr.bf16.mxu0 %v2215
      %2511 = vmatpush2.bf16.msra.mxu0 %v2214
      %2512 = vmatprep.subr.bf16.mxu0 %v2211
      %2513 = vmatpush2.bf16.msra.mxu0 %v2210
      %2514 = vmatprep.subr.bf16.mxu0 %v2207
      %2515 = vmatpush2.bf16.msra.mxu0 %v2206
      %2516 = vmatprep.subr.bf16.mxu0 %v2203
      %2517 = vmatpush2.bf16.msra.mxu0 %v2202
      %2518 = vmatprep.subr.bf16.mxu0 %v2199
      %2519 = vmatpush2.bf16.msra.mxu0 %v2198
      %2520 = vmatprep.subr.bf16.mxu0 %v2195
      %2521 = vmatpush2.bf16.msra.mxu0 %v2194
      %2522 = vmatprep.subr.bf16.mxu0 %v2191
      %2523 = vmatpush2.bf16.msra.mxu0 %v2190
      %2524 = vmatprep.subr.bf16.mxu0 %v2187
      %2525 = vmatpush2.bf16.msra.mxu0 %v2186
      %2526 = vmatprep.mubr.bf16.mxu0 %v1509
      %2527 = vmatmul.mubr.bf16.gmra.mxu0 %v1508
      %v2528 = vpop.f32.mrf.mxu0
      %v2529 = vadd.f32 0.0, %v2528
      %v2530 = vpop.f32.mrf.mxu0
      %v2531 = vadd.f32 0.0, %v2530
      %v2532 = vpop.f32.mrf.mxu0
      %v2533 = vadd.f32 0.0, %v2532
      %v2534 = vpop.f32.mrf.mxu0
      %v2535 = vadd.f32 0.0, %v2534
      %2536 = vdwg.mxu0
      %2537 = vmatprep.subr.bf16.mxu0 %v2247
      %2538 = vmatpush1.bf16.msra.mxu0 %v2246
      %2539 = vmatprep.subr.bf16.mxu0 %v2243
      %2540 = vmatpush1.bf16.msra.mxu0 %v2242
      %2541 = vmatprep.subr.bf16.mxu0 %v2239
      %2542 = vmatpush1.bf16.msra.mxu0 %v2238
      %2543 = vmatprep.subr.bf16.mxu0 %v2235
      %2544 = vmatpush1.bf16.msra.mxu0 %v2234
      %2545 = vmatprep.subr.bf16.mxu0 %v2231
      %2546 = vmatpush1.bf16.msra.mxu0 %v2230
      %2547 = vmatprep.subr.bf16.mxu0 %v2227
      %2548 = vmatpush1.bf16.msra.mxu0 %v2226
      %2549 = vmatprep.subr.bf16.mxu0 %v2223
      %2550 = vmatpush1.bf16.msra.mxu0 %v2222
      %2551 = vmatprep.subr.bf16.mxu0 %v2219
      %2552 = vmatpush1.bf16.msra.mxu0 %v2218
      %2553 = vmatprep.subr.bf16.mxu0 %v2279
      %2554 = vmatpush2.bf16.msra.mxu0 %v2278
      %2555 = vmatprep.subr.bf16.mxu0 %v2275
      %2556 = vmatpush2.bf16.msra.mxu0 %v2274
      %2557 = vmatprep.subr.bf16.mxu0 %v2271
      %2558 = vmatpush2.bf16.msra.mxu0 %v2270
      %2559 = vmatprep.subr.bf16.mxu0 %v2267
      %2560 = vmatpush2.bf16.msra.mxu0 %v2266
      %2561 = vmatprep.subr.bf16.mxu0 %v2263
      %2562 = vmatpush2.bf16.msra.mxu0 %v2262
      %2563 = vmatprep.subr.bf16.mxu0 %v2259
      %2564 = vmatpush2.bf16.msra.mxu0 %v2258
      %2565 = vmatprep.subr.bf16.mxu0 %v2255
      %2566 = vmatpush2.bf16.msra.mxu0 %v2254
      %2567 = vmatprep.subr.bf16.mxu0 %v2251
      %2568 = vmatpush2.bf16.msra.mxu0 %v2250
      %2569 = vmatprep.mubr.bf16.mxu0 %v1511
      %2570 = vmatmul.mubr.bf16.gmra.mxu0 %v1510
      %v2571 = vpop.f32.mrf.mxu0
      %v2572 = vadd.f32 %v2529, %v2571
      %v2573 = vpop.f32.mrf.mxu0
      %v2574 = vadd.f32 %v2531, %v2573
      %v2575 = vpop.f32.mrf.mxu0
      %v2576 = vadd.f32 %v2533, %v2575
      %v2577 = vpop.f32.mrf.mxu0
      %v2578 = vadd.f32 %v2535, %v2577
      %2579 = vdwg.mxu0
      %v2708 = vunpack.c.l.b16 %v1512
      %v2709 = vunpack.c.h.b16 %v1512
      %v2710 = vunpack.c.l.b16 %v1513
      %v2711 = vunpack.c.h.b16 %v1513
      %v2712 = vunpack.c.l.b16 %v1514
      %v2713 = vunpack.c.h.b16 %v1514
      %v2714 = vunpack.c.l.b16 %v1515
      %v2715 = vunpack.c.h.b16 %v1515
      %v2716 = vunpack.c.l.b16 %v1516
      %v2717 = vunpack.c.h.b16 %v1516
      %v2718 = vunpack.c.l.b16 %v1517
      %v2719 = vunpack.c.h.b16 %v1517
      %v2720 = vunpack.c.l.b16 %v1518
      %v2721 = vunpack.c.h.b16 %v1518
      %v2722 = vunpack.c.l.b16 %v1519
      %v2723 = vunpack.c.h.b16 %v1519
      %v2724 = vunpack.c.l.b16 %v1520
      %v2725 = vunpack.c.h.b16 %v1520
      %v2726 = vunpack.c.l.b16 %v1521
      %v2727 = vunpack.c.h.b16 %v1521
      %v2728 = vunpack.c.l.b16 %v1522
      %v2729 = vunpack.c.h.b16 %v1522
      %v2730 = vunpack.c.l.b16 %v1523
      %v2731 = vunpack.c.h.b16 %v1523
      %v2732 = vunpack.c.l.b16 %v1524
      %v2733 = vunpack.c.h.b16 %v1524
      %v2734 = vunpack.c.l.b16 %v1525
      %v2735 = vunpack.c.h.b16 %v1525
      %v2736 = vunpack.c.l.b16 %v1526
      %v2737 = vunpack.c.h.b16 %v1526
      %v2738 = vunpack.c.l.b16 %v1527
      %v2739 = vunpack.c.h.b16 %v1527
      %v2740 = vunpack.c.l.b16 %v1528
      %v2741 = vunpack.c.h.b16 %v1528
      %v2742 = vunpack.c.l.b16 %v1529
      %v2743 = vunpack.c.h.b16 %v1529
      %v2744 = vunpack.c.l.b16 %v1530
      %v2745 = vunpack.c.h.b16 %v1530
      %v2746 = vunpack.c.l.b16 %v1531
      %v2747 = vunpack.c.h.b16 %v1531
      %v2748 = vunpack.c.l.b16 %v1532
      %v2749 = vunpack.c.h.b16 %v1532
      %v2750 = vunpack.c.l.b16 %v1533
      %v2751 = vunpack.c.h.b16 %v1533
      %v2752 = vunpack.c.l.b16 %v1534
      %v2753 = vunpack.c.h.b16 %v1534
      %v2754 = vunpack.c.l.b16 %v1535
      %v2755 = vunpack.c.h.b16 %v1535
      %v2756 = vunpack.c.l.b16 %v1536
      %v2757 = vunpack.c.h.b16 %v1536
      %v2758 = vunpack.c.l.b16 %v1537
      %v2759 = vunpack.c.h.b16 %v1537
      %v2760 = vunpack.c.l.b16 %v1538
      %v2761 = vunpack.c.h.b16 %v1538
      %v2762 = vunpack.c.l.b16 %v1539
      %v2763 = vunpack.c.h.b16 %v1539
      %v2764 = vunpack.c.l.b16 %v1540
      %v2765 = vunpack.c.h.b16 %v1540
      %v2766 = vunpack.c.l.b16 %v1541
      %v2767 = vunpack.c.h.b16 %v1541
      %v2768 = vunpack.c.l.b16 %v1542
      %v2769 = vunpack.c.h.b16 %v1542
      %v2770 = vunpack.c.l.b16 %v1543
      %v2771 = vunpack.c.h.b16 %v1543
      %v2772 = vunpack.c.l.b16 %v1544
      %v2773 = vunpack.c.h.b16 %v1544
      %v2774 = vunpack.c.l.b16 %v1545
      %v2775 = vunpack.c.h.b16 %v1545
      %v2776 = vunpack.c.l.b16 %v1546
      %v2777 = vunpack.c.h.b16 %v1546
      %v2778 = vunpack.c.l.b16 %v1547
      %v2779 = vunpack.c.h.b16 %v1547
      %v2780 = vunpack.c.l.b16 %v1548
      %v2781 = vunpack.c.h.b16 %v1548
      %v2782 = vunpack.c.l.b16 %v1549
      %v2783 = vunpack.c.h.b16 %v1549
      %v2784 = vunpack.c.l.b16 %v1550
      %v2785 = vunpack.c.h.b16 %v1550
      %v2786 = vunpack.c.l.b16 %v1551
      %v2787 = vunpack.c.h.b16 %v1551
      %v2788 = vunpack.c.l.b16 %v1552
      %v2789 = vunpack.c.h.b16 %v1552
      %v2790 = vunpack.c.l.b16 %v1553
      %v2791 = vunpack.c.h.b16 %v1553
      %v2792 = vunpack.c.l.b16 %v1554
      %v2793 = vunpack.c.h.b16 %v1554
      %v2794 = vunpack.c.l.b16 %v1555
      %v2795 = vunpack.c.h.b16 %v1555
      %v2796 = vunpack.c.l.b16 %v1556
      %v2797 = vunpack.c.h.b16 %v1556
      %v2798 = vunpack.c.l.b16 %v1557
      %v2799 = vunpack.c.h.b16 %v1557
      %v2800 = vunpack.c.l.b16 %v1558
      %v2801 = vunpack.c.h.b16 %v1558
      %v2802 = vunpack.c.l.b16 %v1559
      %v2803 = vunpack.c.h.b16 %v1559
      %v2804 = vunpack.c.l.b16 %v1560
      %v2805 = vunpack.c.h.b16 %v1560
      %v2806 = vunpack.c.l.b16 %v1561
      %v2807 = vunpack.c.h.b16 %v1561
      %v2808 = vunpack.c.l.b16 %v1562
      %v2809 = vunpack.c.h.b16 %v1562
      %v2810 = vunpack.c.l.b16 %v1563
      %v2811 = vunpack.c.h.b16 %v1563
      %v2812 = vunpack.c.l.b16 %v1564
      %v2813 = vunpack.c.h.b16 %v1564
      %v2814 = vunpack.c.l.b16 %v1565
      %v2815 = vunpack.c.h.b16 %v1565
      %v2816 = vunpack.c.l.b16 %v1566
      %v2817 = vunpack.c.h.b16 %v1566
      %v2818 = vunpack.c.l.b16 %v1567
      %v2819 = vunpack.c.h.b16 %v1567
      %v2820 = vunpack.c.l.b16 %v1568
      %v2821 = vunpack.c.h.b16 %v1568
      %v2822 = vunpack.c.l.b16 %v1569
      %v2823 = vunpack.c.h.b16 %v1569
      %v2824 = vunpack.c.l.b16 %v1570
      %v2825 = vunpack.c.h.b16 %v1570
      %v2826 = vunpack.c.l.b16 %v1571
      %v2827 = vunpack.c.h.b16 %v1571
      %v2828 = vunpack.c.l.b16 %v1572
      %v2829 = vunpack.c.h.b16 %v1572
      %v2830 = vunpack.c.l.b16 %v1573
      %v2831 = vunpack.c.h.b16 %v1573
      %v2832 = vunpack.c.l.b16 %v1574
      %v2833 = vunpack.c.h.b16 %v1574
      %v2834 = vunpack.c.l.b16 %v1575
      %v2835 = vunpack.c.h.b16 %v1575
      %v2836 = vunpack.c.l.b16 %v1576
      %v2837 = vunpack.c.h.b16 %v1576
      %v2838 = vunpack.c.l.b16 %v1577
      %v2839 = vunpack.c.h.b16 %v1577
      %v2840 = vunpack.c.l.b16 %v1578
      %v2841 = vunpack.c.h.b16 %v1578
      %v2842 = vunpack.c.l.b16 %v1579
      %v2843 = vunpack.c.h.b16 %v1579
      %v2844 = vunpack.c.l.b16 %v1580
      %v2845 = vunpack.c.h.b16 %v1580
      %v2846 = vunpack.c.l.b16 %v1581
      %v2847 = vunpack.c.h.b16 %v1581
      %v2848 = vunpack.c.l.b16 %v1582
      %v2849 = vunpack.c.h.b16 %v1582
      %v2850 = vunpack.c.l.b16 %v1583
      %v2851 = vunpack.c.h.b16 %v1583
      %v2852 = vunpack.c.l.b16 %v1584
      %v2853 = vunpack.c.h.b16 %v1584
      %v2854 = vunpack.c.l.b16 %v1585
      %v2855 = vunpack.c.h.b16 %v1585
      %v2856 = vunpack.c.l.b16 %v1586
      %v2857 = vunpack.c.h.b16 %v1586
      %v2858 = vunpack.c.l.b16 %v1587
      %v2859 = vunpack.c.h.b16 %v1587
      %v2860 = vunpack.c.l.b16 %v1588
      %v2861 = vunpack.c.h.b16 %v1588
      %v2862 = vunpack.c.l.b16 %v1589
      %v2863 = vunpack.c.h.b16 %v1589
      %v2864 = vunpack.c.l.b16 %v1590
      %v2865 = vunpack.c.h.b16 %v1590
      %v2866 = vunpack.c.l.b16 %v1591
      %v2867 = vunpack.c.h.b16 %v1591
      %v2868 = vunpack.c.l.b16 %v1592
      %v2869 = vunpack.c.h.b16 %v1592
      %v2870 = vunpack.c.l.b16 %v1593
      %v2871 = vunpack.c.h.b16 %v1593
      %v2872 = vunpack.c.l.b16 %v1594
      %v2873 = vunpack.c.h.b16 %v1594
      %v2874 = vunpack.c.l.b16 %v1595
      %v2875 = vunpack.c.h.b16 %v1595
      %v2876 = vunpack.c.l.b16 %v1596
      %v2877 = vunpack.c.h.b16 %v1596
      %v2878 = vunpack.c.l.b16 %v1597
      %v2879 = vunpack.c.h.b16 %v1597
      %v2880 = vunpack.c.l.b16 %v1598
      %v2881 = vunpack.c.h.b16 %v1598
      %v2882 = vunpack.c.l.b16 %v1599
      %v2883 = vunpack.c.h.b16 %v1599
      %v2884 = vunpack.c.l.b16 %v1600
      %v2885 = vunpack.c.h.b16 %v1600
      %v2886 = vunpack.c.l.b16 %v1601
      %v2887 = vunpack.c.h.b16 %v1601
      %v2888 = vunpack.c.l.b16 %v1602
      %v2889 = vunpack.c.h.b16 %v1602
      %v2890 = vunpack.c.l.b16 %v1603
      %v2891 = vunpack.c.h.b16 %v1603
      %v2892 = vunpack.c.l.b16 %v1604
      %v2893 = vunpack.c.h.b16 %v1604
      %v2894 = vunpack.c.l.b16 %v1605
      %v2895 = vunpack.c.h.b16 %v1605
      %v2896 = vunpack.c.l.b16 %v1606
      %v2897 = vunpack.c.h.b16 %v1606
      %v2898 = vunpack.c.l.b16 %v1607
      %v2899 = vunpack.c.h.b16 %v1607
      %v2900 = vunpack.c.l.b16 %v1608
      %v2901 = vunpack.c.h.b16 %v1608
      %v2902 = vunpack.c.l.b16 %v1609
      %v2903 = vunpack.c.h.b16 %v1609
      %v2904 = vunpack.c.l.b16 %v1610
      %v2905 = vunpack.c.h.b16 %v1610
      %v2906 = vunpack.c.l.b16 %v1611
      %v2907 = vunpack.c.h.b16 %v1611
      %v2908 = vunpack.c.l.b16 %v1612
      %v2909 = vunpack.c.h.b16 %v1612
      %v2910 = vunpack.c.l.b16 %v1613
      %v2911 = vunpack.c.h.b16 %v1613
      %v2912 = vunpack.c.l.b16 %v1614
      %v2913 = vunpack.c.h.b16 %v1614
      %v2914 = vunpack.c.l.b16 %v1615
      %v2915 = vunpack.c.h.b16 %v1615
      %v2916 = vunpack.c.l.b16 %v1616
      %v2917 = vunpack.c.h.b16 %v1616
      %v2918 = vunpack.c.l.b16 %v1617
      %v2919 = vunpack.c.h.b16 %v1617
      %v2920 = vunpack.c.l.b16 %v1618
      %v2921 = vunpack.c.h.b16 %v1618
      %v2922 = vunpack.c.l.b16 %v1619
      %v2923 = vunpack.c.h.b16 %v1619
      %v2924 = vunpack.c.l.b16 %v1620
      %v2925 = vunpack.c.h.b16 %v1620
      %v2926 = vunpack.c.l.b16 %v1621
      %v2927 = vunpack.c.h.b16 %v1621
      %v2928 = vunpack.c.l.b16 %v1622
      %v2929 = vunpack.c.h.b16 %v1622
      %v2930 = vunpack.c.l.b16 %v1623
      %v2931 = vunpack.c.h.b16 %v1623
      %v2932 = vunpack.c.l.b16 %v1624
      %v2933 = vunpack.c.h.b16 %v1624
      %v2934 = vunpack.c.l.b16 %v1625
      %v2935 = vunpack.c.h.b16 %v1625
      %v2936 = vunpack.c.l.b16 %v1626
      %v2937 = vunpack.c.h.b16 %v1626
      %v2938 = vunpack.c.l.b16 %v1627
      %v2939 = vunpack.c.h.b16 %v1627
      %v2940 = vunpack.c.l.b16 %v1628
      %v2941 = vunpack.c.h.b16 %v1628
      %v2942 = vunpack.c.l.b16 %v1629
      %v2943 = vunpack.c.h.b16 %v1629
      %v2944 = vunpack.c.l.b16 %v1630
      %v2945 = vunpack.c.h.b16 %v1630
      %v2946 = vunpack.c.l.b16 %v1631
      %v2947 = vunpack.c.h.b16 %v1631
      %v2948 = vunpack.c.l.b16 %v1632
      %v2949 = vunpack.c.h.b16 %v1632
      %v2950 = vunpack.c.l.b16 %v1633
      %v2951 = vunpack.c.h.b16 %v1633
      %v2952 = vunpack.c.l.b16 %v1634
      %v2953 = vunpack.c.h.b16 %v1634
      %v2954 = vunpack.c.l.b16 %v1635
      %v2955 = vunpack.c.h.b16 %v1635
      %v2956 = vunpack.c.l.b16 %v1636
      %v2957 = vunpack.c.h.b16 %v1636
      %v2958 = vunpack.c.l.b16 %v1637
      %v2959 = vunpack.c.h.b16 %v1637
      %v2960 = vunpack.c.l.b16 %v1638
      %v2961 = vunpack.c.h.b16 %v1638
      %v2962 = vunpack.c.l.b16 %v1639
      %v2963 = vunpack.c.h.b16 %v1639
      %v2964 = vpack.c.b16 %v2712, %v2708
      %v2965 = vpack.c.b16 %v2713, %v2709
      %v2966 = vpack.c.b16 %v2714, %v2710
      %v2967 = vpack.c.b16 %v2715, %v2711
      %v2968 = vpack.c.b16 %v2720, %v2716
      %v2969 = vpack.c.b16 %v2721, %v2717
      %v2970 = vpack.c.b16 %v2722, %v2718
      %v2971 = vpack.c.b16 %v2723, %v2719
      %v2972 = vpack.c.b16 %v2728, %v2724
      %v2973 = vpack.c.b16 %v2729, %v2725
      %v2974 = vpack.c.b16 %v2730, %v2726
      %v2975 = vpack.c.b16 %v2731, %v2727
      %v2976 = vpack.c.b16 %v2736, %v2732
      %v2977 = vpack.c.b16 %v2737, %v2733
      %v2978 = vpack.c.b16 %v2738, %v2734
      %v2979 = vpack.c.b16 %v2739, %v2735
      %v2980 = vpack.c.b16 %v2744, %v2740
      %v2981 = vpack.c.b16 %v2745, %v2741
      %v2982 = vpack.c.b16 %v2746, %v2742
      %v2983 = vpack.c.b16 %v2747, %v2743
      %v2984 = vpack.c.b16 %v2752, %v2748
      %v2985 = vpack.c.b16 %v2753, %v2749
      %v2986 = vpack.c.b16 %v2754, %v2750
      %v2987 = vpack.c.b16 %v2755, %v2751
      %v2988 = vpack.c.b16 %v2760, %v2756
      %v2989 = vpack.c.b16 %v2761, %v2757
      %v2990 = vpack.c.b16 %v2762, %v2758
      %v2991 = vpack.c.b16 %v2763, %v2759
      %v2992 = vpack.c.b16 %v2768, %v2764
      %v2993 = vpack.c.b16 %v2769, %v2765
      %v2994 = vpack.c.b16 %v2770, %v2766
      %v2995 = vpack.c.b16 %v2771, %v2767
      %v2996 = vpack.c.b16 %v2776, %v2772
      %v2997 = vpack.c.b16 %v2777, %v2773
      %v2998 = vpack.c.b16 %v2778, %v2774
      %v2999 = vpack.c.b16 %v2779, %v2775
      %v3000 = vpack.c.b16 %v2784, %v2780
      %v3001 = vpack.c.b16 %v2785, %v2781
      %v3002 = vpack.c.b16 %v2786, %v2782
      %v3003 = vpack.c.b16 %v2787, %v2783
      %v3004 = vpack.c.b16 %v2792, %v2788
      %v3005 = vpack.c.b16 %v2793, %v2789
      %v3006 = vpack.c.b16 %v2794, %v2790
      %v3007 = vpack.c.b16 %v2795, %v2791
      %v3008 = vpack.c.b16 %v2800, %v2796
      %v3009 = vpack.c.b16 %v2801, %v2797
      %v3010 = vpack.c.b16 %v2802, %v2798
      %v3011 = vpack.c.b16 %v2803, %v2799
      %v3012 = vpack.c.b16 %v2808, %v2804
      %v3013 = vpack.c.b16 %v2809, %v2805
      %v3014 = vpack.c.b16 %v2810, %v2806
      %v3015 = vpack.c.b16 %v2811, %v2807
      %v3016 = vpack.c.b16 %v2816, %v2812
      %v3017 = vpack.c.b16 %v2817, %v2813
      %v3018 = vpack.c.b16 %v2818, %v2814
      %v3019 = vpack.c.b16 %v2819, %v2815
      %v3020 = vpack.c.b16 %v2824, %v2820
      %v3021 = vpack.c.b16 %v2825, %v2821
      %v3022 = vpack.c.b16 %v2826, %v2822
      %v3023 = vpack.c.b16 %v2827, %v2823
      %v3024 = vpack.c.b16 %v2832, %v2828
      %v3025 = vpack.c.b16 %v2833, %v2829
      %v3026 = vpack.c.b16 %v2834, %v2830
      %v3027 = vpack.c.b16 %v2835, %v2831
      %v3028 = vpack.c.b16 %v2840, %v2836
      %v3029 = vpack.c.b16 %v2841, %v2837
      %v3030 = vpack.c.b16 %v2842, %v2838
      %v3031 = vpack.c.b16 %v2843, %v2839
      %v3032 = vpack.c.b16 %v2848, %v2844
      %v3033 = vpack.c.b16 %v2849, %v2845
      %v3034 = vpack.c.b16 %v2850, %v2846
      %v3035 = vpack.c.b16 %v2851, %v2847
      %v3036 = vpack.c.b16 %v2856, %v2852
      %v3037 = vpack.c.b16 %v2857, %v2853
      %v3038 = vpack.c.b16 %v2858, %v2854
      %v3039 = vpack.c.b16 %v2859, %v2855
      %v3040 = vpack.c.b16 %v2864, %v2860
      %v3041 = vpack.c.b16 %v2865, %v2861
      %v3042 = vpack.c.b16 %v2866, %v2862
      %v3043 = vpack.c.b16 %v2867, %v2863
      %v3044 = vpack.c.b16 %v2872, %v2868
      %v3045 = vpack.c.b16 %v2873, %v2869
      %v3046 = vpack.c.b16 %v2874, %v2870
      %v3047 = vpack.c.b16 %v2875, %v2871
      %v3048 = vpack.c.b16 %v2880, %v2876
      %v3049 = vpack.c.b16 %v2881, %v2877
      %v3050 = vpack.c.b16 %v2882, %v2878
      %v3051 = vpack.c.b16 %v2883, %v2879
      %v3052 = vpack.c.b16 %v2888, %v2884
      %v3053 = vpack.c.b16 %v2889, %v2885
      %v3054 = vpack.c.b16 %v2890, %v2886
      %v3055 = vpack.c.b16 %v2891, %v2887
      %v3056 = vpack.c.b16 %v2896, %v2892
      %v3057 = vpack.c.b16 %v2897, %v2893
      %v3058 = vpack.c.b16 %v2898, %v2894
      %v3059 = vpack.c.b16 %v2899, %v2895
      %v3060 = vpack.c.b16 %v2904, %v2900
      %v3061 = vpack.c.b16 %v2905, %v2901
      %v3062 = vpack.c.b16 %v2906, %v2902
      %v3063 = vpack.c.b16 %v2907, %v2903
      %v3064 = vpack.c.b16 %v2912, %v2908
      %v3065 = vpack.c.b16 %v2913, %v2909
      %v3066 = vpack.c.b16 %v2914, %v2910
      %v3067 = vpack.c.b16 %v2915, %v2911
      %v3068 = vpack.c.b16 %v2920, %v2916
      %v3069 = vpack.c.b16 %v2921, %v2917
      %v3070 = vpack.c.b16 %v2922, %v2918
      %v3071 = vpack.c.b16 %v2923, %v2919
      %v3072 = vpack.c.b16 %v2928, %v2924
      %v3073 = vpack.c.b16 %v2929, %v2925
      %v3074 = vpack.c.b16 %v2930, %v2926
      %v3075 = vpack.c.b16 %v2931, %v2927
      %v3076 = vpack.c.b16 %v2936, %v2932
      %v3077 = vpack.c.b16 %v2937, %v2933
      %v3078 = vpack.c.b16 %v2938, %v2934
      %v3079 = vpack.c.b16 %v2939, %v2935
      %v3080 = vpack.c.b16 %v2944, %v2940
      %v3081 = vpack.c.b16 %v2945, %v2941
      %v3082 = vpack.c.b16 %v2946, %v2942
      %v3083 = vpack.c.b16 %v2947, %v2943
      %v3084 = vpack.c.b16 %v2952, %v2948
      %v3085 = vpack.c.b16 %v2953, %v2949
      %v3086 = vpack.c.b16 %v2954, %v2950
      %v3087 = vpack.c.b16 %v2955, %v2951
      %v3088 = vpack.c.b16 %v2960, %v2956
      %v3089 = vpack.c.b16 %v2961, %v2957
      %v3090 = vpack.c.b16 %v2962, %v2958
      %v3091 = vpack.c.b16 %v2963, %v2959
      %3220 = vmatprep.subr.bf16.mxu0 %v2993
      %3221 = vmatpush1.bf16.msra.mxu0 %v2992
      %3222 = vmatprep.subr.bf16.mxu0 %v2989
      %3223 = vmatpush1.bf16.msra.mxu0 %v2988
      %3224 = vmatprep.subr.bf16.mxu0 %v2985
      %3225 = vmatpush1.bf16.msra.mxu0 %v2984
      %3226 = vmatprep.subr.bf16.mxu0 %v2981
      %3227 = vmatpush1.bf16.msra.mxu0 %v2980
      %3228 = vmatprep.subr.bf16.mxu0 %v2977
      %3229 = vmatpush1.bf16.msra.mxu0 %v2976
      %3230 = vmatprep.subr.bf16.mxu0 %v2973
      %3231 = vmatpush1.bf16.msra.mxu0 %v2972
      %3232 = vmatprep.subr.bf16.mxu0 %v2969
      %3233 = vmatpush1.bf16.msra.mxu0 %v2968
      %3234 = vmatprep.subr.bf16.mxu0 %v2965
      %3235 = vmatpush1.bf16.msra.mxu0 %v2964
      %3236 = vmatprep.subr.bf16.mxu0 %v3025
      %3237 = vmatpush2.bf16.msra.mxu0 %v3024
      %3238 = vmatprep.subr.bf16.mxu0 %v3021
      %3239 = vmatpush2.bf16.msra.mxu0 %v3020
      %3240 = vmatprep.subr.bf16.mxu0 %v3017
      %3241 = vmatpush2.bf16.msra.mxu0 %v3016
      %3242 = vmatprep.subr.bf16.mxu0 %v3013
      %3243 = vmatpush2.bf16.msra.mxu0 %v3012
      %3244 = vmatprep.subr.bf16.mxu0 %v3009
      %3245 = vmatpush2.bf16.msra.mxu0 %v3008
      %3246 = vmatprep.subr.bf16.mxu0 %v3005
      %3247 = vmatpush2.bf16.msra.mxu0 %v3004
      %3248 = vmatprep.subr.bf16.mxu0 %v3001
      %3249 = vmatpush2.bf16.msra.mxu0 %v3000
      %3250 = vmatprep.subr.bf16.mxu0 %v2997
      %3251 = vmatpush2.bf16.msra.mxu0 %v2996
      %3252 = vmatprep.mubr.bf16.mxu0 %v493
      %3253 = vmatmul.mubr.bf16.gmra.mxu0 %v492
      %v3254 = vpop.f32.mrf.mxu0
      %v3255 = vadd.f32 %v2486, %v3254
      %v3256 = vpop.f32.mrf.mxu0
      %v3257 = vadd.f32 %v2488, %v3256
      %v3258 = vpop.f32.mrf.mxu0
      %v3259 = vadd.f32 %v2490, %v3258
      %v3260 = vpop.f32.mrf.mxu0
      %v3261 = vadd.f32 %v2492, %v3260
      %3262 = vdwg.mxu0
      %3263 = vmatprep.subr.bf16.mxu0 %v3057
      %3264 = vmatpush1.bf16.msra.mxu0 %v3056
      %3265 = vmatprep.subr.bf16.mxu0 %v3053
      %3266 = vmatpush1.bf16.msra.mxu0 %v3052
      %3267 = vmatprep.subr.bf16.mxu0 %v3049
      %3268 = vmatpush1.bf16.msra.mxu0 %v3048
      %3269 = vmatprep.subr.bf16.mxu0 %v3045
      %3270 = vmatpush1.bf16.msra.mxu0 %v3044
      %3271 = vmatprep.subr.bf16.mxu0 %v3041
      %3272 = vmatpush1.bf16.msra.mxu0 %v3040
      %3273 = vmatprep.subr.bf16.mxu0 %v3037
      %3274 = vmatpush1.bf16.msra.mxu0 %v3036
      %3275 = vmatprep.subr.bf16.mxu0 %v3033
      %3276 = vmatpush1.bf16.msra.mxu0 %v3032
      %3277 = vmatprep.subr.bf16.mxu0 %v3029
      %3278 = vmatpush1.bf16.msra.mxu0 %v3028
      %3279 = vmatprep.subr.bf16.mxu0 %v3089
      %3280 = vmatpush2.bf16.msra.mxu0 %v3088
      %3281 = vmatprep.subr.bf16.mxu0 %v3085
      %3282 = vmatpush2.bf16.msra.mxu0 %v3084
      %3283 = vmatprep.subr.bf16.mxu0 %v3081
      %3284 = vmatpush2.bf16.msra.mxu0 %v3080
      %3285 = vmatprep.subr.bf16.mxu0 %v3077
      %3286 = vmatpush2.bf16.msra.mxu0 %v3076
      %3287 = vmatprep.subr.bf16.mxu0 %v3073
      %3288 = vmatpush2.bf16.msra.mxu0 %v3072
      %3289 = vmatprep.subr.bf16.mxu0 %v3069
      %3290 = vmatpush2.bf16.msra.mxu0 %v3068
      %3291 = vmatprep.subr.bf16.mxu0 %v3065
      %3292 = vmatpush2.bf16.msra.mxu0 %v3064
      %3293 = vmatprep.subr.bf16.mxu0 %v3061
      %3294 = vmatpush2.bf16.msra.mxu0 %v3060
      %3295 = vmatprep.mubr.bf16.mxu0 %v495
      %3296 = vmatmul.mubr.bf16.gmra.mxu0 %v494
      %v3297 = vpop.f32.mrf.mxu0
      %v3298 = vadd.f32 %v3255, %v3297
      %v3299 = vpop.f32.mrf.mxu0
      %v3300 = vadd.f32 %v3257, %v3299
      %v3301 = vpop.f32.mrf.mxu0
      %v3302 = vadd.f32 %v3259, %v3301
      %v3303 = vpop.f32.mrf.mxu0
      %v3304 = vadd.f32 %v3261, %v3303
      %3305 = vdwg.mxu0
      %3306 = vmatprep.subr.bf16.mxu0 %v2995
      %3307 = vmatpush1.bf16.msra.mxu0 %v2994
      %3308 = vmatprep.subr.bf16.mxu0 %v2991
      %3309 = vmatpush1.bf16.msra.mxu0 %v2990
      %3310 = vmatprep.subr.bf16.mxu0 %v2987
      %3311 = vmatpush1.bf16.msra.mxu0 %v2986
      %3312 = vmatprep.subr.bf16.mxu0 %v2983
      %3313 = vmatpush1.bf16.msra.mxu0 %v2982
      %3314 = vmatprep.subr.bf16.mxu0 %v2979
      %3315 = vmatpush1.bf16.msra.mxu0 %v2978
      %3316 = vmatprep.subr.bf16.mxu0 %v2975
      %3317 = vmatpush1.bf16.msra.mxu0 %v2974
      %3318 = vmatprep.subr.bf16.mxu0 %v2971
      %3319 = vmatpush1.bf16.msra.mxu0 %v2970
      %3320 = vmatprep.subr.bf16.mxu0 %v2967
      %3321 = vmatpush1.bf16.msra.mxu0 %v2966
      %3322 = vmatprep.subr.bf16.mxu0 %v3027
      %3323 = vmatpush2.bf16.msra.mxu0 %v3026
      %3324 = vmatprep.subr.bf16.mxu0 %v3023
      %3325 = vmatpush2.bf16.msra.mxu0 %v3022
      %3326 = vmatprep.subr.bf16.mxu0 %v3019
      %3327 = vmatpush2.bf16.msra.mxu0 %v3018
      %3328 = vmatprep.subr.bf16.mxu0 %v3015
      %3329 = vmatpush2.bf16.msra.mxu0 %v3014
      %3330 = vmatprep.subr.bf16.mxu0 %v3011
      %3331 = vmatpush2.bf16.msra.mxu0 %v3010
      %3332 = vmatprep.subr.bf16.mxu0 %v3007
      %3333 = vmatpush2.bf16.msra.mxu0 %v3006
      %3334 = vmatprep.subr.bf16.mxu0 %v3003
      %3335 = vmatpush2.bf16.msra.mxu0 %v3002
      %3336 = vmatprep.subr.bf16.mxu0 %v2999
      %3337 = vmatpush2.bf16.msra.mxu0 %v2998
      %3338 = vmatprep.mubr.bf16.mxu0 %v493
      %3339 = vmatmul.mubr.bf16.gmra.mxu0 %v492
      %v3340 = vpop.f32.mrf.mxu0
      %v3341 = vadd.f32 %v2572, %v3340
      %v3342 = vpop.f32.mrf.mxu0
      %v3343 = vadd.f32 %v2574, %v3342
      %v3344 = vpop.f32.mrf.mxu0
      %v3345 = vadd.f32 %v2576, %v3344
      %v3346 = vpop.f32.mrf.mxu0
      %v3347 = vadd.f32 %v2578, %v3346
      %3348 = vdwg.mxu0
      %3349 = vmatprep.subr.bf16.mxu0 %v3059
      %3350 = vmatpush1.bf16.msra.mxu0 %v3058
      %3351 = vmatprep.subr.bf16.mxu0 %v3055
      %3352 = vmatpush1.bf16.msra.mxu0 %v3054
      %3353 = vmatprep.subr.bf16.mxu0 %v3051
      %3354 = vmatpush1.bf16.msra.mxu0 %v3050
      %3355 = vmatprep.subr.bf16.mxu0 %v3047
      %3356 = vmatpush1.bf16.msra.mxu0 %v3046
      %3357 = vmatprep.subr.bf16.mxu0 %v3043
      %3358 = vmatpush1.bf16.msra.mxu0 %v3042
      %3359 = vmatprep.subr.bf16.mxu0 %v3039
      %3360 = vmatpush1.bf16.msra.mxu0 %v3038
      %3361 = vmatprep.subr.bf16.mxu0 %v3035
      %3362 = vmatpush1.bf16.msra.mxu0 %v3034
      %3363 = vmatprep.subr.bf16.mxu0 %v3031
      %3364 = vmatpush1.bf16.msra.mxu0 %v3030
      %3365 = vmatprep.subr.bf16.mxu0 %v3091
      %3366 = vmatpush2.bf16.msra.mxu0 %v3090
      %3367 = vmatprep.subr.bf16.mxu0 %v3087
      %3368 = vmatpush2.bf16.msra.mxu0 %v3086
      %3369 = vmatprep.subr.bf16.mxu0 %v3083
      %3370 = vmatpush2.bf16.msra.mxu0 %v3082
      %3371 = vmatprep.subr.bf16.mxu0 %v3079
      %3372 = vmatpush2.bf16.msra.mxu0 %v3078
      %3373 = vmatprep.subr.bf16.mxu0 %v3075
      %3374 = vmatpush2.bf16.msra.mxu0 %v3074
      %3375 = vmatprep.subr.bf16.mxu0 %v3071
      %3376 = vmatpush2.bf16.msra.mxu0 %v3070
      %3377 = vmatprep.subr.bf16.mxu0 %v3067
      %3378 = vmatpush2.bf16.msra.mxu0 %v3066
      %3379 = vmatprep.subr.bf16.mxu0 %v3063
      %3380 = vmatpush2.bf16.msra.mxu0 %v3062
      %3381 = vmatprep.mubr.bf16.mxu0 %v495
      %3382 = vmatmul.mubr.bf16.gmra.mxu0 %v494
      %v3383 = vpop.f32.mrf.mxu0
      %v3384 = vadd.f32 %v3341, %v3383
      %v3385 = vpop.f32.mrf.mxu0
      %v3386 = vadd.f32 %v3343, %v3385
      %v3387 = vpop.f32.mrf.mxu0
      %v3388 = vadd.f32 %v3345, %v3387
      %v3389 = vpop.f32.mrf.mxu0
      %v3390 = vadd.f32 %v3347, %v3389
      %3391 = vdwg.mxu0
      %v3392 = vld [vmem:[%s8] sm:$0xf]
      %v3394 = vlaneseq
      %v3395 = vshrl.u32 %v3394, 7
      %v3396 = vsub.s32 0, %v3395
      %v3397 = vrot.slane %v3392, %v3396
      %v3398 = vlaneseq
      %v3399 = vshrl.u32 %v3398, 7
      %v3400 = vsub.s32 1, %v3399
      %v3401 = vrot.slane %v3392, %v3400
      %v3402 = vlaneseq
      %v3403 = vshrl.u32 %v3402, 7
      %v3404 = vsub.s32 2, %v3403
      %v3405 = vrot.slane %v3392, %v3404
      %v3406 = vlaneseq
      %v3407 = vshrl.u32 %v3406, 7
      %v3408 = vsub.s32 3, %v3407
      %v3409 = vrot.slane %v3392, %v3408
      %v3414 = vadd.f32 %v3298, %v3397
      %v3415 = vadd.f32 %v3300, %v3401
      %v3416 = vadd.f32 %v3384, %v3405
      %v3417 = vadd.f32 %v3386, %v3409
      %v3418 = vadd.f32 %v3302, %v3397
      %v3419 = vadd.f32 %v3304, %v3401
      %v3420 = vadd.f32 %v3388, %v3405
      %v3421 = vadd.f32 %v3390, %v3409
      %v3422 = vxor.u32 %v3414, 2147483648
      %v3423 = vxor.u32 %v3415, 2147483648
      %v3424 = vxor.u32 %v3416, 2147483648
      %v3425 = vxor.u32 %v3417, 2147483648
      %v3426 = vxor.u32 %v3418, 2147483648
      %v3427 = vxor.u32 %v3419, 2147483648
      %v3428 = vxor.u32 %v3420, 2147483648
      %v3429 = vxor.u32 %v3421, 2147483648
      %v3430 = vmul.f32 %v3422, 1.442695
      %v3431 = vpow.pop %v3430
      %v3432 = vmul.f32 %v3423, 1.442695
      %v3433 = vpow.pop %v3432
      %v3434 = vmul.f32 %v3424, 1.442695
      %v3435 = vpow.pop %v3434
      %v3436 = vmul.f32 %v3425, 1.442695
      %v3437 = vpow.pop %v3436
      %v3438 = vmul.f32 %v3426, 1.442695
      %v3439 = vpow.pop %v3438
      %v3440 = vmul.f32 %v3427, 1.442695
      %v3441 = vpow.pop %v3440
      %v3442 = vmul.f32 %v3428, 1.442695
      %v3443 = vpow.pop %v3442
      %v3444 = vmul.f32 %v3429, 1.442695
      %v3445 = vpow.pop %v3444
      %v3446 = vadd.f32 %v3431, 1.0
      %v3447 = vadd.f32 %v3433, 1.0
      %v3448 = vadd.f32 %v3435, 1.0
      %v3449 = vadd.f32 %v3437, 1.0
      %v3450 = vadd.f32 %v3439, 1.0
      %v3451 = vadd.f32 %v3441, 1.0
      %v3452 = vadd.f32 %v3443, 1.0
      %v3453 = vadd.f32 %v3445, 1.0
      %v3454 = vrcp.pop %v3446
      %v3455 = vmul.f32 1.0, %v3454
      %v3456 = vrcp.pop %v3447
      %v3457 = vmul.f32 1.0, %v3456
      %v3458 = vrcp.pop %v3448
      %v3459 = vmul.f32 1.0, %v3458
      %v3460 = vrcp.pop %v3449
      %v3461 = vmul.f32 1.0, %v3460
      %v3462 = vrcp.pop %v3450
      %v3463 = vmul.f32 1.0, %v3462
      %v3464 = vrcp.pop %v3451
      %v3465 = vmul.f32 1.0, %v3464
      %v3466 = vrcp.pop %v3452
      %v3467 = vmul.f32 1.0, %v3466
      %v3468 = vrcp.pop %v3453
      %v3469 = vmul.f32 1.0, %v3468
      %v3470 = vmul.f32 %v3455, %v484
      %v3471 = vmul.f32 %v3457, %v485
      %v3472 = vmul.f32 %v3459, %v486
      %v3473 = vmul.f32 %v3461, %v487
      %v3474 = vmul.f32 %v3463, %v488
      %v3475 = vmul.f32 %v3465, %v489
      %v3476 = vmul.f32 %v3467, %v490
      %v3477 = vmul.f32 %v3469, %v491
      %v3478 = vadd.f32 %v3470, %v1500
      %v3479 = vadd.f32 %v3471, %v1501
      %v3480 = vadd.f32 %v3472, %v1502
      %v3481 = vadd.f32 %v3473, %v1503
      %v3482 = vadd.f32 %v3474, %v1504
      %v3483 = vadd.f32 %v3475, %v1505
      %v3484 = vadd.f32 %v3476, %v1506
      %v3485 = vadd.f32 %v3477, %v1507
      %v3486 = vld [vmem:[#allocation10] sm:$0xf]
      %v3487 = vld [vmem:[#allocation10 + $0x4] sm:$0xf]
      %v3488 = vld [vmem:[#allocation10 + $0x8] sm:$0xf]
      %v3489 = vld [vmem:[#allocation10 + $0xc] sm:$0xf]
      %v3490 = vld [vmem:[#allocation10 + $0x10] sm:$0xf]
      %v3491 = vld [vmem:[#allocation10 + $0x14] sm:$0xf]
      %v3492 = vld [vmem:[#allocation10 + $0x18] sm:$0xf]
      %v3493 = vld [vmem:[#allocation10 + $0x1c] sm:$0xf]
      %v3494 = vld [vmem:[#allocation10 + $0x20] sm:$0xf]
      %v3495 = vld [vmem:[#allocation10 + $0x24] sm:$0xf]
      %v3496 = vld [vmem:[#allocation10 + $0x28] sm:$0xf]
      %v3497 = vld [vmem:[#allocation10 + $0x2c] sm:$0xf]
      %v3498 = vld [vmem:[#allocation10 + $0x30] sm:$0xf]
      %v3499 = vld [vmem:[#allocation10 + $0x34] sm:$0xf]
      %v3500 = vld [vmem:[#allocation10 + $0x38] sm:$0xf]
      %v3501 = vld [vmem:[#allocation10 + $0x3c] sm:$0xf]
      %v3502 = vld [vmem:[#allocation10 + $0x40] sm:$0xf]
      %v3503 = vld [vmem:[#allocation10 + $0x44] sm:$0xf]
      %v3504 = vld [vmem:[#allocation10 + $0x48] sm:$0xf]
      %v3505 = vld [vmem:[#allocation10 + $0x4c] sm:$0xf]
      %v3506 = vld [vmem:[#allocation10 + $0x50] sm:$0xf]
      %v3507 = vld [vmem:[#allocation10 + $0x54] sm:$0xf]
      %v3508 = vld [vmem:[#allocation10 + $0x58] sm:$0xf]
      %v3509 = vld [vmem:[#allocation10 + $0x5c] sm:$0xf]
      %v3510 = vld [vmem:[#allocation10 + $0x60] sm:$0xf]
      %v3511 = vld [vmem:[#allocation10 + $0x64] sm:$0xf]
      %v3512 = vld [vmem:[#allocation10 + $0x68] sm:$0xf]
      %v3513 = vld [vmem:[#allocation10 + $0x6c] sm:$0xf]
      %v3514 = vld [vmem:[#allocation10 + $0x70] sm:$0xf]
      %v3515 = vld [vmem:[#allocation10 + $0x74] sm:$0xf]
      %v3516 = vld [vmem:[#allocation10 + $0x78] sm:$0xf]
      %v3517 = vld [vmem:[#allocation10 + $0x7c] sm:$0xf]
      %v3518 = vld [vmem:[%s10] sm:$0x1]
      %v3520 = vlaneseq
      %v3521 = vshrl.u32 %v3520, 7
      %v3522 = vsub.s32 0, %v3521
      %v3523 = vrot.slane %v3518, %v3522
      %v3557 = vunpack.c.l.b16 %v3486
      %v3558 = vunpack.c.l.b16 %v3487
      %v3559 = vunpack.c.l.b16 %v3488
      %v3560 = vunpack.c.l.b16 %v3489
      %v3561 = vunpack.c.l.b16 %v3490
      %v3562 = vunpack.c.l.b16 %v3491
      %v3563 = vunpack.c.l.b16 %v3492
      %v3564 = vunpack.c.l.b16 %v3493
      %v3565 = vunpack.c.l.b16 %v3494
      %v3566 = vunpack.c.l.b16 %v3495
      %v3567 = vunpack.c.l.b16 %v3496
      %v3568 = vunpack.c.l.b16 %v3497
      %v3569 = vunpack.c.l.b16 %v3498
      %v3570 = vunpack.c.l.b16 %v3499
      %v3571 = vunpack.c.l.b16 %v3500
      %v3572 = vunpack.c.l.b16 %v3501
      %v3573 = vunpack.c.l.b16 %v3502
      %v3574 = vunpack.c.l.b16 %v3503
      %v3575 = vunpack.c.l.b16 %v3504
      %v3576 = vunpack.c.l.b16 %v3505
      %v3577 = vunpack.c.l.b16 %v3506
      %v3578 = vunpack.c.l.b16 %v3507
      %v3579 = vunpack.c.l.b16 %v3508
      %v3580 = vunpack.c.l.b16 %v3509
      %v3581 = vunpack.c.l.b16 %v3510
      %v3582 = vunpack.c.l.b16 %v3511
      %v3583 = vunpack.c.l.b16 %v3512
      %v3584 = vunpack.c.l.b16 %v3513
      %v3585 = vunpack.c.l.b16 %v3514
      %v3586 = vunpack.c.l.b16 %v3515
      %v3587 = vunpack.c.l.b16 %v3516
      %v3588 = vunpack.c.l.b16 %v3517
      %v3589 = vpack.c.b16 %v3558, %v3557
      %v3590 = vpack.c.b16 %v3560, %v3559
      %v3591 = vpack.c.b16 %v3562, %v3561
      %v3592 = vpack.c.b16 %v3564, %v3563
      %v3593 = vpack.c.b16 %v3566, %v3565
      %v3594 = vpack.c.b16 %v3568, %v3567
      %v3595 = vpack.c.b16 %v3570, %v3569
      %v3596 = vpack.c.b16 %v3572, %v3571
      %v3597 = vpack.c.b16 %v3574, %v3573
      %v3598 = vpack.c.b16 %v3576, %v3575
      %v3599 = vpack.c.b16 %v3578, %v3577
      %v3600 = vpack.c.b16 %v3580, %v3579
      %v3601 = vpack.c.b16 %v3582, %v3581
      %v3602 = vpack.c.b16 %v3584, %v3583
      %v3603 = vpack.c.b16 %v3586, %v3585
      %v3604 = vpack.c.b16 %v3588, %v3587
      %3621 = vmatprep.subr.bf16.mxu0 0
      %3622 = vmatpush1.bf16.msra.mxu0 %v3596
      %3623 = vmatprep.subr.bf16.mxu0 0
      %3624 = vmatpush1.bf16.msra.mxu0 %v3595
      %3625 = vmatprep.subr.bf16.mxu0 0
      %3626 = vmatpush1.bf16.msra.mxu0 %v3594
      %3627 = vmatprep.subr.bf16.mxu0 0
      %3628 = vmatpush1.bf16.msra.mxu0 %v3593
      %3629 = vmatprep.subr.bf16.mxu0 0
      %3630 = vmatpush1.bf16.msra.mxu0 %v3592
      %3631 = vmatprep.subr.bf16.mxu0 0
      %3632 = vmatpush1.bf16.msra.mxu0 %v3591
      %3633 = vmatprep.subr.bf16.mxu0 0
      %3634 = vmatpush1.bf16.msra.mxu0 %v3590
      %3635 = vmatprep.subr.bf16.mxu0 0
      %3636 = vmatpush1.bf16.msra.mxu0 %v3589
      %3637 = vmatprep.subr.bf16.mxu0 0
      %3638 = vmatpush2.bf16.msra.mxu0 %v3604
      %3639 = vmatprep.subr.bf16.mxu0 0
      %3640 = vmatpush2.bf16.msra.mxu0 %v3603
      %3641 = vmatprep.subr.bf16.mxu0 0
      %3642 = vmatpush2.bf16.msra.mxu0 %v3602
      %3643 = vmatprep.subr.bf16.mxu0 0
      %3644 = vmatpush2.bf16.msra.mxu0 %v3601
      %3645 = vmatprep.subr.bf16.mxu0 0
      %3646 = vmatpush2.bf16.msra.mxu0 %v3600
      %3647 = vmatprep.subr.bf16.mxu0 0
      %3648 = vmatpush2.bf16.msra.mxu0 %v3599
      %3649 = vmatprep.subr.bf16.mxu0 0
      %3650 = vmatpush2.bf16.msra.mxu0 %v3598
      %3651 = vmatprep.subr.bf16.mxu0 0
      %3652 = vmatpush2.bf16.msra.mxu0 %v3597
      %3653 = vmatprep.mubr.bf16.mxu0 %v991
      %3654 = vmatmul.mubr.bf16.gmra.mxu0 %v990
      %v3655 = vpop.f32.mrf.mxu0
      %v3656 = vadd.f32 %v3523, %v3655
      %v3657 = vpop.f32.mrf.mxu0
      %v3658 = vpop.f32.mrf.mxu0
      %v3659 = vadd.f32 %v3523, %v3658
      %v3660 = vpop.f32.mrf.mxu0
      %3661 = vdwg.mxu0
      %3662 = vst [vmem:[%s11] sm:$0xff] %v3656
      %3663 = vst [vmem:[%s11 + $0x8] sm:$0xff] %v3659
      %3664 = vst [vmem:[%s12] sm:$0xff] %v3455
      %3665 = vst [vmem:[%s12 + $0x8] sm:$0xff] %v3457
      %3666 = vst [vmem:[%s12 + $0x10] sm:$0xff] %v3459
      %3667 = vst [vmem:[%s12 + $0x18] sm:$0xff] %v3461
      %3668 = vst [vmem:[%s12 + $0x20] sm:$0xff] %v3463
      %3669 = vst [vmem:[%s12 + $0x28] sm:$0xff] %v3465
      %3670 = vst [vmem:[%s12 + $0x30] sm:$0xff] %v3467
      %3671 = vst [vmem:[%s12 + $0x38] sm:$0xff] %v3469
      %v3672 = vpack.c.bf16 %v3482, %v3478
      %v3673 = vpack.c.bf16 %v3483, %v3479
      %v3674 = vpack.c.bf16 %v3484, %v3480
      %v3675 = vpack.c.bf16 %v3485, %v3481
      %v3680 = vunpack.c.l.b16 %v3672
      %v3681 = vunpack.c.l.b16 %v3673
      %v3682 = vunpack.c.l.b16 %v3674
      %v3683 = vunpack.c.l.b16 %v3675
      %v3684 = vunpack.c.h.b16 %v3672
      %v3685 = vunpack.c.h.b16 %v3673
      %v3686 = vunpack.c.h.b16 %v3674
      %v3687 = vunpack.c.h.b16 %v3675
      %v3688 = vpack.c.b16 %v3681, %v3680
      %v3689 = vpack.c.b16 %v3683, %v3682
      %v3690 = vpack.c.b16 %v3685, %v3684
      %v3691 = vpack.c.b16 %v3687, %v3686
      %3696 = vst [vmem:[%s13] sm:$0xff] %v3688
      %3697 = vst [vmem:[%s13 + $0x8] sm:$0xff] %v3689
      %3698 = vst [vmem:[%s13 + $0x10] sm:$0xff] %v3690
      %3699 = vst [vmem:[%s13 + $0x18] sm:$0xff] %v3691
    $region73: #{model_forward.2} parent=1 // pred_fallthru
      _
    // Predicated region
    $region74: #{model_forward.2} parent=1 // pred_check
      _
    $region75: #{model_forward.2} parent=1 // pred_check_branch
      %3701 = sbr.rel (0) target = $region77
    $region76: #{model_forward.2} parent=1 // pred_region
      _
    $region77: #{model_forward.2} parent=1 // pred_fallthru
      _
    // Predicated region
    $region78: #{model_forward.2} parent=1 // pred_check
      _
    $region79: #{model_forward.2} parent=1 // pred_check_branch
      %3703 = sbr.rel (0) target = $region81
    $region80: #{model_forward.2} parent=1 // pred_region
      _
    $region81: #{model_forward.2} parent=1 // pred_fallthru
      _
    // Predicated region
    $region82: #{model_forward.2} parent=1 // pred_check
      _
    $region83: #{model_forward.2} parent=1 // pred_check_branch
      %3705 = sbr.rel (0) target = $region85
    $region84: #{model_forward.2} parent=1 // pred_region
      _
    $region85: #{model_forward.2} parent=1 // pred_fallthru
      _
    // Predicated region
    $region86: #{model_forward.2} parent=1 // pred_check
      _
    $region87: #{model_forward.2} parent=1 // pred_check_branch
      %3707 = sbr.rel (0) target = $region89
    $region88: #{model_forward.2} parent=1 // pred_region
      _
    $region89: #{model_forward.2} parent=1 // pred_fallthru
      _
    // Predicated region
    $region90: #{model_forward.2} parent=1 // pred_check
      _
    $region91: #{model_forward.2} parent=1 // pred_check_branch
      %3709 = sbr.rel (0) target = $region93
    $region92: #{model_forward.2} parent=1 // pred_region
      _
    $region93: #{model_forward.2} parent=1 // pred_fallthru
      _
    // Predicated region
    $region94: #{model_forward.2} parent=1 // pred_check
      _
    $region95: #{model_forward.2} parent=1 // pred_check_branch
      %3711 = sbr.rel (0) target = $region97
    $region96: #{model_forward.2} parent=1 // pred_region
      _
    $region97: #{model_forward.2} parent=1 // pred_fallthru
      _
    %3712 = vsyncpa [#allocation4], 1
    %3713 = vsyncpa [#allocation6], 1
    %3714 = vsyncpa [#allocation9], 1

</llo_original>
